<compile_context>
chip_gen: v7x
topology: tpu7x:2x2x1
jax: 0.10.0
libtpu: 0.0.40
codegen_flags: <defaults>
</compile_context>

<pallas_src>
import functools

import jax
import jax.numpy as jnp
from jax.experimental import pallas as pl
from jax.experimental.pallas import tpu as pltpu

HIDDEN = 128
N_FREQ_PTS = 10     # -> 60-dim pts embedding
N_FREQ_C = 4        # -> 24-dim c embedding
N_FREQ_VIEW = 4     # -> 24-dim view embedding
Z_DIM = 64
C_DIM = 3
OUT_CHANNEL = 16
DOWNSCALE_P_BY = 0.5
P_DIM = 3 * N_FREQ_PTS * 2    # 60
CE_DIM = 3 * N_FREQ_C * 2     # 24
V_DIM = 3 * N_FREQ_VIEW * 2   # 24
TILE_N = 512


# -------------------------- plain-JAX glue --------------------------------- #

def posenc(x, L, downscale=DOWNSCALE_P_BY):
    """Matches giraffeDecoder.transform_points ('normal' encoding)."""
    x = x / downscale
    freqs = (2.0 ** jnp.arange(L, dtype=jnp.float32)) * jnp.pi           # (L,)
    arg = x[..., None, :] * freqs[:, None]                               # (..., L, 3)
    emb = jnp.concatenate([jnp.sin(arg), jnp.cos(arg)], axis=-1)         # (..., L, 6)
    return emb.reshape(*x.shape[:-1], L * 6)


def init_linear(key, fan_in, fan_out):
    k1, k2 = jax.random.split(key)
    bound = 1.0 / (fan_in ** 0.5)
    w = jax.random.uniform(k1, (fan_in, fan_out), jnp.float32, -bound, bound)
    b = jax.random.uniform(k2, (fan_out,), jnp.float32, -bound, bound)
    return w, b


def init_params(key):
    keys = jax.random.split(key, 16)
    params = {}
    params["fc_in"] = init_linear(keys[0], P_DIM, HIDDEN)
    params["fc_z"] = init_linear(keys[1], Z_DIM, HIDDEN)
    params["fc_c"] = init_linear(keys[2], CE_DIM, HIDDEN)
    params["block0"] = init_linear(keys[3], HIDDEN, HIDDEN)
    params["block1"] = init_linear(keys[4], HIDDEN, HIDDEN)
    params["block2"] = init_linear(keys[5], HIDDEN, HIDDEN)
    params["fc_z_skip"] = init_linear(keys[6], Z_DIM, HIDDEN)
    params["fc_p_skip"] = init_linear(keys[7], P_DIM, HIDDEN)
    params["fc_c_skip"] = init_linear(keys[8], CE_DIM, HIDDEN)
    params["sigma_out"] = init_linear(keys[9], HIDDEN, 1)
    params["fc_z_view"] = init_linear(keys[10], Z_DIM, HIDDEN)
    params["feat_view"] = init_linear(keys[11], HIDDEN, HIDDEN)
    params["fc_view"] = init_linear(keys[12], V_DIM, HIDDEN)
    params["feat_out"] = init_linear(keys[13], HIDDEN, OUT_CHANNEL)
    # TODO(synk): rgb_out / blocks_view exist in __init__ but are unused in
    # forward() at the default config; skipped.
    return params


# ----------------------------- Pallas kernel -------------------------------- #

def decoder_kernel(p_ref, v_ref, bias_ref, w_p_ref, w_blk_ref, bconst_ref,
                   w_fvs_ref, w_view_ref, w_fo_ref, feat_ref, sigma_ref):
    dot = functools.partial(jnp.dot, preferred_element_type=jnp.float32)
    bf16 = jnp.bfloat16

    p = p_ref[0]                       # (T, 60)   bf16
    vemb = v_ref[0]                    # (T, 24)   bf16
    biases = bias_ref[0]               # (2, 256)  f32 per-batch
    bias_p = biases[0:1, :]            # [b_in+fc_z(z)+fc_c(c) | b_ps+fc_z_sk(z)+fc_c_sk(c)]
    bias_v = biases[1:2, :]            # [b_fv+fc_z_view(z)+b_vw | b_sig, 0...]
    bconst = bconst_ref[...]           # (4, 128)  f32: b_b0, b_b1, b_b2, b_fo(pad)

    # Fused fc_in / fc_p_skip pass: one (T,60)x(60,256) matmul.
    pfused = dot(p, w_p_ref[...]) + bias_p                    # (T, 256) f32
    net = jnp.maximum(pfused[:, :HIDDEN], 0.0)                # relu(fc_in(p)+fc_z(z)+fc_c(c))
    skip = pfused[:, HIDDEN:]                                 # fc_p_skips(p)+fc_z_skips(z)+fc_c_skips(c)

    # blocks[0], blocks[1], skip add, blocks[2]
    net = jnp.maximum(dot(net.astype(bf16), w_blk_ref[0]) + bconst[0:1, :], 0.0)
    net = jnp.maximum(dot(net.astype(bf16), w_blk_ref[1]) + bconst[1:2, :], 0.0)
    net = net + skip
    net = jnp.maximum(dot(net.astype(bf16), w_blk_ref[2]) + bconst[2:3, :], 0.0)

    # Fused feat_view / sigma_out pass: one (T,128)x(128,256) matmul.
    fused = dot(net.astype(bf16), w_fvs_ref[...]) + bias_v    # (T, 256) f32
    sigma_ref[0] = fused[:, HIDDEN:HIDDEN + 1]                # sigma head (col 128)
    h = jnp.maximum(fused[:, :HIDDEN] + dot(vemb, w_view_ref[...]), 0.0)
    feat_ref[0] = jnp.tanh(dot(h.astype(bf16), w_fo_ref[...])
                           + bconst[3:4, :OUT_CHANNEL])


def _pick_tile(n, preferred=TILE_N):
    t = min(preferred, n)
    while t > 8 and n % t != 0:
        t //= 2
    if n % t != 0:
        t = n
    return t


def giraffe_decoder_pallas(params, pts, z, c, ray_d):
    B, N, _ = pts.shape
    tile_n = _pick_tile(N)
    assert N % tile_n == 0

    # Elementwise positional-encoding prep (glue); bf16 to halve HBM traffic.
    # Under jit the sin/cos + cast fuse and write bf16 directly.
    p_emb = posenc(pts, N_FREQ_PTS).astype(jnp.bfloat16)                   # (B,N,60)
    c_emb = posenc(c, N_FREQ_C)                                            # (B,1,24) f32
    rd = ray_d / jnp.linalg.norm(ray_d, axis=-1, keepdims=True)
    v_emb = posenc(rd, N_FREQ_VIEW).astype(jnp.bfloat16)                   # (B,N,24)

    w_in, b_in = params["fc_in"]
    w_z, b_z = params["fc_z"]
    w_c, b_c = params["fc_c"]
    w_b0, b_b0 = params["block0"]
    w_b1, b_b1 = params["block1"]
    w_b2, b_b2 = params["block2"]
    w_zs, b_zs = params["fc_z_skip"]
    w_ps, b_ps = params["fc_p_skip"]
    w_cs, b_cs = params["fc_c_skip"]
    w_sig, b_sig = params["sigma_out"]
    w_zv, b_zv = params["fc_z_view"]
    w_fv, b_fv = params["feat_view"]
    w_vw, b_vw = params["fc_view"]
    w_fo, b_fo = params["feat_out"]

    # Fold per-batch (N-independent) latent-code linears into bias vectors (f32).
    z2 = z[:, 0]                                                           # (B, Z_DIM)
    ce2 = c_emb[:, 0]                                                      # (B, 24)
    bias0 = b_in + (z2 @ w_z + b_z) + (ce2 @ w_c + b_c)                    # (B,128)
    bskip = b_ps + (z2 @ w_zs + b_zs) + (ce2 @ w_cs + b_cs)                # (B,128)
    bview = b_fv + (z2 @ w_zv + b_zv) + b_vw                               # (B,128)
    bias_pb = jnp.stack([
        jnp.concatenate([bias0, bskip], axis=-1),
        jnp.concatenate([bview,
                         jnp.broadcast_to(b_sig[None, :], (B, 1)),
                         jnp.zeros((B, HIDDEN - 1), jnp.float32)], axis=-1),
    ], axis=1).astype(jnp.float32)                                         # (B,2,256)

    # Pack weights (bf16): fuse fc_in|fc_p_skip and feat_view|sigma_out RHS.
    w_p = jnp.concatenate([w_in, w_ps], axis=1).astype(jnp.bfloat16)       # (60,256)
    w_blk = jnp.stack([w_b0, w_b1, w_b2], axis=0).astype(jnp.bfloat16)     # (3,128,128)
    w_fvs = jnp.concatenate(
        [w_fv, w_sig, jnp.zeros((HIDDEN, HIDDEN - 1), jnp.float32)],
        axis=1).astype(jnp.bfloat16)                                       # (128,256)
    w_vw_b = w_vw.astype(jnp.bfloat16)                                     # (24,128)
    w_fo_b = w_fo.astype(jnp.bfloat16)                                     # (128,16)
    bconst = jnp.concatenate(
        [jnp.stack([b_b0, b_b1, b_b2], axis=0),
         jnp.pad(b_fo, (0, HIDDEN - OUT_CHANNEL))[None, :]], axis=0)       # (4,128) f32

    grid = (B, N // tile_n)

    in_specs = [
        pl.BlockSpec((1, tile_n, P_DIM), lambda b, i: (b, i, 0)),          # p_emb tile
        pl.BlockSpec((1, tile_n, V_DIM), lambda b, i: (b, i, 0)),          # v_emb tile
        pl.BlockSpec((1, 2, 2 * HIDDEN), lambda b, i: (b, 0, 0)),          # per-batch biases
        pl.BlockSpec((P_DIM, 2 * HIDDEN), lambda b, i: (0, 0)),            # w_in|w_p_skip
        pl.BlockSpec((3, HIDDEN, HIDDEN), lambda b, i: (0, 0, 0)),         # block weights
        pl.BlockSpec((4, HIDDEN), lambda b, i: (0, 0)),                    # const biases
        pl.BlockSpec((HIDDEN, 2 * HIDDEN), lambda b, i: (0, 0)),           # feat_view|sigma
        pl.BlockSpec((V_DIM, HIDDEN), lambda b, i: (0, 0)),                # fc_view
        pl.BlockSpec((HIDDEN, OUT_CHANNEL), lambda b, i: (0, 0)),          # feat_out
    ]
    out_shape = (
        jax.ShapeDtypeStruct((B, N, OUT_CHANNEL), jnp.float32),
        jax.ShapeDtypeStruct((B, N, 1), jnp.float32),
    )
    out_specs = (
        pl.BlockSpec((1, tile_n, OUT_CHANNEL), lambda b, i: (b, i, 0)),
        pl.BlockSpec((1, tile_n, 1), lambda b, i: (b, i, 0)),
    )

    # Scheduler hint: per-point MAC count and HBM traffic of the custom call.
    macs_per_pt = (P_DIM * 2 * HIDDEN + 3 * HIDDEN * HIDDEN
                   + HIDDEN * 2 * HIDDEN + V_DIM * HIDDEN + HIDDEN * OUT_CHANNEL)
    weight_bytes = 2 * (P_DIM * 2 * HIDDEN + 3 * HIDDEN * HIDDEN
                        + HIDDEN * 2 * HIDDEN + V_DIM * HIDDEN
                        + HIDDEN * OUT_CHANNEL)
    cost = pl.CostEstimate(
        flops=2 * B * N * macs_per_pt,
        transcendentals=B * N * OUT_CHANNEL,
        bytes_accessed=B * N * (2 * (P_DIM + V_DIM) + 4 * (OUT_CHANNEL + 1))
        + weight_bytes + B * (2 * 2 * HIDDEN * 4),
    )

    feat, sigma = pl.pallas_call(
        decoder_kernel,
        out_shape=out_shape,
        grid=grid,
        in_specs=in_specs,
        out_specs=out_specs,
        compiler_params=pltpu.CompilerParams(
            dimension_semantics=("parallel", "parallel")),
        cost_estimate=cost,
    )(p_emb, v_emb, bias_pb, w_p, w_blk, bconst, w_fvs, w_vw_b, w_fo_b)
    return feat, sigma


# Single-dispatch entry point: glue ops fuse with each other and schedule
# around the pallas custom call instead of running op-by-op.
giraffe_decoder = jax.jit(giraffe_decoder_pallas)


# --------------------------- pure-JAX reference ----------------------------- #

def giraffe_decoder_ref(params, pts, z, c, ray_d):
    relu = lambda x: jnp.maximum(x, 0.0)
    w_in, b_in = params["fc_in"]
    w_z, b_z = params["fc_z"]
    w_c, b_c = params["fc_c"]
    w_b0, b_b0 = params["block0"]
    w_b1, b_b1 = params["block1"]
    w_b2, b_b2 = params["block2"]
    w_zs, b_zs = params["fc_z_skip"]
    w_ps, b_ps = params["fc_p_skip"]
    w_cs, b_cs = params["fc_c_skip"]
    w_sig, b_sig = params["sigma_out"]
    w_zv, b_zv = params["fc_z_view"]
    w_fv, b_fv = params["feat_view"]
    w_vw, b_vw = params["fc_view"]
    w_fo, b_fo = params["feat_out"]

    p = posenc(pts, N_FREQ_PTS)
    c_emb = posenc(c, N_FREQ_C)
    net = (p @ w_in + b_in) + (z @ w_z + b_z) + (c_emb @ w_c + b_c)
    net = relu(net)
    net = relu(net @ w_b0 + b_b0)          # blocks[0]
    net = relu(net @ w_b1 + b_b1)          # blocks[1]
    net = net + (z @ w_zs + b_zs)          # skip
    net = net + (p @ w_ps + b_ps)
    net = net + (c_emb @ w_cs + b_cs)
    net = relu(net @ w_b2 + b_b2)          # blocks[2]
    sigma = net @ w_sig + b_sig            # (B, N, 1)
    h = (net @ w_fv + b_fv) + (z @ w_zv + b_zv)
    rd = ray_d / jnp.linalg.norm(ray_d, axis=-1, keepdims=True)
    v_emb = posenc(rd, N_FREQ_VIEW)
    h = h + (v_emb @ w_vw + b_vw)
    h = relu(h)
    feat = jnp.tanh(h @ w_fo + b_fo)
    return feat, sigma


# ---------------------------------- main ------------------------------------ #

if __name__ == "__main__":
    key = jax.random.PRNGKey(0)
    kp, k1, k2, k3, k4 = jax.random.split(key, 5)

    B, N = 2, 1024          # -> grid (2, 2): >=2 steps per TensorCore on v7x
    params = init_params(kp)
    pts = jax.random.normal(k1, (B, N, 3), jnp.float32)
    z = jax.random.normal(k2, (B, 1, Z_DIM), jnp.float32)
    c = jax.random.normal(k3, (B, 1, C_DIM), jnp.float32)
    ray_d = jax.random.normal(k4, (B, N, 3), jnp.float32)

    feat, sigma = giraffe_decoder(params, pts, z, c, ray_d)
    feat = jax.block_until_ready(feat)
    sigma = jax.block_until_ready(sigma)

    feat_ref, sigma_ref = giraffe_decoder_ref(params, pts, z, c, ray_d)
    assert feat.shape == (B, N, OUT_CHANNEL) and sigma.shape == (B, N, 1)
    # bf16 MXU path vs f32 reference -> relaxed tolerance.
    assert jnp.allclose(feat, feat_ref, atol=5e-2, rtol=5e-2), "feat mismatch"
    assert jnp.allclose(sigma, sigma_ref, atol=5e-2, rtol=5e-2), "sigma mismatch"

    print("KERNEL_OK")
</pallas_src>

<mosaic_0001>
module attributes {stable_mosaic.version = 11 : i64} {
  func.func @decoder_kernel(%arg0: i32, %arg1: i32, %arg2: memref<1x512x60xbf16, #tpu.memory_space<vmem>>, %arg3: memref<1x512x24xbf16, #tpu.memory_space<vmem>>, %arg4: memref<1x2x256xf32, #tpu.memory_space<vmem>>, %arg5: memref<60x256xbf16, #tpu.memory_space<vmem>>, %arg6: memref<3x128x128xbf16, #tpu.memory_space<vmem>>, %arg7: memref<4x128xf32, #tpu.memory_space<vmem>>, %arg8: memref<128x256xbf16, #tpu.memory_space<vmem>>, %arg9: memref<24x128xbf16, #tpu.memory_space<vmem>>, %arg10: memref<128x16xbf16, #tpu.memory_space<vmem>>, %arg11: memref<1x512x16xf32, #tpu.memory_space<vmem>>, %arg12: memref<1x512x1xf32, #tpu.memory_space<vmem>>) attributes {dimension_semantics = [#tpu.dimension_semantics<parallel>, #tpu.dimension_semantics<parallel>], iteration_bounds = array<i64: 2, 2>, scalar_prefetch = 0 : i64, scratch_operands = 0 : i64, tpu.core_type = #tpu.core_type<tc>, window_params = [{transform_indices = @transform_0, window_bounds = array<i64: 1, 512, 60>}, {transform_indices = @transform_1, window_bounds = array<i64: 1, 512, 24>}, {transform_indices = @transform_2, window_bounds = array<i64: 1, 2, 256>}, {pipeline_mode = #tpu.pipeline_mode<synchronous>, transform_indices = @transform_3, window_bounds = array<i64: 60, 256>}, {pipeline_mode = #tpu.pipeline_mode<synchronous>, transform_indices = @transform_4, window_bounds = array<i64: 3, 128, 128>}, {pipeline_mode = #tpu.pipeline_mode<synchronous>, transform_indices = @transform_5, window_bounds = array<i64: 4, 128>}, {pipeline_mode = #tpu.pipeline_mode<synchronous>, transform_indices = @transform_6, window_bounds = array<i64: 128, 256>}, {pipeline_mode = #tpu.pipeline_mode<synchronous>, transform_indices = @transform_7, window_bounds = array<i64: 24, 128>}, {pipeline_mode = #tpu.pipeline_mode<synchronous>, transform_indices = @transform_8, window_bounds = array<i64: 128, 16>}, {transform_indices = @transform_9, window_bounds = array<i64: 1, 512, 16>}, {transform_indices = @transform_10, window_bounds = array<i64: 1, 512, 1>}]} {
    %c0 = arith.constant 0 : index
    %c0_0 = arith.constant 0 : index
    %c0_1 = arith.constant 0 : index
    %0 = vector.load %arg2[%c0, %c0_0, %c0_1] : memref<1x512x60xbf16, #tpu.memory_space<vmem>>, vector<1x512x60xbf16>
    %1 = vector.shape_cast %0 : vector<1x512x60xbf16> to vector<512x60xbf16>
    %c0_2 = arith.constant 0 : index
    %c0_3 = arith.constant 0 : index
    %c0_4 = arith.constant 0 : index
    %2 = vector.load %arg3[%c0_2, %c0_3, %c0_4] : memref<1x512x24xbf16, #tpu.memory_space<vmem>>, vector<1x512x24xbf16>
    %3 = vector.shape_cast %2 : vector<1x512x24xbf16> to vector<512x24xbf16>
    %c0_5 = arith.constant 0 : index
    %c0_6 = arith.constant 0 : index
    %c0_7 = arith.constant 0 : index
    %4 = vector.load %arg4[%c0_5, %c0_6, %c0_7] : memref<1x2x256xf32, #tpu.memory_space<vmem>>, vector<1x2x256xf32>
    %5 = vector.shape_cast %4 : vector<1x2x256xf32> to vector<2x256xf32>
    %6 = vector.extract_strided_slice %5 {offsets = [0, 0], sizes = [1, 256], strides = [1, 1]} : vector<2x256xf32> to vector<1x256xf32>
    %7 = vector.extract_strided_slice %5 {offsets = [1, 0], sizes = [1, 256], strides = [1, 1]} : vector<2x256xf32> to vector<1x256xf32>
    %c0_8 = arith.constant 0 : index
    %c0_9 = arith.constant 0 : index
    %8 = vector.load %arg7[%c0_8, %c0_9] : memref<4x128xf32, #tpu.memory_space<vmem>>, vector<4x128xf32>
    %c0_10 = arith.constant 0 : index
    %c0_11 = arith.constant 0 : index
    %9 = vector.load %arg5[%c0_10, %c0_11] : memref<60x256xbf16, #tpu.memory_space<vmem>>, vector<60x256xbf16>
    %cst = arith.constant dense<0.000000e+00> : vector<512x256xf32>
    %10 = tpu.matmul %1, %9, %cst {dimension_numbers = #tpu.dot_dimension_numbers<[1], [0], [0], [1], [0, 0, 1, 1], [], []>} : vector<512x60xbf16>, vector<60x256xbf16>, vector<512x256xf32> -> vector<512x256xf32>
    %11 = vector.broadcast %6 : vector<1x256xf32> to vector<512x256xf32>
    %12 = arith.addf %10, %11 : vector<512x256xf32>
    %13 = vector.extract_strided_slice %12 {offsets = [0, 0], sizes = [512, 128], strides = [1, 1]} : vector<512x256xf32> to vector<512x128xf32>
    %cst_12 = arith.constant 0.000000e+00 : f32
    %14 = vector.broadcast %cst_12 : f32 to vector<512x128xf32>
    %15 = arith.maximumf %13, %14 : vector<512x128xf32>
    %16 = vector.extract_strided_slice %12 {offsets = [0, 128], sizes = [512, 128], strides = [1, 1]} : vector<512x256xf32> to vector<512x128xf32>
    %17 = arith.truncf %15 : vector<512x128xf32> to vector<512x128xbf16>
    %c0_13 = arith.constant 0 : index
    %c0_14 = arith.constant 0 : index
    %c0_15 = arith.constant 0 : index
    %18 = vector.load %arg6[%c0_13, %c0_14, %c0_15] : memref<3x128x128xbf16, #tpu.memory_space<vmem>>, vector<1x128x128xbf16>
    %19 = vector.shape_cast %18 : vector<1x128x128xbf16> to vector<128x128xbf16>
    %cst_16 = arith.constant dense<0.000000e+00> : vector<512x128xf32>
    %20 = tpu.matmul %17, %19, %cst_16 {dimension_numbers = #tpu.dot_dimension_numbers<[1], [0], [0], [1], [0, 0, 1, 1], [], []>} : vector<512x128xbf16>, vector<128x128xbf16>, vector<512x128xf32> -> vector<512x128xf32>
    %21 = vector.extract_strided_slice %8 {offsets = [0, 0], sizes = [1, 128], strides = [1, 1]} : vector<4x128xf32> to vector<1x128xf32>
    %22 = vector.broadcast %21 : vector<1x128xf32> to vector<512x128xf32>
    %23 = arith.addf %20, %22 : vector<512x128xf32>
    %cst_17 = arith.constant 0.000000e+00 : f32
    %24 = vector.broadcast %cst_17 : f32 to vector<512x128xf32>
    %25 = arith.maximumf %23, %24 : vector<512x128xf32>
    %26 = arith.truncf %25 : vector<512x128xf32> to vector<512x128xbf16>
    %c1 = arith.constant 1 : index
    %c0_18 = arith.constant 0 : index
    %c0_19 = arith.constant 0 : index
    %27 = vector.load %arg6[%c1, %c0_18, %c0_19] : memref<3x128x128xbf16, #tpu.memory_space<vmem>>, vector<1x128x128xbf16>
    %28 = vector.shape_cast %27 : vector<1x128x128xbf16> to vector<128x128xbf16>
    %cst_20 = arith.constant dense<0.000000e+00> : vector<512x128xf32>
    %29 = tpu.matmul %26, %28, %cst_20 {dimension_numbers = #tpu.dot_dimension_numbers<[1], [0], [0], [1], [0, 0, 1, 1], [], []>} : vector<512x128xbf16>, vector<128x128xbf16>, vector<512x128xf32> -> vector<512x128xf32>
    %30 = vector.extract_strided_slice %8 {offsets = [1, 0], sizes = [1, 128], strides = [1, 1]} : vector<4x128xf32> to vector<1x128xf32>
    %31 = vector.broadcast %30 : vector<1x128xf32> to vector<512x128xf32>
    %32 = arith.addf %29, %31 : vector<512x128xf32>
    %cst_21 = arith.constant 0.000000e+00 : f32
    %33 = vector.broadcast %cst_21 : f32 to vector<512x128xf32>
    %34 = arith.maximumf %32, %33 : vector<512x128xf32>
    %35 = arith.addf %34, %16 : vector<512x128xf32>
    %36 = arith.truncf %35 : vector<512x128xf32> to vector<512x128xbf16>
    %c2 = arith.constant 2 : index
    %c0_22 = arith.constant 0 : index
    %c0_23 = arith.constant 0 : index
    %37 = vector.load %arg6[%c2, %c0_22, %c0_23] : memref<3x128x128xbf16, #tpu.memory_space<vmem>>, vector<1x128x128xbf16>
    %38 = vector.shape_cast %37 : vector<1x128x128xbf16> to vector<128x128xbf16>
    %cst_24 = arith.constant dense<0.000000e+00> : vector<512x128xf32>
    %39 = tpu.matmul %36, %38, %cst_24 {dimension_numbers = #tpu.dot_dimension_numbers<[1], [0], [0], [1], [0, 0, 1, 1], [], []>} : vector<512x128xbf16>, vector<128x128xbf16>, vector<512x128xf32> -> vector<512x128xf32>
    %40 = vector.extract_strided_slice %8 {offsets = [2, 0], sizes = [1, 128], strides = [1, 1]} : vector<4x128xf32> to vector<1x128xf32>
    %41 = vector.broadcast %40 : vector<1x128xf32> to vector<512x128xf32>
    %42 = arith.addf %39, %41 : vector<512x128xf32>
    %cst_25 = arith.constant 0.000000e+00 : f32
    %43 = vector.broadcast %cst_25 : f32 to vector<512x128xf32>
    %44 = arith.maximumf %42, %43 : vector<512x128xf32>
    %45 = arith.truncf %44 : vector<512x128xf32> to vector<512x128xbf16>
    %c0_26 = arith.constant 0 : index
    %c0_27 = arith.constant 0 : index
    %46 = vector.load %arg8[%c0_26, %c0_27] : memref<128x256xbf16, #tpu.memory_space<vmem>>, vector<128x256xbf16>
    %cst_28 = arith.constant dense<0.000000e+00> : vector<512x256xf32>
    %47 = tpu.matmul %45, %46, %cst_28 {dimension_numbers = #tpu.dot_dimension_numbers<[1], [0], [0], [1], [0, 0, 1, 1], [], []>} : vector<512x128xbf16>, vector<128x256xbf16>, vector<512x256xf32> -> vector<512x256xf32>
    %48 = vector.broadcast %7 : vector<1x256xf32> to vector<512x256xf32>
    %49 = arith.addf %47, %48 : vector<512x256xf32>
    %50 = vector.extract_strided_slice %49 {offsets = [0, 128], sizes = [512, 1], strides = [1, 1]} : vector<512x256xf32> to vector<512x1xf32>
    %c0_29 = arith.constant 0 : index
    %c0_30 = arith.constant 0 : index
    %c0_31 = arith.constant 0 : index
    %51 = vector.load %arg12[%c0_29, %c0_30, %c0_31] : memref<1x512x1xf32, #tpu.memory_space<vmem>>, vector<1x512x1xf32>
    %52 = vector.shape_cast %51 : vector<1x512x1xf32> to vector<512x1xf32>
    %53 = vector.shape_cast %50 : vector<512x1xf32> to vector<1x512x1xf32>
    tpu.vector_store %arg12[%c0_29, %c0_30, %c0_31], %53 {strides = array<i32>} : memref<1x512x1xf32, #tpu.memory_space<vmem>>, vector<1x512x1xf32>,
    %54 = vector.extract_strided_slice %49 {offsets = [0, 0], sizes = [512, 128], strides = [1, 1]} : vector<512x256xf32> to vector<512x128xf32>
    %c0_32 = arith.constant 0 : index
    %c0_33 = arith.constant 0 : index
    %55 = vector.load %arg9[%c0_32, %c0_33] : memref<24x128xbf16, #tpu.memory_space<vmem>>, vector<24x128xbf16>
    %cst_34 = arith.constant dense<0.000000e+00> : vector<512x128xf32>
    %56 = tpu.matmul %3, %55, %cst_34 {dimension_numbers = #tpu.dot_dimension_numbers<[1], [0], [0], [1], [0, 0, 1, 1], [], []>} : vector<512x24xbf16>, vector<24x128xbf16>, vector<512x128xf32> -> vector<512x128xf32>
    %57 = arith.addf %54, %56 : vector<512x128xf32>
    %cst_35 = arith.constant 0.000000e+00 : f32
    %58 = vector.broadcast %cst_35 : f32 to vector<512x128xf32>
    %59 = arith.maximumf %57, %58 : vector<512x128xf32>
    %60 = arith.truncf %59 : vector<512x128xf32> to vector<512x128xbf16>
    %c0_36 = arith.constant 0 : index
    %c0_37 = arith.constant 0 : index
    %61 = vector.load %arg10[%c0_36, %c0_37] : memref<128x16xbf16, #tpu.memory_space<vmem>>, vector<128x16xbf16>
    %cst_38 = arith.constant dense<0.000000e+00> : vector<512x16xf32>
    %62 = tpu.matmul %60, %61, %cst_38 {dimension_numbers = #tpu.dot_dimension_numbers<[1], [0], [0], [1], [0, 0, 1, 1], [], []>} : vector<512x128xbf16>, vector<128x16xbf16>, vector<512x16xf32> -> vector<512x16xf32>
    %63 = vector.extract_strided_slice %8 {offsets = [3, 0], sizes = [1, 16], strides = [1, 1]} : vector<4x128xf32> to vector<1x16xf32>
    %64 = vector.broadcast %63 : vector<1x16xf32> to vector<512x16xf32>
    %65 = arith.addf %62, %64 : vector<512x16xf32>
    %66 = math.tanh %65 : vector<512x16xf32>
    %c0_39 = arith.constant 0 : index
    %c0_40 = arith.constant 0 : index
    %c0_41 = arith.constant 0 : index
    %67 = vector.load %arg11[%c0_39, %c0_40, %c0_41] : memref<1x512x16xf32, #tpu.memory_space<vmem>>, vector<1x512x16xf32>
    %68 = vector.shape_cast %67 : vector<1x512x16xf32> to vector<512x16xf32>
    %69 = vector.shape_cast %66 : vector<512x16xf32> to vector<1x512x16xf32>
    tpu.vector_store %arg11[%c0_39, %c0_40, %c0_41], %69 {strides = array<i32>} : memref<1x512x16xf32, #tpu.memory_space<vmem>>, vector<1x512x16xf32>,
    return
  }
  func.func @transform_0(%arg0: i32, %arg1: i32) -> (i32, i32, i32) {
    %c0_i32 = arith.constant 0 : i32
    %c0_i32_0 = arith.constant 0 : i32
    return %arg0, %arg1, %c0_i32 : i32, i32, i32
  }
  func.func @transform_1(%arg0: i32, %arg1: i32) -> (i32, i32, i32) {
    %c0_i32 = arith.constant 0 : i32
    %c0_i32_0 = arith.constant 0 : i32
    return %arg0, %arg1, %c0_i32 : i32, i32, i32
  }
  func.func @transform_2(%arg0: i32, %arg1: i32) -> (i32, i32, i32) {
    %c0_i32 = arith.constant 0 : i32
    %c0_i32_0 = arith.constant 0 : i32
    %c0_i32_1 = arith.constant 0 : i32
    return %arg0, %c0_i32, %c0_i32_0 : i32, i32, i32
  }
  func.func @transform_3(%arg0: i32, %arg1: i32) -> (i32, i32) {
    %c0_i32 = arith.constant 0 : i32
    %c0_i32_0 = arith.constant 0 : i32
    %c0_i32_1 = arith.constant 0 : i32
    return %c0_i32, %c0_i32_0 : i32, i32
  }
  func.func @transform_4(%arg0: i32, %arg1: i32) -> (i32, i32, i32) {
    %c0_i32 = arith.constant 0 : i32
    %c0_i32_0 = arith.constant 0 : i32
    %c0_i32_1 = arith.constant 0 : i32
    %c0_i32_2 = arith.constant 0 : i32
    return %c0_i32, %c0_i32_0, %c0_i32_1 : i32, i32, i32
  }
  func.func @transform_5(%arg0: i32, %arg1: i32) -> (i32, i32) {
    %c0_i32 = arith.constant 0 : i32
    %c0_i32_0 = arith.constant 0 : i32
    %c0_i32_1 = arith.constant 0 : i32
    return %c0_i32, %c0_i32_0 : i32, i32
  }
  func.func @transform_6(%arg0: i32, %arg1: i32) -> (i32, i32) {
    %c0_i32 = arith.constant 0 : i32
    %c0_i32_0 = arith.constant 0 : i32
    %c0_i32_1 = arith.constant 0 : i32
    return %c0_i32, %c0_i32_0 : i32, i32
  }
  func.func @transform_7(%arg0: i32, %arg1: i32) -> (i32, i32) {
    %c0_i32 = arith.constant 0 : i32
    %c0_i32_0 = arith.constant 0 : i32
    %c0_i32_1 = arith.constant 0 : i32
    return %c0_i32, %c0_i32_0 : i32, i32
  }
  func.func @transform_8(%arg0: i32, %arg1: i32) -> (i32, i32) {
    %c0_i32 = arith.constant 0 : i32
    %c0_i32_0 = arith.constant 0 : i32
    %c0_i32_1 = arith.constant 0 : i32
    return %c0_i32, %c0_i32_0 : i32, i32
  }
  func.func @transform_9(%arg0: i32, %arg1: i32) -> (i32, i32, i32) {
    %c0_i32 = arith.constant 0 : i32
    %c0_i32_0 = arith.constant 0 : i32
    return %arg0, %arg1, %c0_i32 : i32, i32, i32
  }
  func.func @transform_10(%arg0: i32, %arg1: i32) -> (i32, i32, i32) {
    %c0_i32 = arith.constant 0 : i32
    %c0_i32_0 = arith.constant 0 : i32
    return %arg0, %arg1, %c0_i32 : i32, i32, i32
  }
}

</mosaic_0001>

<llo_original>
// kernel: giraffe_decoder_pallas.1
$region0: #{giraffe_decoder_pallas.1}
  #allocation0 [shape = 'u32[]', space=smem, size = 0x4, offset = 0x4, fixed_abs, tag = 'smem constant byte address 0x4 - core index']
  #allocation1 [shape = 'u32[144,128]{1,0:T(1,128)}', space=vmem, size = 0x12000, scoped, tag = 'internal scratch']
  %s0 = inlined_call_operand.vmem [shape: bf16[2,1024,60], index: 0, kind: input, shape index: {}]
  %s1 = inlined_call_operand.vmem [shape: bf16[2,1024,24], index: 1, kind: input, shape index: {}]
  %s2 = inlined_call_operand.vmem [shape: f32[2,2,256], index: 2, kind: input, shape index: {}]
  %s3 = inlined_call_operand.vmem [shape: bf16[60,256], index: 3, kind: input, shape index: {}]
  %s4 = inlined_call_operand.vmem [shape: bf16[3,128,128], index: 4, kind: input, shape index: {}]
  %s5 = inlined_call_operand.vmem [shape: f32[4,128], index: 5, kind: input, shape index: {}]
  %s6 = inlined_call_operand.vmem [shape: bf16[128,256], index: 6, kind: input, shape index: {}]
  %s7 = inlined_call_operand.vmem [shape: bf16[24,128], index: 7, kind: input, shape index: {}]
  %s8 = inlined_call_operand.vmem [shape: bf16[128,16], index: 8, kind: input, shape index: {}]
  %s9 = inlined_call_operand.vmem [shape: f32[2,1024,16], index: 9, kind: output, shape index: {0}]
  %s10 = inlined_call_operand.vmem [shape: f32[2,1024,1], index: 10, kind: output, shape index: {1}]
  %11 = xla_tuple %s9, %s10
  %s12 = sld [smem:[#allocation0]]
  $region77: #{giraffe_decoder_pallas.1} parent=0
    _
  %s14 = ssub.s32 1, %s12
  %s15 = scalar_select 0, %s14, %s12
  loop: start=0, step=1, limit=6
  $region2: #{giraffe_decoder_pallas.1} parent=0 // loop_pre_header
    _
  $region3: #{giraffe_decoder_pallas.1} parent=0 // loop_header
    %s17 = sphi 0, %s21
    %p18 = scmp.ge.s32.totalorder %s17, 6
    %s24 = sphi 0, %s36
    %s25 = sphi 0, %s32
    %s26 = sphi 0, %s24
    %s27 = sphi 0, %s25
    %s28 = sphi 0, %s26
    %s29 = sphi 0, %s27
    %s41 = sphi 0, %s43
    %s44 = sphi 0, %s41
    %s45 = sphi 0, %s44
    %s61 = sphi 0, %s45
    %s69 = sphi 0, %s71
    %s72 = sphi 0, %s69
    %s73 = sphi 0, %s72
    %s89 = sphi 0, %s73
    %s95 = sphi 0, %s97
    %s98 = sphi 0, %s95
    %s99 = sphi 0, %s98
    %s115 = sphi 0, %s99
    %s119 = sphi 0, %s119
    %s121 = sphi 0, %s119
    %s122 = sphi 0, %s121
    %s136 = sphi 0, %s122
    %s140 = sphi 0, %s140
    %s142 = sphi 0, %s140
    %s143 = sphi 0, %s142
    %s157 = sphi 0, %s143
    %s161 = sphi 0, %s161
    %s163 = sphi 0, %s161
    %s164 = sphi 0, %s163
    %s178 = sphi 0, %s164
    %s182 = sphi 0, %s182
    %s184 = sphi 0, %s182
    %s185 = sphi 0, %s184
    %s199 = sphi 0, %s185
    %s203 = sphi 0, %s203
    %s205 = sphi 0, %s203
    %s206 = sphi 0, %s205
    %s220 = sphi 0, %s206
    %s224 = sphi 0, %s224
    %s226 = sphi 0, %s224
    %s227 = sphi 0, %s226
    %s241 = sphi 0, %s227
    %s249 = sphi 0, %s251
    %s252 = sphi 0, %s249
    %s253 = sphi 0, %s252
    %s269 = sphi 0, %s253
    %s277 = sphi 0, %s279
    %s280 = sphi 0, %s277
    %s281 = sphi 0, %s280
    %s297 = sphi 0, %s281
  $region4: #{giraffe_decoder_pallas.1} parent=0 // loop_header_branch
    %20 = sbr.rel (%p18) target = $region8
  $region5: #{giraffe_decoder_pallas.1} parent=0 // loop_body
    %s22 = ssub.s32 %s17, 1
    %s23 = ssub.s32 %s17, 2
    %s30 = sadd.s32 1, %s25
    %p31 = scmp.ge.s32.totalorder %s30, 2
    %s32 = scalar_select %p31, 0, %s30
    %s33 = sadd.s32 1, %s24
    %s34 = scalar_select %p31, %s33, %s24
    %p35 = scmp.ge.s32.totalorder %s34, 2
    %s36 = scalar_select %p35, 0, %s34
    %s37 = ssub.s32 %s24, %s36
    %s38 = ssub.s32 %s25, %s32
    %s39 = sor.u32 %s37, %s38
    %p40 = scmp.eq.s32.totalorder %s39, 0
    %s42 = sadd.s32 %s41, 1
    %s43 = scalar_select %p40, %s41, %s42
    %p46 = pneg %p40
    %p47 = scmp.eq.s32.totalorder %s17, 3
    %p48 = por %p46, %p47
    %p49 = scmp.ne.s32.totalorder %s41, %s44
    %p50 = scmp.eq.s32.totalorder %s17, 0
    %p51 = por %p49, %p50
    %p52 = scmp.ne.s32.totalorder %s41, %s44
    %p53 = scmp.eq.s32.totalorder %s22, 3
    %p54 = por %p52, %p53
    %p55 = scmp.ne.s32.totalorder %s44, %s45
    %p56 = scmp.eq.s32.totalorder %s22, 0
    %p57 = por %p55, %p56
    %p58 = scmp.ne.s32.totalorder %s44, %s45
    %p59 = scmp.eq.s32.totalorder %s23, 3
    %p60 = por %p58, %p59
    %p62 = scmp.ne.s32.totalorder %s45, %s61
    %p63 = scmp.eq.s32.totalorder %s23, 0
    %p64 = por %p62, %p63
    %s65 = ssub.s32 %s24, %s36
    %s66 = ssub.s32 %s25, %s32
    %s67 = sor.u32 %s65, %s66
    %p68 = scmp.eq.s32.totalorder %s67, 0
    %s70 = sadd.s32 %s69, 1
    %s71 = scalar_select %p68, %s69, %s70
    %p74 = pneg %p68
    %p75 = scmp.eq.s32.totalorder %s17, 3
    %p76 = por %p74, %p75
    %p77 = scmp.ne.s32.totalorder %s69, %s72
    %p78 = scmp.eq.s32.totalorder %s17, 0
    %p79 = por %p77, %p78
    %p80 = scmp.ne.s32.totalorder %s69, %s72
    %p81 = scmp.eq.s32.totalorder %s22, 3
    %p82 = por %p80, %p81
    %p83 = scmp.ne.s32.totalorder %s72, %s73
    %p84 = scmp.eq.s32.totalorder %s22, 0
    %p85 = por %p83, %p84
    %p86 = scmp.ne.s32.totalorder %s72, %s73
    %p87 = scmp.eq.s32.totalorder %s23, 3
    %p88 = por %p86, %p87
    %p90 = scmp.ne.s32.totalorder %s73, %s89
    %p91 = scmp.eq.s32.totalorder %s23, 0
    %p92 = por %p90, %p91
    %s93 = ssub.s32 %s24, %s36
    %p94 = scmp.eq.s32.totalorder %s93, 0
    %s96 = sadd.s32 %s95, 1
    %s97 = scalar_select %p94, %s95, %s96
    %p100 = pneg %p94
    %p101 = scmp.eq.s32.totalorder %s17, 3
    %p102 = por %p100, %p101
    %p103 = scmp.ne.s32.totalorder %s95, %s98
    %p104 = scmp.eq.s32.totalorder %s17, 0
    %p105 = por %p103, %p104
    %p106 = scmp.ne.s32.totalorder %s95, %s98
    %p107 = scmp.eq.s32.totalorder %s22, 3
    %p108 = por %p106, %p107
    %p109 = scmp.ne.s32.totalorder %s98, %s99
    %p110 = scmp.eq.s32.totalorder %s22, 0
    %p111 = por %p109, %p110
    %p112 = scmp.ne.s32.totalorder %s98, %s99
    %p113 = scmp.eq.s32.totalorder %s23, 3
    %p114 = por %p112, %p113
    %p116 = scmp.ne.s32.totalorder %s99, %s115
    %p117 = scmp.eq.s32.totalorder %s23, 0
    %p118 = por %p116, %p117
    %s120 = sadd.s32 %s119, 1
    %p123 = scmp.eq.s32.totalorder %s17, 3
    %p124 = scmp.ne.s32.totalorder %s119, %s121
    %p125 = scmp.eq.s32.totalorder %s17, 0
    %p126 = por %p124, %p125
    %p127 = scmp.ne.s32.totalorder %s119, %s121
    %p128 = scmp.eq.s32.totalorder %s22, 3
    %p129 = por %p127, %p128
    %p130 = scmp.ne.s32.totalorder %s121, %s122
    %p131 = scmp.eq.s32.totalorder %s22, 0
    %p132 = por %p130, %p131
    %p133 = scmp.ne.s32.totalorder %s121, %s122
    %p134 = scmp.eq.s32.totalorder %s23, 3
    %p135 = por %p133, %p134
    %p137 = scmp.ne.s32.totalorder %s122, %s136
    %p138 = scmp.eq.s32.totalorder %s23, 0
    %p139 = por %p137, %p138
    %s141 = sadd.s32 %s140, 1
    %p144 = scmp.eq.s32.totalorder %s17, 3
    %p145 = scmp.ne.s32.totalorder %s140, %s142
    %p146 = scmp.eq.s32.totalorder %s17, 0
    %p147 = por %p145, %p146
    %p148 = scmp.ne.s32.totalorder %s140, %s142
    %p149 = scmp.eq.s32.totalorder %s22, 3
    %p150 = por %p148, %p149
    %p151 = scmp.ne.s32.totalorder %s142, %s143
    %p152 = scmp.eq.s32.totalorder %s22, 0
    %p153 = por %p151, %p152
    %p154 = scmp.ne.s32.totalorder %s142, %s143
    %p155 = scmp.eq.s32.totalorder %s23, 3
    %p156 = por %p154, %p155
    %p158 = scmp.ne.s32.totalorder %s143, %s157
    %p159 = scmp.eq.s32.totalorder %s23, 0
    %p160 = por %p158, %p159
    %s162 = sadd.s32 %s161, 1
    %p165 = scmp.eq.s32.totalorder %s17, 3
    %p166 = scmp.ne.s32.totalorder %s161, %s163
    %p167 = scmp.eq.s32.totalorder %s17, 0
    %p168 = por %p166, %p167
    %p169 = scmp.ne.s32.totalorder %s161, %s163
    %p170 = scmp.eq.s32.totalorder %s22, 3
    %p171 = por %p169, %p170
    %p172 = scmp.ne.s32.totalorder %s163, %s164
    %p173 = scmp.eq.s32.totalorder %s22, 0
    %p174 = por %p172, %p173
    %p175 = scmp.ne.s32.totalorder %s163, %s164
    %p176 = scmp.eq.s32.totalorder %s23, 3
    %p177 = por %p175, %p176
    %p179 = scmp.ne.s32.totalorder %s164, %s178
    %p180 = scmp.eq.s32.totalorder %s23, 0
    %p181 = por %p179, %p180
    %s183 = sadd.s32 %s182, 1
    %p186 = scmp.eq.s32.totalorder %s17, 3
    %p187 = scmp.ne.s32.totalorder %s182, %s184
    %p188 = scmp.eq.s32.totalorder %s17, 0
    %p189 = por %p187, %p188
    %p190 = scmp.ne.s32.totalorder %s182, %s184
    %p191 = scmp.eq.s32.totalorder %s22, 3
    %p192 = por %p190, %p191
    %p193 = scmp.ne.s32.totalorder %s184, %s185
    %p194 = scmp.eq.s32.totalorder %s22, 0
    %p195 = por %p193, %p194
    %p196 = scmp.ne.s32.totalorder %s184, %s185
    %p197 = scmp.eq.s32.totalorder %s23, 3
    %p198 = por %p196, %p197
    %p200 = scmp.ne.s32.totalorder %s185, %s199
    %p201 = scmp.eq.s32.totalorder %s23, 0
    %p202 = por %p200, %p201
    %s204 = sadd.s32 %s203, 1
    %p207 = scmp.eq.s32.totalorder %s17, 3
    %p208 = scmp.ne.s32.totalorder %s203, %s205
    %p209 = scmp.eq.s32.totalorder %s17, 0
    %p210 = por %p208, %p209
    %p211 = scmp.ne.s32.totalorder %s203, %s205
    %p212 = scmp.eq.s32.totalorder %s22, 3
    %p213 = por %p211, %p212
    %p214 = scmp.ne.s32.totalorder %s205, %s206
    %p215 = scmp.eq.s32.totalorder %s22, 0
    %p216 = por %p214, %p215
    %p217 = scmp.ne.s32.totalorder %s205, %s206
    %p218 = scmp.eq.s32.totalorder %s23, 3
    %p219 = por %p217, %p218
    %p221 = scmp.ne.s32.totalorder %s206, %s220
    %p222 = scmp.eq.s32.totalorder %s23, 0
    %p223 = por %p221, %p222
    %s225 = sadd.s32 %s224, 1
    %p228 = scmp.eq.s32.totalorder %s17, 3
    %p229 = scmp.ne.s32.totalorder %s224, %s226
    %p230 = scmp.eq.s32.totalorder %s17, 0
    %p231 = por %p229, %p230
    %p232 = scmp.ne.s32.totalorder %s224, %s226
    %p233 = scmp.eq.s32.totalorder %s22, 3
    %p234 = por %p232, %p233
    %p235 = scmp.ne.s32.totalorder %s226, %s227
    %p236 = scmp.eq.s32.totalorder %s22, 0
    %p237 = por %p235, %p236
    %p238 = scmp.ne.s32.totalorder %s226, %s227
    %p239 = scmp.eq.s32.totalorder %s23, 3
    %p240 = por %p238, %p239
    %p242 = scmp.ne.s32.totalorder %s227, %s241
    %p243 = scmp.eq.s32.totalorder %s23, 0
    %p244 = por %p242, %p243
    %s245 = ssub.s32 %s24, %s36
    %s246 = ssub.s32 %s25, %s32
    %s247 = sor.u32 %s245, %s246
    %p248 = scmp.eq.s32.totalorder %s247, 0
    %s250 = sadd.s32 %s249, 1
    %s251 = scalar_select %p248, %s249, %s250
    %p254 = pneg %p248
    %p255 = scmp.eq.s32.totalorder %s17, 3
    %p256 = por %p254, %p255
    %p257 = scmp.ne.s32.totalorder %s249, %s252
    %p258 = scmp.eq.s32.totalorder %s17, 0
    %p259 = por %p257, %p258
    %p260 = scmp.ne.s32.totalorder %s249, %s252
    %p261 = scmp.eq.s32.totalorder %s22, 3
    %p262 = por %p260, %p261
    %p263 = scmp.ne.s32.totalorder %s252, %s253
    %p264 = scmp.eq.s32.totalorder %s22, 0
    %p265 = por %p263, %p264
    %p266 = scmp.ne.s32.totalorder %s252, %s253
    %p267 = scmp.eq.s32.totalorder %s23, 3
    %p268 = por %p266, %p267
    %p270 = scmp.ne.s32.totalorder %s253, %s269
    %p271 = scmp.eq.s32.totalorder %s23, 0
    %p272 = por %p270, %p271
    %s273 = ssub.s32 %s24, %s36
    %s274 = ssub.s32 %s25, %s32
    %s275 = sor.u32 %s273, %s274
    %p276 = scmp.eq.s32.totalorder %s275, 0
    %s278 = sadd.s32 %s277, 1
    %s279 = scalar_select %p276, %s277, %s278
    %p282 = pneg %p276
    %p283 = scmp.eq.s32.totalorder %s17, 3
    %p284 = por %p282, %p283
    %p285 = scmp.ne.s32.totalorder %s277, %s280
    %p286 = scmp.eq.s32.totalorder %s17, 0
    %p287 = por %p285, %p286
    %p288 = scmp.ne.s32.totalorder %s277, %s280
    %p289 = scmp.eq.s32.totalorder %s22, 3
    %p290 = por %p288, %p289
    %p291 = scmp.ne.s32.totalorder %s280, %s281
    %p292 = scmp.eq.s32.totalorder %s22, 0
    %p293 = por %p291, %p292
    %p294 = scmp.ne.s32.totalorder %s280, %s281
    %p295 = scmp.eq.s32.totalorder %s23, 3
    %p296 = por %p294, %p295
    %p298 = scmp.ne.s32.totalorder %s281, %s297
    %p299 = scmp.eq.s32.totalorder %s23, 0
    %p300 = por %p298, %p299
    %p301 = scmp.le.s32.totalorder 1, %s17
    %p302 = scmp.lt.s32.totalorder %s17, 5
    %p303 = pnand %p301, %p302
    %p304 = pneg %p303
    // Predicated region
    $region9: #{giraffe_decoder_pallas.1} parent=5 // pred_check
      _
    $region10: #{giraffe_decoder_pallas.1} parent=5 // pred_check_branch
      %306 = sbr.rel (%p303) target = $region12
    $region11: #{giraffe_decoder_pallas.1} parent=5 // pred_region
      %s307 = ssub.s32 %s17, 1
      // Predicated region
      $region13: #{giraffe_decoder_pallas.1} parent=11 // pred_check
        %p308 = pneg %p132
      $region14: #{giraffe_decoder_pallas.1} parent=11 // pred_check_branch
        %310 = sbr.rel (%p308) target = $region16
      $region15: #{giraffe_decoder_pallas.1} parent=11 // pred_region
        _
      $region16: #{giraffe_decoder_pallas.1} parent=11 // pred_fallthru
        _
      // Predicated region
      $region17: #{giraffe_decoder_pallas.1} parent=11 // pred_check
        %p311 = pneg %p153
      $region18: #{giraffe_decoder_pallas.1} parent=11 // pred_check_branch
        %313 = sbr.rel (%p311) target = $region20
      $region19: #{giraffe_decoder_pallas.1} parent=11 // pred_region
        _
      $region20: #{giraffe_decoder_pallas.1} parent=11 // pred_fallthru
        _
      // Predicated region
      $region21: #{giraffe_decoder_pallas.1} parent=11 // pred_check
        %p314 = pneg %p174
      $region22: #{giraffe_decoder_pallas.1} parent=11 // pred_check_branch
        %316 = sbr.rel (%p314) target = $region24
      $region23: #{giraffe_decoder_pallas.1} parent=11 // pred_region
        _
      $region24: #{giraffe_decoder_pallas.1} parent=11 // pred_fallthru
        _
      // Predicated region
      $region25: #{giraffe_decoder_pallas.1} parent=11 // pred_check
        %p317 = pneg %p195
      $region26: #{giraffe_decoder_pallas.1} parent=11 // pred_check_branch
        %319 = sbr.rel (%p317) target = $region28
      $region27: #{giraffe_decoder_pallas.1} parent=11 // pred_region
        _
      $region28: #{giraffe_decoder_pallas.1} parent=11 // pred_fallthru
        _
      // Predicated region
      $region29: #{giraffe_decoder_pallas.1} parent=11 // pred_check
        %p320 = pneg %p216
      $region30: #{giraffe_decoder_pallas.1} parent=11 // pred_check_branch
        %322 = sbr.rel (%p320) target = $region32
      $region31: #{giraffe_decoder_pallas.1} parent=11 // pred_region
        _
      $region32: #{giraffe_decoder_pallas.1} parent=11 // pred_fallthru
        _
      // Predicated region
      $region33: #{giraffe_decoder_pallas.1} parent=11 // pred_check
        %p323 = pneg %p237
      $region34: #{giraffe_decoder_pallas.1} parent=11 // pred_check_branch
        %325 = sbr.rel (%p323) target = $region36
      $region35: #{giraffe_decoder_pallas.1} parent=11 // pred_region
        _
      $region36: #{giraffe_decoder_pallas.1} parent=11 // pred_fallthru
        _
    $region12: #{giraffe_decoder_pallas.1} parent=5 // pred_fallthru
      _
    %p326 = scmp.lt.s32.totalorder %s17, 4
    // Predicated region
    $region37: #{giraffe_decoder_pallas.1} parent=5 // pred_check
      %p327 = pneg %p326
    $region38: #{giraffe_decoder_pallas.1} parent=5 // pred_check_branch
      %329 = sbr.rel (%p327) target = $region40
    $region39: #{giraffe_decoder_pallas.1} parent=5 // pred_region
      // Predicated region
      $region41: #{giraffe_decoder_pallas.1} parent=39 // pred_check
        %p330 = pneg %p51
      $region42: #{giraffe_decoder_pallas.1} parent=39 // pred_check_branch
        %332 = sbr.rel (%p330) target = $region44
      $region43: #{giraffe_decoder_pallas.1} parent=39 // pred_region
        %s333 = smul.u32 64, %s25
        %p334 = scmp.lt.s32.totalorder %s24, 1
        %s335 = scalar_select %p334, %s24, 1
        %p336 = scmp.lt.s32.totalorder %s333, 127
        %s337 = scalar_select %p336, %s333, 127
        %s338 = smul.addr %s335, 128
        %s339 = sadd.s32 %s337, %s338
        %s340 = smul.addr %s339, 4
        %s341 = scalar_lea.vmem %s0, %s340
        %s342 = smul.u32 64, %s25
      $region44: #{giraffe_decoder_pallas.1} parent=39 // pred_fallthru
        _
      // Predicated region
      $region45: #{giraffe_decoder_pallas.1} parent=39 // pred_check
        %p343 = pneg %p79
      $region46: #{giraffe_decoder_pallas.1} parent=39 // pred_check_branch
        %345 = sbr.rel (%p343) target = $region48
      $region47: #{giraffe_decoder_pallas.1} parent=39 // pred_region
        %s346 = smul.u32 64, %s25
        %p347 = scmp.lt.s32.totalorder %s24, 1
        %s348 = scalar_select %p347, %s24, 1
        %p349 = scmp.lt.s32.totalorder %s346, 127
        %s350 = scalar_select %p349, %s346, 127
        %s351 = smul.addr %s348, 128
        %s352 = sadd.s32 %s350, %s351
        %s353 = smul.addr %s352, 4
        %s354 = scalar_lea.vmem %s1, %s353
        %s355 = smul.u32 64, %s25
      $region48: #{giraffe_decoder_pallas.1} parent=39 // pred_fallthru
        _
      // Predicated region
      $region49: #{giraffe_decoder_pallas.1} parent=39 // pred_check
        %p356 = pneg %p105
      $region50: #{giraffe_decoder_pallas.1} parent=39 // pred_check_branch
        %358 = sbr.rel (%p356) target = $region52
      $region51: #{giraffe_decoder_pallas.1} parent=39 // pred_region
        %p359 = scmp.lt.s32.totalorder %s24, 1
        %s360 = scalar_select %p359, %s24, 1
        %s361 = smul.addr %s360, 2
        %s362 = smul.addr %s361, 2
        %s363 = scalar_lea.vmem %s2, %s362
      $region52: #{giraffe_decoder_pallas.1} parent=39 // pred_fallthru
        _
    $region40: #{giraffe_decoder_pallas.1} parent=5 // pred_fallthru
      _
    %p364 = scmp.le.s32.totalorder 1, %s17
    %p365 = scmp.lt.s32.totalorder %s17, 5
    %p366 = pnand %p364, %p365
    %p367 = pneg %p366
    // Predicated region
    $region53: #{giraffe_decoder_pallas.1} parent=5 // pred_check
      _
    $region54: #{giraffe_decoder_pallas.1} parent=5 // pred_check_branch
      %369 = sbr.rel (%p366) target = $region56
    $region55: #{giraffe_decoder_pallas.1} parent=5 // pred_region
      %s370 = ssub.s32 %s17, 1
      %s371 = smul.u32 64, %s27
      %p372 = scmp.lt.s32.totalorder %s26, 1
      %s373 = scalar_select %p372, %s26, 1
      %p374 = scmp.lt.s32.totalorder %s371, 127
      %s375 = scalar_select %p374, %s371, 127
      %s376 = smul.addr %s373, 128
      %s377 = sadd.s32 %s375, %s376
      %s378 = smul.addr %s377, 4
      %s379 = scalar_lea.vmem %s0, %s378
      %p380 = pneg %p57
      %p381 = pneg %p54
      %s382 = smul.u32 64, %s27
      %p383 = scmp.lt.s32.totalorder %s26, 1
      %s384 = scalar_select %p383, %s26, 1
      %p385 = scmp.lt.s32.totalorder %s382, 127
      %s386 = scalar_select %p385, %s382, 127
      %s387 = smul.addr %s384, 128
      %s388 = sadd.s32 %s386, %s387
      %s389 = smul.addr %s388, 4
      %s390 = scalar_lea.vmem %s1, %s389
      %p391 = pneg %p85
      %p392 = pneg %p82
      %p393 = scmp.lt.s32.totalorder %s26, 1
      %s394 = scalar_select %p393, %s26, 1
      %s395 = smul.addr %s394, 2
      %s396 = smul.addr %s395, 2
      %s397 = scalar_lea.vmem %s2, %s396
      %p398 = pneg %p111
      %p399 = pneg %p108
      %p400 = pneg %p132
      %p401 = pneg %p129
      %p402 = pneg %p153
      %p403 = pneg %p150
      %p404 = pneg %p174
      %p405 = pneg %p171
      %p406 = pneg %p195
      %p407 = pneg %p192
      %p408 = pneg %p216
      %p409 = pneg %p213
      %p410 = pneg %p237
      %p411 = pneg %p234
      %p412 = pneg %p265
      %p413 = pneg %p262
      %s414 = smul.u32 64, %s27
      %p415 = scmp.lt.s32.totalorder %s26, 1
      %s416 = scalar_select %p415, %s26, 1
      %p417 = scmp.lt.s32.totalorder %s414, 127
      %s418 = scalar_select %p417, %s414, 127
      %s419 = smul.addr %s416, 128
      %s420 = sadd.s32 %s418, %s419
      %s421 = smul.addr %s420, 8
      %s422 = scalar_lea.vmem %s9, %s421
      %p423 = pneg %p293
      %p424 = pneg %p290
      %s425 = smul.u32 64, %s27
      %p426 = scmp.lt.s32.totalorder %s26, 1
      %s427 = scalar_select %p426, %s26, 1
      %p428 = scmp.lt.s32.totalorder %s425, 127
      %s429 = scalar_select %p428, %s425, 127
      %s430 = smul.addr %s427, 128
      %s431 = sadd.s32 %s429, %s430
      %s432 = smul.addr %s431, 8
      %s433 = scalar_lea.vmem %s10, %s432
      %s434 = smul.u32 64, %s27
      %p435 = scmp.lt.s32.totalorder %s26, 1
      %s436 = scalar_select %p435, %s26, 1
      %p437 = scmp.lt.s32.totalorder %s434, 127
      %s438 = scalar_select %p437, %s434, 127
      %s439 = smul.addr %s436, 128
      %s440 = sadd.s32 %s438, %s439
      %s441 = smul.addr %s440, 4
      %s442 = scalar_lea.vmem %s0, %s441
      %s443 = smul.u32 64, %s27
      %s444 = smul.u32 64, %s27
      %p445 = scmp.lt.s32.totalorder %s26, 1
      %s446 = scalar_select %p445, %s26, 1
      %p447 = scmp.lt.s32.totalorder %s444, 127
      %s448 = scalar_select %p447, %s444, 127
      %s449 = smul.addr %s446, 128
      %s450 = sadd.s32 %s448, %s449
      %s451 = smul.addr %s450, 4
      %s452 = scalar_lea.vmem %s1, %s451
      %s453 = smul.u32 64, %s27
      %p454 = scmp.lt.s32.totalorder %s26, 1
      %s455 = scalar_select %p454, %s26, 1
      %s456 = smul.addr %s455, 2
      %s457 = smul.addr %s456, 2
      %s458 = scalar_lea.vmem %s2, %s457
      %s459 = smul.u32 64, %s27
      %p460 = scmp.lt.s32.totalorder %s26, 1
      %s461 = scalar_select %p460, %s26, 1
      %p462 = scmp.lt.s32.totalorder %s459, 127
      %s463 = scalar_select %p462, %s459, 127
      %s464 = smul.addr %s461, 128
      %s465 = sadd.s32 %s463, %s464
      %s466 = smul.addr %s465, 8
      %s467 = scalar_lea.vmem %s9, %s466
      %s468 = smul.u32 64, %s27
      %s469 = smul.u32 64, %s27
      %p470 = scmp.lt.s32.totalorder %s26, 1
      %s471 = scalar_select %p470, %s26, 1
      %p472 = scmp.lt.s32.totalorder %s469, 127
      %s473 = scalar_select %p472, %s469, 127
      %s474 = smul.addr %s471, 128
      %s475 = sadd.s32 %s473, %s474
      %s476 = smul.addr %s475, 8
      %s477 = scalar_lea.vmem %s10, %s476
      %s478 = smul.u32 64, %s27
      %v480 = vld [vmem:[%s442] sm:$0xf]
      %v481 = vld [vmem:[%s442 + $0x4] sm:$0xf]
      %v482 = vld [vmem:[%s442 + $0x8] sm:$0xf]
      %v483 = vld [vmem:[%s442 + $0xc] sm:$0xf]
      %v484 = vld [vmem:[%s442 + $0x10] sm:$0xf]
      %v485 = vld [vmem:[%s442 + $0x14] sm:$0xf]
      %v486 = vld [vmem:[%s442 + $0x18] sm:$0xf]
      %v487 = vld [vmem:[%s442 + $0x1c] sm:$0xf]
      %v488 = vld [vmem:[%s442 + $0x20] sm:$0xf]
      %v489 = vld [vmem:[%s442 + $0x24] sm:$0xf]
      %v490 = vld [vmem:[%s442 + $0x28] sm:$0xf]
      %v491 = vld [vmem:[%s442 + $0x2c] sm:$0xf]
      %v492 = vld [vmem:[%s442 + $0x30] sm:$0xf]
      %v493 = vld [vmem:[%s442 + $0x34] sm:$0xf]
      %v494 = vld [vmem:[%s442 + $0x38] sm:$0xf]
      %v495 = vld [vmem:[%s442 + $0x3c] sm:$0xf]
      %v496 = vld [vmem:[%s442 + $0x40] sm:$0xf]
      %v497 = vld [vmem:[%s442 + $0x44] sm:$0xf]
      %v498 = vld [vmem:[%s442 + $0x48] sm:$0xf]
      %v499 = vld [vmem:[%s442 + $0x4c] sm:$0xf]
      %v500 = vld [vmem:[%s442 + $0x50] sm:$0xf]
      %v501 = vld [vmem:[%s442 + $0x54] sm:$0xf]
      %v502 = vld [vmem:[%s442 + $0x58] sm:$0xf]
      %v503 = vld [vmem:[%s442 + $0x5c] sm:$0xf]
      %v504 = vld [vmem:[%s442 + $0x60] sm:$0xf]
      %v505 = vld [vmem:[%s442 + $0x64] sm:$0xf]
      %v506 = vld [vmem:[%s442 + $0x68] sm:$0xf]
      %v507 = vld [vmem:[%s442 + $0x6c] sm:$0xf]
      %v508 = vld [vmem:[%s442 + $0x70] sm:$0xf]
      %v509 = vld [vmem:[%s442 + $0x74] sm:$0xf]
      %v510 = vld [vmem:[%s442 + $0x78] sm:$0xf]
      %v511 = vld [vmem:[%s442 + $0x7c] sm:$0xf]
      %v512 = vld [vmem:[%s442 + $0x80] sm:$0xf]
      %v513 = vld [vmem:[%s442 + $0x84] sm:$0xf]
      %v514 = vld [vmem:[%s442 + $0x88] sm:$0xf]
      %v515 = vld [vmem:[%s442 + $0x8c] sm:$0xf]
      %v516 = vld [vmem:[%s442 + $0x90] sm:$0xf]
      %v517 = vld [vmem:[%s442 + $0x94] sm:$0xf]
      %v518 = vld [vmem:[%s442 + $0x98] sm:$0xf]
      %v519 = vld [vmem:[%s442 + $0x9c] sm:$0xf]
      %v520 = vld [vmem:[%s442 + $0xa0] sm:$0xf]
      %v521 = vld [vmem:[%s442 + $0xa4] sm:$0xf]
      %v522 = vld [vmem:[%s442 + $0xa8] sm:$0xf]
      %v523 = vld [vmem:[%s442 + $0xac] sm:$0xf]
      %v524 = vld [vmem:[%s442 + $0xb0] sm:$0xf]
      %v525 = vld [vmem:[%s442 + $0xb4] sm:$0xf]
      %v526 = vld [vmem:[%s442 + $0xb8] sm:$0xf]
      %v527 = vld [vmem:[%s442 + $0xbc] sm:$0xf]
      %v528 = vld [vmem:[%s442 + $0xc0] sm:$0xf]
      %v529 = vld [vmem:[%s442 + $0xc4] sm:$0xf]
      %v530 = vld [vmem:[%s442 + $0xc8] sm:$0xf]
      %v531 = vld [vmem:[%s442 + $0xcc] sm:$0xf]
      %v532 = vld [vmem:[%s442 + $0xd0] sm:$0xf]
      %v533 = vld [vmem:[%s442 + $0xd4] sm:$0xf]
      %v534 = vld [vmem:[%s442 + $0xd8] sm:$0xf]
      %v535 = vld [vmem:[%s442 + $0xdc] sm:$0xf]
      %v536 = vld [vmem:[%s442 + $0xe0] sm:$0xf]
      %v537 = vld [vmem:[%s442 + $0xe4] sm:$0xf]
      %v538 = vld [vmem:[%s442 + $0xe8] sm:$0xf]
      %v539 = vld [vmem:[%s442 + $0xec] sm:$0xf]
      %v540 = vld [vmem:[%s442 + $0xf0] sm:$0xf]
      %v541 = vld [vmem:[%s442 + $0xf4] sm:$0xf]
      %v542 = vld [vmem:[%s442 + $0xf8] sm:$0xf]
      %v543 = vld [vmem:[%s442 + $0xfc] sm:$0xf]
      %v544 = vld [vmem:[%s452] sm:$0xf]
      %v545 = vld [vmem:[%s452 + $0x4] sm:$0xf]
      %v546 = vld [vmem:[%s452 + $0x8] sm:$0xf]
      %v547 = vld [vmem:[%s452 + $0xc] sm:$0xf]
      %v548 = vld [vmem:[%s452 + $0x10] sm:$0xf]
      %v549 = vld [vmem:[%s452 + $0x14] sm:$0xf]
      %v550 = vld [vmem:[%s452 + $0x18] sm:$0xf]
      %v551 = vld [vmem:[%s452 + $0x1c] sm:$0xf]
      %v552 = vld [vmem:[%s452 + $0x20] sm:$0xf]
      %v553 = vld [vmem:[%s452 + $0x24] sm:$0xf]
      %v554 = vld [vmem:[%s452 + $0x28] sm:$0xf]
      %v555 = vld [vmem:[%s452 + $0x2c] sm:$0xf]
      %v556 = vld [vmem:[%s452 + $0x30] sm:$0xf]
      %v557 = vld [vmem:[%s452 + $0x34] sm:$0xf]
      %v558 = vld [vmem:[%s452 + $0x38] sm:$0xf]
      %v559 = vld [vmem:[%s452 + $0x3c] sm:$0xf]
      %v560 = vld [vmem:[%s452 + $0x40] sm:$0xf]
      %v561 = vld [vmem:[%s452 + $0x44] sm:$0xf]
      %v562 = vld [vmem:[%s452 + $0x48] sm:$0xf]
      %v563 = vld [vmem:[%s452 + $0x4c] sm:$0xf]
      %v564 = vld [vmem:[%s452 + $0x50] sm:$0xf]
      %v565 = vld [vmem:[%s452 + $0x54] sm:$0xf]
      %v566 = vld [vmem:[%s452 + $0x58] sm:$0xf]
      %v567 = vld [vmem:[%s452 + $0x5c] sm:$0xf]
      %v568 = vld [vmem:[%s452 + $0x60] sm:$0xf]
      %v569 = vld [vmem:[%s452 + $0x64] sm:$0xf]
      %v570 = vld [vmem:[%s452 + $0x68] sm:$0xf]
      %v571 = vld [vmem:[%s452 + $0x6c] sm:$0xf]
      %v572 = vld [vmem:[%s452 + $0x70] sm:$0xf]
      %v573 = vld [vmem:[%s452 + $0x74] sm:$0xf]
      %v574 = vld [vmem:[%s452 + $0x78] sm:$0xf]
      %v575 = vld [vmem:[%s452 + $0x7c] sm:$0xf]
      %v576 = vld [vmem:[%s452 + $0x80] sm:$0xf]
      %v577 = vld [vmem:[%s452 + $0x84] sm:$0xf]
      %v578 = vld [vmem:[%s452 + $0x88] sm:$0xf]
      %v579 = vld [vmem:[%s452 + $0x8c] sm:$0xf]
      %v580 = vld [vmem:[%s452 + $0x90] sm:$0xf]
      %v581 = vld [vmem:[%s452 + $0x94] sm:$0xf]
      %v582 = vld [vmem:[%s452 + $0x98] sm:$0xf]
      %v583 = vld [vmem:[%s452 + $0x9c] sm:$0xf]
      %v584 = vld [vmem:[%s452 + $0xa0] sm:$0xf]
      %v585 = vld [vmem:[%s452 + $0xa4] sm:$0xf]
      %v586 = vld [vmem:[%s452 + $0xa8] sm:$0xf]
      %v587 = vld [vmem:[%s452 + $0xac] sm:$0xf]
      %v588 = vld [vmem:[%s452 + $0xb0] sm:$0xf]
      %v589 = vld [vmem:[%s452 + $0xb4] sm:$0xf]
      %v590 = vld [vmem:[%s452 + $0xb8] sm:$0xf]
      %v591 = vld [vmem:[%s452 + $0xbc] sm:$0xf]
      %v592 = vld [vmem:[%s452 + $0xc0] sm:$0xf]
      %v593 = vld [vmem:[%s452 + $0xc4] sm:$0xf]
      %v594 = vld [vmem:[%s452 + $0xc8] sm:$0xf]
      %v595 = vld [vmem:[%s452 + $0xcc] sm:$0xf]
      %v596 = vld [vmem:[%s452 + $0xd0] sm:$0xf]
      %v597 = vld [vmem:[%s452 + $0xd4] sm:$0xf]
      %v598 = vld [vmem:[%s452 + $0xd8] sm:$0xf]
      %v599 = vld [vmem:[%s452 + $0xdc] sm:$0xf]
      %v600 = vld [vmem:[%s452 + $0xe0] sm:$0xf]
      %v601 = vld [vmem:[%s452 + $0xe4] sm:$0xf]
      %v602 = vld [vmem:[%s452 + $0xe8] sm:$0xf]
      %v603 = vld [vmem:[%s452 + $0xec] sm:$0xf]
      %v604 = vld [vmem:[%s452 + $0xf0] sm:$0xf]
      %v605 = vld [vmem:[%s452 + $0xf4] sm:$0xf]
      %v606 = vld [vmem:[%s452 + $0xf8] sm:$0xf]
      %v607 = vld [vmem:[%s452 + $0xfc] sm:$0xf]
      %v608 = vld [vmem:[%s458] sm:$0xf]
      %v609 = vld [vmem:[%s5] sm:$0xf]
      %v610 = vld [vmem:[%s3] sm:$0xff]
      %v611 = vld [vmem:[%s3 + $0x8] sm:$0xff]
      %v612 = vld [vmem:[%s3 + $0x10] sm:$0xff]
      %v613 = vld [vmem:[%s3 + $0x18] sm:$0xff]
      %v614 = vld [vmem:[%s3 + $0x20] sm:$0xff]
      %v615 = vld [vmem:[%s3 + $0x28] sm:$0xff]
      %v616 = vld [vmem:[%s3 + $0x30] sm:$0xff]
      %v617 = vld [vmem:[%s3 + $0x38] sm:$0x33]
      %v619 = vlaneseq
      %v620 = vshrl.u32 %v619, 7
      %v621 = vsub.s32 0, %v620
      %v622 = vrot.slane %v608, %v621
      %v623 = vlaneseq
      %v624 = vshrl.u32 %v623, 7
      %v625 = vsub.s32 2, %v624
      %v626 = vrot.slane %v608, %v625
      %v629 = vlaneseq
      %v630 = vshrl.u32 %v629, 7
      %v631 = vsub.s32 0, %v630
      %v632 = vrot.slane %v622, %v631
      %v633 = vlaneseq
      %v634 = vshrl.u32 %v633, 7
      %v635 = vsub.s32 0, %v634
      %v636 = vrot.slane %v626, %v635
      %v701 = vunpack.c.l.b16 %v480
      %v702 = vunpack.c.l.b16 %v481
      %v703 = vunpack.c.l.b16 %v482
      %v704 = vunpack.c.l.b16 %v483
      %v705 = vunpack.c.l.b16 %v484
      %v706 = vunpack.c.l.b16 %v485
      %v707 = vunpack.c.l.b16 %v486
      %v708 = vunpack.c.l.b16 %v487
      %v709 = vunpack.c.l.b16 %v488
      %v710 = vunpack.c.l.b16 %v489
      %v711 = vunpack.c.l.b16 %v490
      %v712 = vunpack.c.l.b16 %v491
      %v713 = vunpack.c.l.b16 %v492
      %v714 = vunpack.c.l.b16 %v493
      %v715 = vunpack.c.l.b16 %v494
      %v716 = vunpack.c.l.b16 %v495
      %v717 = vunpack.c.l.b16 %v496
      %v718 = vunpack.c.l.b16 %v497
      %v719 = vunpack.c.l.b16 %v498
      %v720 = vunpack.c.l.b16 %v499
      %v721 = vunpack.c.l.b16 %v500
      %v722 = vunpack.c.l.b16 %v501
      %v723 = vunpack.c.l.b16 %v502
      %v724 = vunpack.c.l.b16 %v503
      %v725 = vunpack.c.l.b16 %v504
      %v726 = vunpack.c.l.b16 %v505
      %v727 = vunpack.c.l.b16 %v506
      %v728 = vunpack.c.l.b16 %v507
      %v729 = vunpack.c.l.b16 %v508
      %v730 = vunpack.c.l.b16 %v509
      %v731 = vunpack.c.l.b16 %v510
      %v732 = vunpack.c.l.b16 %v511
      %v733 = vunpack.c.l.b16 %v512
      %v734 = vunpack.c.l.b16 %v513
      %v735 = vunpack.c.l.b16 %v514
      %v736 = vunpack.c.l.b16 %v515
      %v737 = vunpack.c.l.b16 %v516
      %v738 = vunpack.c.l.b16 %v517
      %v739 = vunpack.c.l.b16 %v518
      %v740 = vunpack.c.l.b16 %v519
      %v741 = vunpack.c.l.b16 %v520
      %v742 = vunpack.c.l.b16 %v521
      %v743 = vunpack.c.l.b16 %v522
      %v744 = vunpack.c.l.b16 %v523
      %v745 = vunpack.c.l.b16 %v524
      %v746 = vunpack.c.l.b16 %v525
      %v747 = vunpack.c.l.b16 %v526
      %v748 = vunpack.c.l.b16 %v527
      %v749 = vunpack.c.l.b16 %v528
      %v750 = vunpack.c.l.b16 %v529
      %v751 = vunpack.c.l.b16 %v530
      %v752 = vunpack.c.l.b16 %v531
      %v753 = vunpack.c.l.b16 %v532
      %v754 = vunpack.c.l.b16 %v533
      %v755 = vunpack.c.l.b16 %v534
      %v756 = vunpack.c.l.b16 %v535
      %v757 = vunpack.c.l.b16 %v536
      %v758 = vunpack.c.l.b16 %v537
      %v759 = vunpack.c.l.b16 %v538
      %v760 = vunpack.c.l.b16 %v539
      %v761 = vunpack.c.l.b16 %v540
      %v762 = vunpack.c.l.b16 %v541
      %v763 = vunpack.c.l.b16 %v542
      %v764 = vunpack.c.l.b16 %v543
      %v765 = vpack.c.b16 %v702, %v701
      %v766 = vpack.c.b16 %v704, %v703
      %v767 = vpack.c.b16 %v706, %v705
      %v768 = vpack.c.b16 %v708, %v707
      %v769 = vpack.c.b16 %v710, %v709
      %v770 = vpack.c.b16 %v712, %v711
      %v771 = vpack.c.b16 %v714, %v713
      %v772 = vpack.c.b16 %v716, %v715
      %v773 = vpack.c.b16 %v718, %v717
      %v774 = vpack.c.b16 %v720, %v719
      %v775 = vpack.c.b16 %v722, %v721
      %v776 = vpack.c.b16 %v724, %v723
      %v777 = vpack.c.b16 %v726, %v725
      %v778 = vpack.c.b16 %v728, %v727
      %v779 = vpack.c.b16 %v730, %v729
      %v780 = vpack.c.b16 %v732, %v731
      %v781 = vpack.c.b16 %v734, %v733
      %v782 = vpack.c.b16 %v736, %v735
      %v783 = vpack.c.b16 %v738, %v737
      %v784 = vpack.c.b16 %v740, %v739
      %v785 = vpack.c.b16 %v742, %v741
      %v786 = vpack.c.b16 %v744, %v743
      %v787 = vpack.c.b16 %v746, %v745
      %v788 = vpack.c.b16 %v748, %v747
      %v789 = vpack.c.b16 %v750, %v749
      %v790 = vpack.c.b16 %v752, %v751
      %v791 = vpack.c.b16 %v754, %v753
      %v792 = vpack.c.b16 %v756, %v755
      %v793 = vpack.c.b16 %v758, %v757
      %v794 = vpack.c.b16 %v760, %v759
      %v795 = vpack.c.b16 %v762, %v761
      %v796 = vpack.c.b16 %v764, %v763
      %v805 = vunpack.c.l.b16 %v610
      %v806 = vunpack.c.h.b16 %v610
      %v807 = vunpack.c.l.b16 %v611
      %v808 = vunpack.c.h.b16 %v611
      %v809 = vunpack.c.l.b16 %v612
      %v810 = vunpack.c.h.b16 %v612
      %v811 = vunpack.c.l.b16 %v613
      %v812 = vunpack.c.h.b16 %v613
      %v813 = vunpack.c.l.b16 %v614
      %v814 = vunpack.c.h.b16 %v614
      %v815 = vunpack.c.l.b16 %v615
      %v816 = vunpack.c.h.b16 %v615
      %v817 = vunpack.c.l.b16 %v616
      %v818 = vunpack.c.h.b16 %v616
      %v819 = vunpack.c.l.b16 %v617
      %v820 = vunpack.c.h.b16 %v617
      %v821 = vpack.c.b16 %v807, %v805
      %v822 = vpack.c.b16 %v808, %v806
      %v823 = vpack.c.b16 %v811, %v809
      %v824 = vpack.c.b16 %v812, %v810
      %v825 = vpack.c.b16 %v815, %v813
      %v826 = vpack.c.b16 %v816, %v814
      %v827 = vpack.c.b16 %v819, %v817
      %v828 = vpack.c.b16 %v820, %v818
      %vm835 = vcmask 490496
      %v837 = vsel %vm835, %v765, 0
      %v840 = vsel %vm835, %v766, 0
      %v843 = vsel %vm835, %v767, 0
      %v846 = vsel %vm835, %v768, 0
      %v849 = vsel %vm835, %v769, 0
      %v852 = vsel %vm835, %v770, 0
      %v855 = vsel %vm835, %v771, 0
      %v858 = vsel %vm835, %v772, 0
      %v861 = vsel %vm835, %v773, 0
      %v864 = vsel %vm835, %v774, 0
      %v867 = vsel %vm835, %v775, 0
      %v870 = vsel %vm835, %v776, 0
      %v873 = vsel %vm835, %v777, 0
      %v876 = vsel %vm835, %v778, 0
      %v879 = vsel %vm835, %v779, 0
      %v882 = vsel %vm835, %v780, 0
      %v885 = vsel %vm835, %v781, 0
      %v888 = vsel %vm835, %v782, 0
      %v891 = vsel %vm835, %v783, 0
      %v894 = vsel %vm835, %v784, 0
      %v897 = vsel %vm835, %v785, 0
      %v900 = vsel %vm835, %v786, 0
      %v903 = vsel %vm835, %v787, 0
      %v906 = vsel %vm835, %v788, 0
      %v909 = vsel %vm835, %v789, 0
      %v912 = vsel %vm835, %v790, 0
      %v915 = vsel %vm835, %v791, 0
      %v918 = vsel %vm835, %v792, 0
      %v921 = vsel %vm835, %v793, 0
      %v924 = vsel %vm835, %v794, 0
      %v927 = vsel %vm835, %v795, 0
      %v930 = vsel %vm835, %v796, 0
      %vm932 = vcmask 1045504
      %v934 = vsel %vm932, %v827, 0
      %v937 = vsel %vm932, %v828, 0
      %939 = vmatprep.subr.bf16.mxu0 %v822
      %940 = vmatpush1.bf16.msra.mxu0 %v821
      %941 = vmatprep.subr.bf16.mxu0 %v824
      %942 = vmatpush1.bf16.msra.mxu0 %v823
      %943 = vmatprep.subr.bf16.mxu0 %v826
      %944 = vmatpush1.bf16.msra.mxu0 %v825
      %945 = vmatprep.subr.bf16.mxu0 %v937
      %946 = vmatpush1.bf16.msra.mxu0 %v934
      %947 = vmatprep.subr.bf16.mxu0 0
      %948 = vmatpush1.bf16.msra.mxu0 0
      %949 = vmatprep.subr.bf16.mxu0 0
      %950 = vmatpush1.bf16.msra.mxu0 0
      %951 = vmatprep.subr.bf16.mxu0 0
      %952 = vmatpush1.bf16.msra.mxu0 0
      %953 = vmatprep.subr.bf16.mxu0 0
      %954 = vmatpush1.bf16.msra.mxu0 0
      %955 = vmatprep.subr.bf16.mxu0 0
      %956 = vmatpush1.bf16.msra.mxu0 0
      %957 = vmatprep.subr.bf16.mxu0 0
      %958 = vmatpush1.bf16.msra.mxu0 0
      %959 = vmatprep.subr.bf16.mxu0 0
      %960 = vmatpush1.bf16.msra.mxu0 0
      %961 = vmatprep.subr.bf16.mxu0 0
      %962 = vmatpush1.bf16.msra.mxu0 0
      %963 = vmatprep.subr.bf16.mxu0 0
      %964 = vmatpush1.bf16.msra.mxu0 0
      %965 = vmatprep.subr.bf16.mxu0 0
      %966 = vmatpush1.bf16.msra.mxu0 0
      %967 = vmatprep.subr.bf16.mxu0 0
      %968 = vmatpush1.bf16.msra.mxu0 0
      %969 = vmatprep.subr.bf16.mxu0 0
      %970 = vmatpush1.bf16.msra.mxu0 0
      %971 = vmatprep.mubr.bf16.mxu0 0
      %972 = vmatmul.mubr.bf16.gmra.mrb[0].mxu0 %v837
      %v973 = vpop.f32.mrb[0].mxu0
      %v974 = vadd.f32 %v632, %v973
      %v975 = vpop.f32.mrb[0].mxu0
      %v976 = vadd.f32 %v636, %v975
      %v977 = vpop.f32.mrb[0].mxu0
      %v978 = vadd.f32 %v632, %v977
      %v979 = vpop.f32.mrb[0].mxu0
      %v980 = vadd.f32 %v636, %v979
      %981 = vmatprep.mubr.bf16.mxu0 0
      %982 = vmatmul.mubr.bf16.gmra.mrb[0].mxu0 %v840
      %v983 = vpop.f32.mrb[0].mxu0
      %v984 = vadd.f32 %v632, %v983
      %v985 = vpop.f32.mrb[0].mxu0
      %v986 = vadd.f32 %v636, %v985
      %v987 = vpop.f32.mrb[0].mxu0
      %v988 = vadd.f32 %v632, %v987
      %v989 = vpop.f32.mrb[0].mxu0
      %v990 = vadd.f32 %v636, %v989
      %991 = vmatprep.mubr.bf16.mxu0 0
      %992 = vmatmul.mubr.bf16.gmra.mrb[0].mxu0 %v843
      %v993 = vpop.f32.mrb[0].mxu0
      %v994 = vadd.f32 %v632, %v993
      %v995 = vpop.f32.mrb[0].mxu0
      %v996 = vadd.f32 %v636, %v995
      %v997 = vpop.f32.mrb[0].mxu0
      %v998 = vadd.f32 %v632, %v997
      %v999 = vpop.f32.mrb[0].mxu0
      %v1000 = vadd.f32 %v636, %v999
      %1001 = vmatprep.mubr.bf16.mxu0 0
      %1002 = vmatmul.mubr.bf16.gmra.mrb[0].mxu0 %v846
      %v1003 = vpop.f32.mrb[0].mxu0
      %v1004 = vadd.f32 %v632, %v1003
      %v1005 = vpop.f32.mrb[0].mxu0
      %v1006 = vadd.f32 %v636, %v1005
      %v1007 = vpop.f32.mrb[0].mxu0
      %v1008 = vadd.f32 %v632, %v1007
      %v1009 = vpop.f32.mrb[0].mxu0
      %v1010 = vadd.f32 %v636, %v1009
      %1011 = vmatprep.mubr.bf16.mxu0 0
      %1012 = vmatmul.mubr.bf16.gmra.mrb[0].mxu0 %v849
      %v1013 = vpop.f32.mrb[0].mxu0
      %v1014 = vadd.f32 %v632, %v1013
      %v1015 = vpop.f32.mrb[0].mxu0
      %v1016 = vadd.f32 %v636, %v1015
      %v1017 = vpop.f32.mrb[0].mxu0
      %v1018 = vadd.f32 %v632, %v1017
      %v1019 = vpop.f32.mrb[0].mxu0
      %v1020 = vadd.f32 %v636, %v1019
      %1021 = vmatprep.mubr.bf16.mxu0 0
      %1022 = vmatmul.mubr.bf16.gmra.mrb[0].mxu0 %v852
      %v1023 = vpop.f32.mrb[0].mxu0
      %v1024 = vadd.f32 %v632, %v1023
      %v1025 = vpop.f32.mrb[0].mxu0
      %v1026 = vadd.f32 %v636, %v1025
      %v1027 = vpop.f32.mrb[0].mxu0
      %v1028 = vadd.f32 %v632, %v1027
      %v1029 = vpop.f32.mrb[0].mxu0
      %v1030 = vadd.f32 %v636, %v1029
      %1031 = vmatprep.mubr.bf16.mxu0 0
      %1032 = vmatmul.mubr.bf16.gmra.mrb[0].mxu0 %v855
      %v1033 = vpop.f32.mrb[0].mxu0
      %v1034 = vadd.f32 %v632, %v1033
      %v1035 = vpop.f32.mrb[0].mxu0
      %v1036 = vadd.f32 %v636, %v1035
      %v1037 = vpop.f32.mrb[0].mxu0
      %v1038 = vadd.f32 %v632, %v1037
      %v1039 = vpop.f32.mrb[0].mxu0
      %v1040 = vadd.f32 %v636, %v1039
      %1041 = vmatprep.mubr.bf16.mxu0 0
      %1042 = vmatmul.mubr.bf16.gmra.mrb[0].mxu0 %v858
      %v1043 = vpop.f32.mrb[0].mxu0
      %v1044 = vadd.f32 %v632, %v1043
      %v1045 = vpop.f32.mrb[0].mxu0
      %v1046 = vadd.f32 %v636, %v1045
      %v1047 = vpop.f32.mrb[0].mxu0
      %v1048 = vadd.f32 %v632, %v1047
      %v1049 = vpop.f32.mrb[0].mxu0
      %v1050 = vadd.f32 %v636, %v1049
      %1051 = vmatprep.mubr.bf16.mxu0 0
      %1052 = vmatmul.mubr.bf16.gmra.mrb[0].mxu0 %v861
      %v1053 = vpop.f32.mrb[0].mxu0
      %v1054 = vadd.f32 %v632, %v1053
      %v1055 = vpop.f32.mrb[0].mxu0
      %v1056 = vadd.f32 %v636, %v1055
      %v1057 = vpop.f32.mrb[0].mxu0
      %v1058 = vadd.f32 %v632, %v1057
      %v1059 = vpop.f32.mrb[0].mxu0
      %v1060 = vadd.f32 %v636, %v1059
      %1061 = vmatprep.mubr.bf16.mxu0 0
      %1062 = vmatmul.mubr.bf16.gmra.mrb[0].mxu0 %v864
      %v1063 = vpop.f32.mrb[0].mxu0
      %v1064 = vadd.f32 %v632, %v1063
      %v1065 = vpop.f32.mrb[0].mxu0
      %v1066 = vadd.f32 %v636, %v1065
      %v1067 = vpop.f32.mrb[0].mxu0
      %v1068 = vadd.f32 %v632, %v1067
      %v1069 = vpop.f32.mrb[0].mxu0
      %v1070 = vadd.f32 %v636, %v1069
      %1071 = vmatprep.mubr.bf16.mxu0 0
      %1072 = vmatmul.mubr.bf16.gmra.mrb[0].mxu0 %v867
      %v1073 = vpop.f32.mrb[0].mxu0
      %v1074 = vadd.f32 %v632, %v1073
      %v1075 = vpop.f32.mrb[0].mxu0
      %v1076 = vadd.f32 %v636, %v1075
      %v1077 = vpop.f32.mrb[0].mxu0
      %v1078 = vadd.f32 %v632, %v1077
      %v1079 = vpop.f32.mrb[0].mxu0
      %v1080 = vadd.f32 %v636, %v1079
      %1081 = vmatprep.mubr.bf16.mxu0 0
      %1082 = vmatmul.mubr.bf16.gmra.mrb[0].mxu0 %v870
      %v1083 = vpop.f32.mrb[0].mxu0
      %v1084 = vadd.f32 %v632, %v1083
      %v1085 = vpop.f32.mrb[0].mxu0
      %v1086 = vadd.f32 %v636, %v1085
      %v1087 = vpop.f32.mrb[0].mxu0
      %v1088 = vadd.f32 %v632, %v1087
      %v1089 = vpop.f32.mrb[0].mxu0
      %v1090 = vadd.f32 %v636, %v1089
      %1091 = vmatprep.mubr.bf16.mxu0 0
      %1092 = vmatmul.mubr.bf16.gmra.mrb[0].mxu0 %v873
      %v1093 = vpop.f32.mrb[0].mxu0
      %v1094 = vadd.f32 %v632, %v1093
      %v1095 = vpop.f32.mrb[0].mxu0
      %v1096 = vadd.f32 %v636, %v1095
      %v1097 = vpop.f32.mrb[0].mxu0
      %v1098 = vadd.f32 %v632, %v1097
      %v1099 = vpop.f32.mrb[0].mxu0
      %v1100 = vadd.f32 %v636, %v1099
      %1101 = vmatprep.mubr.bf16.mxu0 0
      %1102 = vmatmul.mubr.bf16.gmra.mrb[0].mxu0 %v876
      %v1103 = vpop.f32.mrb[0].mxu0
      %v1104 = vadd.f32 %v632, %v1103
      %v1105 = vpop.f32.mrb[0].mxu0
      %v1106 = vadd.f32 %v636, %v1105
      %v1107 = vpop.f32.mrb[0].mxu0
      %v1108 = vadd.f32 %v632, %v1107
      %v1109 = vpop.f32.mrb[0].mxu0
      %v1110 = vadd.f32 %v636, %v1109
      %1111 = vmatprep.mubr.bf16.mxu0 0
      %1112 = vmatmul.mubr.bf16.gmra.mrb[0].mxu0 %v879
      %v1113 = vpop.f32.mrb[0].mxu0
      %v1114 = vadd.f32 %v632, %v1113
      %v1115 = vpop.f32.mrb[0].mxu0
      %v1116 = vadd.f32 %v636, %v1115
      %v1117 = vpop.f32.mrb[0].mxu0
      %v1118 = vadd.f32 %v632, %v1117
      %v1119 = vpop.f32.mrb[0].mxu0
      %v1120 = vadd.f32 %v636, %v1119
      %1121 = vmatprep.mubr.bf16.mxu0 0
      %1122 = vmatmul.mubr.bf16.gmra.mrb[0].mxu0 %v882
      %v1123 = vpop.f32.mrb[0].mxu0
      %v1124 = vadd.f32 %v632, %v1123
      %v1125 = vpop.f32.mrb[0].mxu0
      %v1126 = vadd.f32 %v636, %v1125
      %v1127 = vpop.f32.mrb[0].mxu0
      %v1128 = vadd.f32 %v632, %v1127
      %v1129 = vpop.f32.mrb[0].mxu0
      %v1130 = vadd.f32 %v636, %v1129
      %1131 = vmatprep.mubr.bf16.mxu0 0
      %1132 = vmatmul.mubr.bf16.gmra.mrb[0].mxu0 %v885
      %v1133 = vpop.f32.mrb[0].mxu0
      %v1134 = vadd.f32 %v632, %v1133
      %v1135 = vpop.f32.mrb[0].mxu0
      %v1136 = vadd.f32 %v636, %v1135
      %v1137 = vpop.f32.mrb[0].mxu0
      %v1138 = vadd.f32 %v632, %v1137
      %v1139 = vpop.f32.mrb[0].mxu0
      %v1140 = vadd.f32 %v636, %v1139
      %1141 = vmatprep.mubr.bf16.mxu0 0
      %1142 = vmatmul.mubr.bf16.gmra.mrb[0].mxu0 %v888
      %v1143 = vpop.f32.mrb[0].mxu0
      %v1144 = vadd.f32 %v632, %v1143
      %v1145 = vpop.f32.mrb[0].mxu0
      %v1146 = vadd.f32 %v636, %v1145
      %v1147 = vpop.f32.mrb[0].mxu0
      %v1148 = vadd.f32 %v632, %v1147
      %v1149 = vpop.f32.mrb[0].mxu0
      %v1150 = vadd.f32 %v636, %v1149
      %1151 = vmatprep.mubr.bf16.mxu0 0
      %1152 = vmatmul.mubr.bf16.gmra.mrb[0].mxu0 %v891
      %v1153 = vpop.f32.mrb[0].mxu0
      %v1154 = vadd.f32 %v632, %v1153
      %v1155 = vpop.f32.mrb[0].mxu0
      %v1156 = vadd.f32 %v636, %v1155
      %v1157 = vpop.f32.mrb[0].mxu0
      %v1158 = vadd.f32 %v632, %v1157
      %v1159 = vpop.f32.mrb[0].mxu0
      %v1160 = vadd.f32 %v636, %v1159
      %1161 = vmatprep.mubr.bf16.mxu0 0
      %1162 = vmatmul.mubr.bf16.gmra.mrb[0].mxu0 %v894
      %v1163 = vpop.f32.mrb[0].mxu0
      %v1164 = vadd.f32 %v632, %v1163
      %v1165 = vpop.f32.mrb[0].mxu0
      %v1166 = vadd.f32 %v636, %v1165
      %v1167 = vpop.f32.mrb[0].mxu0
      %v1168 = vadd.f32 %v632, %v1167
      %v1169 = vpop.f32.mrb[0].mxu0
      %v1170 = vadd.f32 %v636, %v1169
      %1171 = vmatprep.mubr.bf16.mxu0 0
      %1172 = vmatmul.mubr.bf16.gmra.mrb[0].mxu0 %v897
      %v1173 = vpop.f32.mrb[0].mxu0
      %v1174 = vadd.f32 %v632, %v1173
      %v1175 = vpop.f32.mrb[0].mxu0
      %v1176 = vadd.f32 %v636, %v1175
      %v1177 = vpop.f32.mrb[0].mxu0
      %v1178 = vadd.f32 %v632, %v1177
      %v1179 = vpop.f32.mrb[0].mxu0
      %v1180 = vadd.f32 %v636, %v1179
      %1181 = vmatprep.mubr.bf16.mxu0 0
      %1182 = vmatmul.mubr.bf16.gmra.mrb[0].mxu0 %v900
      %v1183 = vpop.f32.mrb[0].mxu0
      %v1184 = vadd.f32 %v632, %v1183
      %v1185 = vpop.f32.mrb[0].mxu0
      %v1186 = vadd.f32 %v636, %v1185
      %v1187 = vpop.f32.mrb[0].mxu0
      %v1188 = vadd.f32 %v632, %v1187
      %v1189 = vpop.f32.mrb[0].mxu0
      %v1190 = vadd.f32 %v636, %v1189
      %1191 = vmatprep.mubr.bf16.mxu0 0
      %1192 = vmatmul.mubr.bf16.gmra.mrb[0].mxu0 %v903
      %v1193 = vpop.f32.mrb[0].mxu0
      %v1194 = vadd.f32 %v632, %v1193
      %v1195 = vpop.f32.mrb[0].mxu0
      %v1196 = vadd.f32 %v636, %v1195
      %v1197 = vpop.f32.mrb[0].mxu0
      %v1198 = vadd.f32 %v632, %v1197
      %v1199 = vpop.f32.mrb[0].mxu0
      %v1200 = vadd.f32 %v636, %v1199
      %1201 = vmatprep.mubr.bf16.mxu0 0
      %1202 = vmatmul.mubr.bf16.gmra.mrb[0].mxu0 %v906
      %v1203 = vpop.f32.mrb[0].mxu0
      %v1204 = vadd.f32 %v632, %v1203
      %v1205 = vpop.f32.mrb[0].mxu0
      %v1206 = vadd.f32 %v636, %v1205
      %v1207 = vpop.f32.mrb[0].mxu0
      %v1208 = vadd.f32 %v632, %v1207
      %v1209 = vpop.f32.mrb[0].mxu0
      %v1210 = vadd.f32 %v636, %v1209
      %1211 = vmatprep.mubr.bf16.mxu0 0
      %1212 = vmatmul.mubr.bf16.gmra.mrb[0].mxu0 %v909
      %v1213 = vpop.f32.mrb[0].mxu0
      %v1214 = vadd.f32 %v632, %v1213
      %v1215 = vpop.f32.mrb[0].mxu0
      %v1216 = vadd.f32 %v636, %v1215
      %v1217 = vpop.f32.mrb[0].mxu0
      %v1218 = vadd.f32 %v632, %v1217
      %v1219 = vpop.f32.mrb[0].mxu0
      %v1220 = vadd.f32 %v636, %v1219
      %1221 = vmatprep.mubr.bf16.mxu0 0
      %1222 = vmatmul.mubr.bf16.gmra.mrb[0].mxu0 %v912
      %v1223 = vpop.f32.mrb[0].mxu0
      %v1224 = vadd.f32 %v632, %v1223
      %v1225 = vpop.f32.mrb[0].mxu0
      %v1226 = vadd.f32 %v636, %v1225
      %v1227 = vpop.f32.mrb[0].mxu0
      %v1228 = vadd.f32 %v632, %v1227
      %v1229 = vpop.f32.mrb[0].mxu0
      %v1230 = vadd.f32 %v636, %v1229
      %1231 = vmatprep.mubr.bf16.mxu0 0
      %1232 = vmatmul.mubr.bf16.gmra.mrb[0].mxu0 %v915
      %v1233 = vpop.f32.mrb[0].mxu0
      %v1234 = vadd.f32 %v632, %v1233
      %v1235 = vpop.f32.mrb[0].mxu0
      %v1236 = vadd.f32 %v636, %v1235
      %v1237 = vpop.f32.mrb[0].mxu0
      %v1238 = vadd.f32 %v632, %v1237
      %v1239 = vpop.f32.mrb[0].mxu0
      %v1240 = vadd.f32 %v636, %v1239
      %1241 = vmatprep.mubr.bf16.mxu0 0
      %1242 = vmatmul.mubr.bf16.gmra.mrb[0].mxu0 %v918
      %v1243 = vpop.f32.mrb[0].mxu0
      %v1244 = vadd.f32 %v632, %v1243
      %v1245 = vpop.f32.mrb[0].mxu0
      %v1246 = vadd.f32 %v636, %v1245
      %v1247 = vpop.f32.mrb[0].mxu0
      %v1248 = vadd.f32 %v632, %v1247
      %v1249 = vpop.f32.mrb[0].mxu0
      %v1250 = vadd.f32 %v636, %v1249
      %1251 = vmatprep.mubr.bf16.mxu0 0
      %1252 = vmatmul.mubr.bf16.gmra.mrb[0].mxu0 %v921
      %v1253 = vpop.f32.mrb[0].mxu0
      %v1254 = vadd.f32 %v632, %v1253
      %v1255 = vpop.f32.mrb[0].mxu0
      %v1256 = vadd.f32 %v636, %v1255
      %v1257 = vpop.f32.mrb[0].mxu0
      %v1258 = vadd.f32 %v632, %v1257
      %v1259 = vpop.f32.mrb[0].mxu0
      %v1260 = vadd.f32 %v636, %v1259
      %1261 = vmatprep.mubr.bf16.mxu0 0
      %1262 = vmatmul.mubr.bf16.gmra.mrb[0].mxu0 %v924
      %v1263 = vpop.f32.mrb[0].mxu0
      %v1264 = vadd.f32 %v632, %v1263
      %v1265 = vpop.f32.mrb[0].mxu0
      %v1266 = vadd.f32 %v636, %v1265
      %v1267 = vpop.f32.mrb[0].mxu0
      %v1268 = vadd.f32 %v632, %v1267
      %v1269 = vpop.f32.mrb[0].mxu0
      %v1270 = vadd.f32 %v636, %v1269
      %1271 = vmatprep.mubr.bf16.mxu0 0
      %1272 = vmatmul.mubr.bf16.gmra.mrb[0].mxu0 %v927
      %v1273 = vpop.f32.mrb[0].mxu0
      %v1274 = vadd.f32 %v632, %v1273
      %v1275 = vpop.f32.mrb[0].mxu0
      %v1276 = vadd.f32 %v636, %v1275
      %v1277 = vpop.f32.mrb[0].mxu0
      %v1278 = vadd.f32 %v632, %v1277
      %v1279 = vpop.f32.mrb[0].mxu0
      %v1280 = vadd.f32 %v636, %v1279
      %1281 = vmatprep.mubr.bf16.mxu0 0
      %1282 = vmatmul.mubr.bf16.gmra.mrb[0].mxu0 %v930
      %v1283 = vpop.f32.mrb[0].mxu0
      %v1284 = vadd.f32 %v632, %v1283
      %v1285 = vpop.f32.mrb[0].mxu0
      %v1286 = vadd.f32 %v636, %v1285
      %v1287 = vpop.f32.mrb[0].mxu0
      %v1288 = vadd.f32 %v632, %v1287
      %v1289 = vpop.f32.mrb[0].mxu0
      %v1290 = vadd.f32 %v636, %v1289
      %1291 = vdwg.mxu0
      %v1292 = vmax.f32 %v974, 0.0
      %v1293 = vmax.f32 %v978, 0.0
      %v1294 = vmax.f32 %v984, 0.0
      %v1295 = vmax.f32 %v988, 0.0
      %v1296 = vmax.f32 %v994, 0.0
      %v1297 = vmax.f32 %v998, 0.0
      %v1298 = vmax.f32 %v1004, 0.0
      %v1299 = vmax.f32 %v1008, 0.0
      %v1300 = vmax.f32 %v1014, 0.0
      %v1301 = vmax.f32 %v1018, 0.0
      %v1302 = vmax.f32 %v1024, 0.0
      %v1303 = vmax.f32 %v1028, 0.0
      %v1304 = vmax.f32 %v1034, 0.0
      %v1305 = vmax.f32 %v1038, 0.0
      %v1306 = vmax.f32 %v1044, 0.0
      %v1307 = vmax.f32 %v1048, 0.0
      %v1308 = vmax.f32 %v1054, 0.0
      %v1309 = vmax.f32 %v1058, 0.0
      %v1310 = vmax.f32 %v1064, 0.0
      %v1311 = vmax.f32 %v1068, 0.0
      %v1312 = vmax.f32 %v1074, 0.0
      %v1313 = vmax.f32 %v1078, 0.0
      %v1314 = vmax.f32 %v1084, 0.0
      %v1315 = vmax.f32 %v1088, 0.0
      %v1316 = vmax.f32 %v1094, 0.0
      %v1317 = vmax.f32 %v1098, 0.0
      %v1318 = vmax.f32 %v1104, 0.0
      %v1319 = vmax.f32 %v1108, 0.0
      %v1320 = vmax.f32 %v1114, 0.0
      %v1321 = vmax.f32 %v1118, 0.0
      %v1322 = vmax.f32 %v1124, 0.0
      %v1323 = vmax.f32 %v1128, 0.0
      %v1324 = vmax.f32 %v1134, 0.0
      %v1325 = vmax.f32 %v1138, 0.0
      %v1326 = vmax.f32 %v1144, 0.0
      %v1327 = vmax.f32 %v1148, 0.0
      %v1328 = vmax.f32 %v1154, 0.0
      %v1329 = vmax.f32 %v1158, 0.0
      %v1330 = vmax.f32 %v1164, 0.0
      %v1331 = vmax.f32 %v1168, 0.0
      %v1332 = vmax.f32 %v1174, 0.0
      %v1333 = vmax.f32 %v1178, 0.0
      %v1334 = vmax.f32 %v1184, 0.0
      %v1335 = vmax.f32 %v1188, 0.0
      %v1336 = vmax.f32 %v1194, 0.0
      %v1337 = vmax.f32 %v1198, 0.0
      %v1338 = vmax.f32 %v1204, 0.0
      %v1339 = vmax.f32 %v1208, 0.0
      %v1340 = vmax.f32 %v1214, 0.0
      %v1341 = vmax.f32 %v1218, 0.0
      %v1342 = vmax.f32 %v1224, 0.0
      %v1343 = vmax.f32 %v1228, 0.0
      %v1344 = vmax.f32 %v1234, 0.0
      %v1345 = vmax.f32 %v1238, 0.0
      %v1346 = vmax.f32 %v1244, 0.0
      %v1347 = vmax.f32 %v1248, 0.0
      %v1348 = vmax.f32 %v1254, 0.0
      %v1349 = vmax.f32 %v1258, 0.0
      %v1350 = vmax.f32 %v1264, 0.0
      %v1351 = vmax.f32 %v1268, 0.0
      %v1352 = vmax.f32 %v1274, 0.0
      %v1353 = vmax.f32 %v1278, 0.0
      %v1354 = vmax.f32 %v1284, 0.0
      %v1355 = vmax.f32 %v1288, 0.0
      %v1356 = vpack.c.bf16 %v1293, %v1292
      %v1357 = vpack.c.bf16 %v1295, %v1294
      %v1358 = vpack.c.bf16 %v1297, %v1296
      %v1359 = vpack.c.bf16 %v1299, %v1298
      %v1360 = vpack.c.bf16 %v1301, %v1300
      %v1361 = vpack.c.bf16 %v1303, %v1302
      %v1362 = vpack.c.bf16 %v1305, %v1304
      %v1363 = vpack.c.bf16 %v1307, %v1306
      %v1364 = vpack.c.bf16 %v1309, %v1308
      %v1365 = vpack.c.bf16 %v1311, %v1310
      %v1366 = vpack.c.bf16 %v1313, %v1312
      %v1367 = vpack.c.bf16 %v1315, %v1314
      %v1368 = vpack.c.bf16 %v1317, %v1316
      %v1369 = vpack.c.bf16 %v1319, %v1318
      %v1370 = vpack.c.bf16 %v1321, %v1320
      %v1371 = vpack.c.bf16 %v1323, %v1322
      %v1372 = vpack.c.bf16 %v1325, %v1324
      %v1373 = vpack.c.bf16 %v1327, %v1326
      %v1374 = vpack.c.bf16 %v1329, %v1328
      %v1375 = vpack.c.bf16 %v1331, %v1330
      %v1376 = vpack.c.bf16 %v1333, %v1332
      %v1377 = vpack.c.bf16 %v1335, %v1334
      %v1378 = vpack.c.bf16 %v1337, %v1336
      %v1379 = vpack.c.bf16 %v1339, %v1338
      %v1380 = vpack.c.bf16 %v1341, %v1340
      %v1381 = vpack.c.bf16 %v1343, %v1342
      %v1382 = vpack.c.bf16 %v1345, %v1344
      %v1383 = vpack.c.bf16 %v1347, %v1346
      %v1384 = vpack.c.bf16 %v1349, %v1348
      %v1385 = vpack.c.bf16 %v1351, %v1350
      %v1386 = vpack.c.bf16 %v1353, %v1352
      %v1387 = vpack.c.bf16 %v1355, %v1354
      %v1388 = vld [vmem:[%s4] sm:$0xf]
      %v1389 = vld [vmem:[%s4 + $0x4] sm:$0xf]
      %v1390 = vld [vmem:[%s4 + $0x8] sm:$0xf]
      %v1391 = vld [vmem:[%s4 + $0xc] sm:$0xf]
      %v1392 = vld [vmem:[%s4 + $0x10] sm:$0xf]
      %v1393 = vld [vmem:[%s4 + $0x14] sm:$0xf]
      %v1394 = vld [vmem:[%s4 + $0x18] sm:$0xf]
      %v1395 = vld [vmem:[%s4 + $0x1c] sm:$0xf]
      %v1396 = vld [vmem:[%s4 + $0x20] sm:$0xf]
      %v1397 = vld [vmem:[%s4 + $0x24] sm:$0xf]
      %v1398 = vld [vmem:[%s4 + $0x28] sm:$0xf]
      %v1399 = vld [vmem:[%s4 + $0x2c] sm:$0xf]
      %v1400 = vld [vmem:[%s4 + $0x30] sm:$0xf]
      %v1401 = vld [vmem:[%s4 + $0x34] sm:$0xf]
      %v1402 = vld [vmem:[%s4 + $0x38] sm:$0xf]
      %v1403 = vld [vmem:[%s4 + $0x3c] sm:$0xf]
      %v1404 = vlaneseq
      %v1405 = vshrl.u32 %v1404, 7
      %v1406 = vsub.s32 0, %v1405
      %v1407 = vrot.slane %v609, %v1406
      %v1424 = vunpack.c.l.b16 %v1388
      %v1425 = vunpack.c.l.b16 %v1389
      %v1426 = vunpack.c.l.b16 %v1390
      %v1427 = vunpack.c.l.b16 %v1391
      %v1428 = vunpack.c.l.b16 %v1392
      %v1429 = vunpack.c.l.b16 %v1393
      %v1430 = vunpack.c.l.b16 %v1394
      %v1431 = vunpack.c.l.b16 %v1395
      %v1432 = vunpack.c.l.b16 %v1396
      %v1433 = vunpack.c.l.b16 %v1397
      %v1434 = vunpack.c.l.b16 %v1398
      %v1435 = vunpack.c.l.b16 %v1399
      %v1436 = vunpack.c.l.b16 %v1400
      %v1437 = vunpack.c.l.b16 %v1401
      %v1438 = vunpack.c.l.b16 %v1402
      %v1439 = vunpack.c.l.b16 %v1403
      %v1440 = vpack.c.b16 %v1425, %v1424
      %v1441 = vpack.c.b16 %v1427, %v1426
      %v1442 = vpack.c.b16 %v1429, %v1428
      %v1443 = vpack.c.b16 %v1431, %v1430
      %v1444 = vpack.c.b16 %v1433, %v1432
      %v1445 = vpack.c.b16 %v1435, %v1434
      %v1446 = vpack.c.b16 %v1437, %v1436
      %v1447 = vpack.c.b16 %v1439, %v1438
      %1456 = vmatprep.subr.bf16.mxu0 0
      %1457 = vmatpush1.bf16.msra.mxu0 %v1440
      %1458 = vmatprep.subr.bf16.mxu0 0
      %1459 = vmatpush1.bf16.msra.mxu0 %v1441
      %1460 = vmatprep.subr.bf16.mxu0 0
      %1461 = vmatpush1.bf16.msra.mxu0 %v1442
      %1462 = vmatprep.subr.bf16.mxu0 0
      %1463 = vmatpush1.bf16.msra.mxu0 %v1443
      %1464 = vmatprep.subr.bf16.mxu0 0
      %1465 = vmatpush1.bf16.msra.mxu0 %v1444
      %1466 = vmatprep.subr.bf16.mxu0 0
      %1467 = vmatpush1.bf16.msra.mxu0 %v1445
      %1468 = vmatprep.subr.bf16.mxu0 0
      %1469 = vmatpush1.bf16.msra.mxu0 %v1446
      %1470 = vmatprep.subr.bf16.mxu0 0
      %1471 = vmatpush1.bf16.msra.mxu0 %v1447
      %1472 = vmatprep.subr.bf16.mxu0 0
      %1473 = vmatpush1.bf16.msra.mxu0 0
      %1474 = vmatprep.subr.bf16.mxu0 0
      %1475 = vmatpush1.bf16.msra.mxu0 0
      %1476 = vmatprep.subr.bf16.mxu0 0
      %1477 = vmatpush1.bf16.msra.mxu0 0
      %1478 = vmatprep.subr.bf16.mxu0 0
      %1479 = vmatpush1.bf16.msra.mxu0 0
      %1480 = vmatprep.subr.bf16.mxu0 0
      %1481 = vmatpush1.bf16.msra.mxu0 0
      %1482 = vmatprep.subr.bf16.mxu0 0
      %1483 = vmatpush1.bf16.msra.mxu0 0
      %1484 = vmatprep.subr.bf16.mxu0 0
      %1485 = vmatpush1.bf16.msra.mxu0 0
      %1486 = vmatprep.subr.bf16.mxu0 0
      %1487 = vmatpush1.bf16.msra.mxu0 0
      %1488 = vmatprep.mubr.bf16.mxu0 0
      %1489 = vmatmul.mubr.bf16.gmra.mrb[0].mxu0 %v1356
      %v1490 = vpop.f32.mrb[0].mxu0
      %v1491 = vadd.f32 %v1407, %v1490
      %v1492 = vpop.f32.mrb[0].mxu0
      %v1493 = vpop.f32.mrb[0].mxu0
      %v1494 = vadd.f32 %v1407, %v1493
      %v1495 = vpop.f32.mrb[0].mxu0
      %1496 = vmatprep.mubr.bf16.mxu0 0
      %1497 = vmatmul.mubr.bf16.gmra.mrb[0].mxu0 %v1357
      %v1498 = vpop.f32.mrb[0].mxu0
      %v1499 = vadd.f32 %v1407, %v1498
      %v1500 = vpop.f32.mrb[0].mxu0
      %v1501 = vpop.f32.mrb[0].mxu0
      %v1502 = vadd.f32 %v1407, %v1501
      %v1503 = vpop.f32.mrb[0].mxu0
      %1504 = vmatprep.mubr.bf16.mxu0 0
      %1505 = vmatmul.mubr.bf16.gmra.mrb[0].mxu0 %v1358
      %v1506 = vpop.f32.mrb[0].mxu0
      %v1507 = vadd.f32 %v1407, %v1506
      %v1508 = vpop.f32.mrb[0].mxu0
      %v1509 = vpop.f32.mrb[0].mxu0
      %v1510 = vadd.f32 %v1407, %v1509
      %v1511 = vpop.f32.mrb[0].mxu0
      %1512 = vmatprep.mubr.bf16.mxu0 0
      %1513 = vmatmul.mubr.bf16.gmra.mrb[0].mxu0 %v1359
      %v1514 = vpop.f32.mrb[0].mxu0
      %v1515 = vadd.f32 %v1407, %v1514
      %v1516 = vpop.f32.mrb[0].mxu0
      %v1517 = vpop.f32.mrb[0].mxu0
      %v1518 = vadd.f32 %v1407, %v1517
      %v1519 = vpop.f32.mrb[0].mxu0
      %1520 = vmatprep.mubr.bf16.mxu0 0
      %1521 = vmatmul.mubr.bf16.gmra.mrb[0].mxu0 %v1360
      %v1522 = vpop.f32.mrb[0].mxu0
      %v1523 = vadd.f32 %v1407, %v1522
      %v1524 = vpop.f32.mrb[0].mxu0
      %v1525 = vpop.f32.mrb[0].mxu0
      %v1526 = vadd.f32 %v1407, %v1525
      %v1527 = vpop.f32.mrb[0].mxu0
      %1528 = vmatprep.mubr.bf16.mxu0 0
      %1529 = vmatmul.mubr.bf16.gmra.mrb[0].mxu0 %v1361
      %v1530 = vpop.f32.mrb[0].mxu0
      %v1531 = vadd.f32 %v1407, %v1530
      %v1532 = vpop.f32.mrb[0].mxu0
      %v1533 = vpop.f32.mrb[0].mxu0
      %v1534 = vadd.f32 %v1407, %v1533
      %v1535 = vpop.f32.mrb[0].mxu0
      %1536 = vmatprep.mubr.bf16.mxu0 0
      %1537 = vmatmul.mubr.bf16.gmra.mrb[0].mxu0 %v1362
      %v1538 = vpop.f32.mrb[0].mxu0
      %v1539 = vadd.f32 %v1407, %v1538
      %v1540 = vpop.f32.mrb[0].mxu0
      %v1541 = vpop.f32.mrb[0].mxu0
      %v1542 = vadd.f32 %v1407, %v1541
      %v1543 = vpop.f32.mrb[0].mxu0
      %1544 = vmatprep.mubr.bf16.mxu0 0
      %1545 = vmatmul.mubr.bf16.gmra.mrb[0].mxu0 %v1363
      %v1546 = vpop.f32.mrb[0].mxu0
      %v1547 = vadd.f32 %v1407, %v1546
      %v1548 = vpop.f32.mrb[0].mxu0
      %v1549 = vpop.f32.mrb[0].mxu0
      %v1550 = vadd.f32 %v1407, %v1549
      %v1551 = vpop.f32.mrb[0].mxu0
      %1552 = vmatprep.mubr.bf16.mxu0 0
      %1553 = vmatmul.mubr.bf16.gmra.mrb[0].mxu0 %v1364
      %v1554 = vpop.f32.mrb[0].mxu0
      %v1555 = vadd.f32 %v1407, %v1554
      %v1556 = vpop.f32.mrb[0].mxu0
      %v1557 = vpop.f32.mrb[0].mxu0
      %v1558 = vadd.f32 %v1407, %v1557
      %v1559 = vpop.f32.mrb[0].mxu0
      %1560 = vmatprep.mubr.bf16.mxu0 0
      %1561 = vmatmul.mubr.bf16.gmra.mrb[0].mxu0 %v1365
      %v1562 = vpop.f32.mrb[0].mxu0
      %v1563 = vadd.f32 %v1407, %v1562
      %v1564 = vpop.f32.mrb[0].mxu0
      %v1565 = vpop.f32.mrb[0].mxu0
      %v1566 = vadd.f32 %v1407, %v1565
      %v1567 = vpop.f32.mrb[0].mxu0
      %1568 = vmatprep.mubr.bf16.mxu0 0
      %1569 = vmatmul.mubr.bf16.gmra.mrb[0].mxu0 %v1366
      %v1570 = vpop.f32.mrb[0].mxu0
      %v1571 = vadd.f32 %v1407, %v1570
      %v1572 = vpop.f32.mrb[0].mxu0
      %v1573 = vpop.f32.mrb[0].mxu0
      %v1574 = vadd.f32 %v1407, %v1573
      %v1575 = vpop.f32.mrb[0].mxu0
      %1576 = vmatprep.mubr.bf16.mxu0 0
      %1577 = vmatmul.mubr.bf16.gmra.mrb[0].mxu0 %v1367
      %v1578 = vpop.f32.mrb[0].mxu0
      %v1579 = vadd.f32 %v1407, %v1578
      %v1580 = vpop.f32.mrb[0].mxu0
      %v1581 = vpop.f32.mrb[0].mxu0
      %v1582 = vadd.f32 %v1407, %v1581
      %v1583 = vpop.f32.mrb[0].mxu0
      %1584 = vmatprep.mubr.bf16.mxu0 0
      %1585 = vmatmul.mubr.bf16.gmra.mrb[0].mxu0 %v1368
      %v1586 = vpop.f32.mrb[0].mxu0
      %v1587 = vadd.f32 %v1407, %v1586
      %v1588 = vpop.f32.mrb[0].mxu0
      %v1589 = vpop.f32.mrb[0].mxu0
      %v1590 = vadd.f32 %v1407, %v1589
      %v1591 = vpop.f32.mrb[0].mxu0
      %1592 = vmatprep.mubr.bf16.mxu0 0
      %1593 = vmatmul.mubr.bf16.gmra.mrb[0].mxu0 %v1369
      %v1594 = vpop.f32.mrb[0].mxu0
      %v1595 = vadd.f32 %v1407, %v1594
      %v1596 = vpop.f32.mrb[0].mxu0
      %v1597 = vpop.f32.mrb[0].mxu0
      %v1598 = vadd.f32 %v1407, %v1597
      %v1599 = vpop.f32.mrb[0].mxu0
      %1600 = vmatprep.mubr.bf16.mxu0 0
      %1601 = vmatmul.mubr.bf16.gmra.mrb[0].mxu0 %v1370
      %v1602 = vpop.f32.mrb[0].mxu0
      %v1603 = vadd.f32 %v1407, %v1602
      %v1604 = vpop.f32.mrb[0].mxu0
      %v1605 = vpop.f32.mrb[0].mxu0
      %v1606 = vadd.f32 %v1407, %v1605
      %v1607 = vpop.f32.mrb[0].mxu0
      %1608 = vmatprep.mubr.bf16.mxu0 0
      %1609 = vmatmul.mubr.bf16.gmra.mrb[0].mxu0 %v1371
      %v1610 = vpop.f32.mrb[0].mxu0
      %v1611 = vadd.f32 %v1407, %v1610
      %v1612 = vpop.f32.mrb[0].mxu0
      %v1613 = vpop.f32.mrb[0].mxu0
      %v1614 = vadd.f32 %v1407, %v1613
      %v1615 = vpop.f32.mrb[0].mxu0
      %1616 = vmatprep.mubr.bf16.mxu0 0
      %1617 = vmatmul.mubr.bf16.gmra.mrb[0].mxu0 %v1372
      %v1618 = vpop.f32.mrb[0].mxu0
      %v1619 = vadd.f32 %v1407, %v1618
      %v1620 = vpop.f32.mrb[0].mxu0
      %v1621 = vpop.f32.mrb[0].mxu0
      %v1622 = vadd.f32 %v1407, %v1621
      %v1623 = vpop.f32.mrb[0].mxu0
      %1624 = vmatprep.mubr.bf16.mxu0 0
      %1625 = vmatmul.mubr.bf16.gmra.mrb[0].mxu0 %v1373
      %v1626 = vpop.f32.mrb[0].mxu0
      %v1627 = vadd.f32 %v1407, %v1626
      %v1628 = vpop.f32.mrb[0].mxu0
      %v1629 = vpop.f32.mrb[0].mxu0
      %v1630 = vadd.f32 %v1407, %v1629
      %v1631 = vpop.f32.mrb[0].mxu0
      %1632 = vmatprep.mubr.bf16.mxu0 0
      %1633 = vmatmul.mubr.bf16.gmra.mrb[0].mxu0 %v1374
      %v1634 = vpop.f32.mrb[0].mxu0
      %v1635 = vadd.f32 %v1407, %v1634
      %v1636 = vpop.f32.mrb[0].mxu0
      %v1637 = vpop.f32.mrb[0].mxu0
      %v1638 = vadd.f32 %v1407, %v1637
      %v1639 = vpop.f32.mrb[0].mxu0
      %1640 = vmatprep.mubr.bf16.mxu0 0
      %1641 = vmatmul.mubr.bf16.gmra.mrb[0].mxu0 %v1375
      %v1642 = vpop.f32.mrb[0].mxu0
      %v1643 = vadd.f32 %v1407, %v1642
      %v1644 = vpop.f32.mrb[0].mxu0
      %v1645 = vpop.f32.mrb[0].mxu0
      %v1646 = vadd.f32 %v1407, %v1645
      %v1647 = vpop.f32.mrb[0].mxu0
      %1648 = vmatprep.mubr.bf16.mxu0 0
      %1649 = vmatmul.mubr.bf16.gmra.mrb[0].mxu0 %v1376
      %v1650 = vpop.f32.mrb[0].mxu0
      %v1651 = vadd.f32 %v1407, %v1650
      %v1652 = vpop.f32.mrb[0].mxu0
      %v1653 = vpop.f32.mrb[0].mxu0
      %v1654 = vadd.f32 %v1407, %v1653
      %v1655 = vpop.f32.mrb[0].mxu0
      %1656 = vmatprep.mubr.bf16.mxu0 0
      %1657 = vmatmul.mubr.bf16.gmra.mrb[0].mxu0 %v1377
      %v1658 = vpop.f32.mrb[0].mxu0
      %v1659 = vadd.f32 %v1407, %v1658
      %v1660 = vpop.f32.mrb[0].mxu0
      %v1661 = vpop.f32.mrb[0].mxu0
      %v1662 = vadd.f32 %v1407, %v1661
      %v1663 = vpop.f32.mrb[0].mxu0
      %1664 = vmatprep.mubr.bf16.mxu0 0
      %1665 = vmatmul.mubr.bf16.gmra.mrb[0].mxu0 %v1378
      %v1666 = vpop.f32.mrb[0].mxu0
      %v1667 = vadd.f32 %v1407, %v1666
      %v1668 = vpop.f32.mrb[0].mxu0
      %v1669 = vpop.f32.mrb[0].mxu0
      %v1670 = vadd.f32 %v1407, %v1669
      %v1671 = vpop.f32.mrb[0].mxu0
      %1672 = vmatprep.mubr.bf16.mxu0 0
      %1673 = vmatmul.mubr.bf16.gmra.mrb[0].mxu0 %v1379
      %v1674 = vpop.f32.mrb[0].mxu0
      %v1675 = vadd.f32 %v1407, %v1674
      %v1676 = vpop.f32.mrb[0].mxu0
      %v1677 = vpop.f32.mrb[0].mxu0
      %v1678 = vadd.f32 %v1407, %v1677
      %v1679 = vpop.f32.mrb[0].mxu0
      %1680 = vmatprep.mubr.bf16.mxu0 0
      %1681 = vmatmul.mubr.bf16.gmra.mrb[0].mxu0 %v1380
      %v1682 = vpop.f32.mrb[0].mxu0
      %v1683 = vadd.f32 %v1407, %v1682
      %v1684 = vpop.f32.mrb[0].mxu0
      %v1685 = vpop.f32.mrb[0].mxu0
      %v1686 = vadd.f32 %v1407, %v1685
      %v1687 = vpop.f32.mrb[0].mxu0
      %1688 = vmatprep.mubr.bf16.mxu0 0
      %1689 = vmatmul.mubr.bf16.gmra.mrb[0].mxu0 %v1381
      %v1690 = vpop.f32.mrb[0].mxu0
      %v1691 = vadd.f32 %v1407, %v1690
      %v1692 = vpop.f32.mrb[0].mxu0
      %v1693 = vpop.f32.mrb[0].mxu0
      %v1694 = vadd.f32 %v1407, %v1693
      %v1695 = vpop.f32.mrb[0].mxu0
      %1696 = vmatprep.mubr.bf16.mxu0 0
      %1697 = vmatmul.mubr.bf16.gmra.mrb[0].mxu0 %v1382
      %v1698 = vpop.f32.mrb[0].mxu0
      %v1699 = vadd.f32 %v1407, %v1698
      %v1700 = vpop.f32.mrb[0].mxu0
      %v1701 = vpop.f32.mrb[0].mxu0
      %v1702 = vadd.f32 %v1407, %v1701
      %v1703 = vpop.f32.mrb[0].mxu0
      %1704 = vmatprep.mubr.bf16.mxu0 0
      %1705 = vmatmul.mubr.bf16.gmra.mrb[0].mxu0 %v1383
      %v1706 = vpop.f32.mrb[0].mxu0
      %v1707 = vadd.f32 %v1407, %v1706
      %v1708 = vpop.f32.mrb[0].mxu0
      %v1709 = vpop.f32.mrb[0].mxu0
      %v1710 = vadd.f32 %v1407, %v1709
      %v1711 = vpop.f32.mrb[0].mxu0
      %1712 = vmatprep.mubr.bf16.mxu0 0
      %1713 = vmatmul.mubr.bf16.gmra.mrb[0].mxu0 %v1384
      %v1714 = vpop.f32.mrb[0].mxu0
      %v1715 = vadd.f32 %v1407, %v1714
      %v1716 = vpop.f32.mrb[0].mxu0
      %v1717 = vpop.f32.mrb[0].mxu0
      %v1718 = vadd.f32 %v1407, %v1717
      %v1719 = vpop.f32.mrb[0].mxu0
      %1720 = vmatprep.mubr.bf16.mxu0 0
      %1721 = vmatmul.mubr.bf16.gmra.mrb[0].mxu0 %v1385
      %v1722 = vpop.f32.mrb[0].mxu0
      %v1723 = vadd.f32 %v1407, %v1722
      %v1724 = vpop.f32.mrb[0].mxu0
      %v1725 = vpop.f32.mrb[0].mxu0
      %v1726 = vadd.f32 %v1407, %v1725
      %v1727 = vpop.f32.mrb[0].mxu0
      %1728 = vmatprep.mubr.bf16.mxu0 0
      %1729 = vmatmul.mubr.bf16.gmra.mrb[0].mxu0 %v1386
      %v1730 = vpop.f32.mrb[0].mxu0
      %v1731 = vadd.f32 %v1407, %v1730
      %v1732 = vpop.f32.mrb[0].mxu0
      %v1733 = vpop.f32.mrb[0].mxu0
      %v1734 = vadd.f32 %v1407, %v1733
      %v1735 = vpop.f32.mrb[0].mxu0
      %1736 = vmatprep.mubr.bf16.mxu0 0
      %1737 = vmatmul.mubr.bf16.gmra.mrb[0].mxu0 %v1387
      %v1738 = vpop.f32.mrb[0].mxu0
      %v1739 = vadd.f32 %v1407, %v1738
      %v1740 = vpop.f32.mrb[0].mxu0
      %v1741 = vpop.f32.mrb[0].mxu0
      %v1742 = vadd.f32 %v1407, %v1741
      %v1743 = vpop.f32.mrb[0].mxu0
      %1744 = vdwg.mxu0
      %v1745 = vmax.f32 %v1491, 0.0
      %v1746 = vmax.f32 %v1494, 0.0
      %v1747 = vmax.f32 %v1499, 0.0
      %v1748 = vmax.f32 %v1502, 0.0
      %v1749 = vmax.f32 %v1507, 0.0
      %v1750 = vmax.f32 %v1510, 0.0
      %v1751 = vmax.f32 %v1515, 0.0
      %v1752 = vmax.f32 %v1518, 0.0
      %v1753 = vmax.f32 %v1523, 0.0
      %v1754 = vmax.f32 %v1526, 0.0
      %v1755 = vmax.f32 %v1531, 0.0
      %v1756 = vmax.f32 %v1534, 0.0
      %v1757 = vmax.f32 %v1539, 0.0
      %v1758 = vmax.f32 %v1542, 0.0
      %v1759 = vmax.f32 %v1547, 0.0
      %v1760 = vmax.f32 %v1550, 0.0
      %v1761 = vmax.f32 %v1555, 0.0
      %v1762 = vmax.f32 %v1558, 0.0
      %v1763 = vmax.f32 %v1563, 0.0
      %v1764 = vmax.f32 %v1566, 0.0
      %v1765 = vmax.f32 %v1571, 0.0
      %v1766 = vmax.f32 %v1574, 0.0
      %v1767 = vmax.f32 %v1579, 0.0
      %v1768 = vmax.f32 %v1582, 0.0
      %v1769 = vmax.f32 %v1587, 0.0
      %v1770 = vmax.f32 %v1590, 0.0
      %v1771 = vmax.f32 %v1595, 0.0
      %v1772 = vmax.f32 %v1598, 0.0
      %v1773 = vmax.f32 %v1603, 0.0
      %v1774 = vmax.f32 %v1606, 0.0
      %v1775 = vmax.f32 %v1611, 0.0
      %v1776 = vmax.f32 %v1614, 0.0
      %v1777 = vmax.f32 %v1619, 0.0
      %v1778 = vmax.f32 %v1622, 0.0
      %v1779 = vmax.f32 %v1627, 0.0
      %v1780 = vmax.f32 %v1630, 0.0
      %v1781 = vmax.f32 %v1635, 0.0
      %v1782 = vmax.f32 %v1638, 0.0
      %v1783 = vmax.f32 %v1643, 0.0
      %v1784 = vmax.f32 %v1646, 0.0
      %v1785 = vmax.f32 %v1651, 0.0
      %v1786 = vmax.f32 %v1654, 0.0
      %v1787 = vmax.f32 %v1659, 0.0
      %v1788 = vmax.f32 %v1662, 0.0
      %v1789 = vmax.f32 %v1667, 0.0
      %v1790 = vmax.f32 %v1670, 0.0
      %v1791 = vmax.f32 %v1675, 0.0
      %v1792 = vmax.f32 %v1678, 0.0
      %v1793 = vmax.f32 %v1683, 0.0
      %v1794 = vmax.f32 %v1686, 0.0
      %v1795 = vmax.f32 %v1691, 0.0
      %v1796 = vmax.f32 %v1694, 0.0
      %v1797 = vmax.f32 %v1699, 0.0
      %v1798 = vmax.f32 %v1702, 0.0
      %v1799 = vmax.f32 %v1707, 0.0
      %v1800 = vmax.f32 %v1710, 0.0
      %v1801 = vmax.f32 %v1715, 0.0
      %v1802 = vmax.f32 %v1718, 0.0
      %v1803 = vmax.f32 %v1723, 0.0
      %v1804 = vmax.f32 %v1726, 0.0
      %v1805 = vmax.f32 %v1731, 0.0
      %v1806 = vmax.f32 %v1734, 0.0
      %v1807 = vmax.f32 %v1739, 0.0
      %v1808 = vmax.f32 %v1742, 0.0
      %v1809 = vpack.c.bf16 %v1746, %v1745
      %v1810 = vpack.c.bf16 %v1748, %v1747
      %v1811 = vpack.c.bf16 %v1750, %v1749
      %v1812 = vpack.c.bf16 %v1752, %v1751
      %v1813 = vpack.c.bf16 %v1754, %v1753
      %v1814 = vpack.c.bf16 %v1756, %v1755
      %v1815 = vpack.c.bf16 %v1758, %v1757
      %v1816 = vpack.c.bf16 %v1760, %v1759
      %v1817 = vpack.c.bf16 %v1762, %v1761
      %v1818 = vpack.c.bf16 %v1764, %v1763
      %v1819 = vpack.c.bf16 %v1766, %v1765
      %v1820 = vpack.c.bf16 %v1768, %v1767
      %v1821 = vpack.c.bf16 %v1770, %v1769
      %v1822 = vpack.c.bf16 %v1772, %v1771
      %v1823 = vpack.c.bf16 %v1774, %v1773
      %v1824 = vpack.c.bf16 %v1776, %v1775
      %v1825 = vpack.c.bf16 %v1778, %v1777
      %v1826 = vpack.c.bf16 %v1780, %v1779
      %v1827 = vpack.c.bf16 %v1782, %v1781
      %v1828 = vpack.c.bf16 %v1784, %v1783
      %v1829 = vpack.c.bf16 %v1786, %v1785
      %v1830 = vpack.c.bf16 %v1788, %v1787
      %v1831 = vpack.c.bf16 %v1790, %v1789
      %v1832 = vpack.c.bf16 %v1792, %v1791
      %v1833 = vpack.c.bf16 %v1794, %v1793
      %v1834 = vpack.c.bf16 %v1796, %v1795
      %v1835 = vpack.c.bf16 %v1798, %v1797
      %v1836 = vpack.c.bf16 %v1800, %v1799
      %v1837 = vpack.c.bf16 %v1802, %v1801
      %v1838 = vpack.c.bf16 %v1804, %v1803
      %v1839 = vpack.c.bf16 %v1806, %v1805
      %v1840 = vpack.c.bf16 %v1808, %v1807
      %s1841 = scalar_lea.vmem %s4, 64
      %v1842 = vld [vmem:[%s1841] sm:$0xf]
      %v1843 = vld [vmem:[%s1841 + $0x4] sm:$0xf]
      %v1844 = vld [vmem:[%s1841 + $0x8] sm:$0xf]
      %v1845 = vld [vmem:[%s1841 + $0xc] sm:$0xf]
      %v1846 = vld [vmem:[%s1841 + $0x10] sm:$0xf]
      %v1847 = vld [vmem:[%s1841 + $0x14] sm:$0xf]
      %v1848 = vld [vmem:[%s1841 + $0x18] sm:$0xf]
      %v1849 = vld [vmem:[%s1841 + $0x1c] sm:$0xf]
      %v1850 = vld [vmem:[%s1841 + $0x20] sm:$0xf]
      %v1851 = vld [vmem:[%s1841 + $0x24] sm:$0xf]
      %v1852 = vld [vmem:[%s1841 + $0x28] sm:$0xf]
      %v1853 = vld [vmem:[%s1841 + $0x2c] sm:$0xf]
      %v1854 = vld [vmem:[%s1841 + $0x30] sm:$0xf]
      %v1855 = vld [vmem:[%s1841 + $0x34] sm:$0xf]
      %v1856 = vld [vmem:[%s1841 + $0x38] sm:$0xf]
      %v1857 = vld [vmem:[%s1841 + $0x3c] sm:$0xf]
      %v1858 = vlaneseq
      %v1859 = vshrl.u32 %v1858, 7
      %v1860 = vsub.s32 1, %v1859
      %v1861 = vrot.slane %v609, %v1860
      %v1878 = vunpack.c.l.b16 %v1842
      %v1879 = vunpack.c.l.b16 %v1843
      %v1880 = vunpack.c.l.b16 %v1844
      %v1881 = vunpack.c.l.b16 %v1845
      %v1882 = vunpack.c.l.b16 %v1846
      %v1883 = vunpack.c.l.b16 %v1847
      %v1884 = vunpack.c.l.b16 %v1848
      %v1885 = vunpack.c.l.b16 %v1849
      %v1886 = vunpack.c.l.b16 %v1850
      %v1887 = vunpack.c.l.b16 %v1851
      %v1888 = vunpack.c.l.b16 %v1852
      %v1889 = vunpack.c.l.b16 %v1853
      %v1890 = vunpack.c.l.b16 %v1854
      %v1891 = vunpack.c.l.b16 %v1855
      %v1892 = vunpack.c.l.b16 %v1856
      %v1893 = vunpack.c.l.b16 %v1857
      %v1894 = vpack.c.b16 %v1879, %v1878
      %v1895 = vpack.c.b16 %v1881, %v1880
      %v1896 = vpack.c.b16 %v1883, %v1882
      %v1897 = vpack.c.b16 %v1885, %v1884
      %v1898 = vpack.c.b16 %v1887, %v1886
      %v1899 = vpack.c.b16 %v1889, %v1888
      %v1900 = vpack.c.b16 %v1891, %v1890
      %v1901 = vpack.c.b16 %v1893, %v1892
      %1910 = vmatprep.subr.bf16.mxu0 0
      %1911 = vmatpush1.bf16.msra.mxu0 %v1894
      %1912 = vmatprep.subr.bf16.mxu0 0
      %1913 = vmatpush1.bf16.msra.mxu0 %v1895
      %1914 = vmatprep.subr.bf16.mxu0 0
      %1915 = vmatpush1.bf16.msra.mxu0 %v1896
      %1916 = vmatprep.subr.bf16.mxu0 0
      %1917 = vmatpush1.bf16.msra.mxu0 %v1897
      %1918 = vmatprep.subr.bf16.mxu0 0
      %1919 = vmatpush1.bf16.msra.mxu0 %v1898
      %1920 = vmatprep.subr.bf16.mxu0 0
      %1921 = vmatpush1.bf16.msra.mxu0 %v1899
      %1922 = vmatprep.subr.bf16.mxu0 0
      %1923 = vmatpush1.bf16.msra.mxu0 %v1900
      %1924 = vmatprep.subr.bf16.mxu0 0
      %1925 = vmatpush1.bf16.msra.mxu0 %v1901
      %1926 = vmatprep.subr.bf16.mxu0 0
      %1927 = vmatpush1.bf16.msra.mxu0 0
      %1928 = vmatprep.subr.bf16.mxu0 0
      %1929 = vmatpush1.bf16.msra.mxu0 0
      %1930 = vmatprep.subr.bf16.mxu0 0
      %1931 = vmatpush1.bf16.msra.mxu0 0
      %1932 = vmatprep.subr.bf16.mxu0 0
      %1933 = vmatpush1.bf16.msra.mxu0 0
      %1934 = vmatprep.subr.bf16.mxu0 0
      %1935 = vmatpush1.bf16.msra.mxu0 0
      %1936 = vmatprep.subr.bf16.mxu0 0
      %1937 = vmatpush1.bf16.msra.mxu0 0
      %1938 = vmatprep.subr.bf16.mxu0 0
      %1939 = vmatpush1.bf16.msra.mxu0 0
      %1940 = vmatprep.subr.bf16.mxu0 0
      %1941 = vmatpush1.bf16.msra.mxu0 0
      %1942 = vmatprep.mubr.bf16.mxu0 0
      %1943 = vmatmul.mubr.bf16.gmra.mrb[0].mxu0 %v1809
      %v1944 = vpop.f32.mrb[0].mxu0
      %v1945 = vadd.f32 %v1861, %v1944
      %v1946 = vpop.f32.mrb[0].mxu0
      %v1947 = vpop.f32.mrb[0].mxu0
      %v1948 = vadd.f32 %v1861, %v1947
      %v1949 = vpop.f32.mrb[0].mxu0
      %1950 = vmatprep.mubr.bf16.mxu0 0
      %1951 = vmatmul.mubr.bf16.gmra.mrb[0].mxu0 %v1810
      %v1952 = vpop.f32.mrb[0].mxu0
      %v1953 = vadd.f32 %v1861, %v1952
      %v1954 = vpop.f32.mrb[0].mxu0
      %v1955 = vpop.f32.mrb[0].mxu0
      %v1956 = vadd.f32 %v1861, %v1955
      %v1957 = vpop.f32.mrb[0].mxu0
      %1958 = vmatprep.mubr.bf16.mxu0 0
      %1959 = vmatmul.mubr.bf16.gmra.mrb[0].mxu0 %v1811
      %v1960 = vpop.f32.mrb[0].mxu0
      %v1961 = vadd.f32 %v1861, %v1960
      %v1962 = vpop.f32.mrb[0].mxu0
      %v1963 = vpop.f32.mrb[0].mxu0
      %v1964 = vadd.f32 %v1861, %v1963
      %v1965 = vpop.f32.mrb[0].mxu0
      %1966 = vmatprep.mubr.bf16.mxu0 0
      %1967 = vmatmul.mubr.bf16.gmra.mrb[0].mxu0 %v1812
      %v1968 = vpop.f32.mrb[0].mxu0
      %v1969 = vadd.f32 %v1861, %v1968
      %v1970 = vpop.f32.mrb[0].mxu0
      %v1971 = vpop.f32.mrb[0].mxu0
      %v1972 = vadd.f32 %v1861, %v1971
      %v1973 = vpop.f32.mrb[0].mxu0
      %1974 = vmatprep.mubr.bf16.mxu0 0
      %1975 = vmatmul.mubr.bf16.gmra.mrb[0].mxu0 %v1813
      %v1976 = vpop.f32.mrb[0].mxu0
      %v1977 = vadd.f32 %v1861, %v1976
      %v1978 = vpop.f32.mrb[0].mxu0
      %v1979 = vpop.f32.mrb[0].mxu0
      %v1980 = vadd.f32 %v1861, %v1979
      %v1981 = vpop.f32.mrb[0].mxu0
      %1982 = vmatprep.mubr.bf16.mxu0 0
      %1983 = vmatmul.mubr.bf16.gmra.mrb[0].mxu0 %v1814
      %v1984 = vpop.f32.mrb[0].mxu0
      %v1985 = vadd.f32 %v1861, %v1984
      %v1986 = vpop.f32.mrb[0].mxu0
      %v1987 = vpop.f32.mrb[0].mxu0
      %v1988 = vadd.f32 %v1861, %v1987
      %v1989 = vpop.f32.mrb[0].mxu0
      %1990 = vmatprep.mubr.bf16.mxu0 0
      %1991 = vmatmul.mubr.bf16.gmra.mrb[0].mxu0 %v1815
      %v1992 = vpop.f32.mrb[0].mxu0
      %v1993 = vadd.f32 %v1861, %v1992
      %v1994 = vpop.f32.mrb[0].mxu0
      %v1995 = vpop.f32.mrb[0].mxu0
      %v1996 = vadd.f32 %v1861, %v1995
      %v1997 = vpop.f32.mrb[0].mxu0
      %1998 = vmatprep.mubr.bf16.mxu0 0
      %1999 = vmatmul.mubr.bf16.gmra.mrb[0].mxu0 %v1816
      %v2000 = vpop.f32.mrb[0].mxu0
      %v2001 = vadd.f32 %v1861, %v2000
      %v2002 = vpop.f32.mrb[0].mxu0
      %v2003 = vpop.f32.mrb[0].mxu0
      %v2004 = vadd.f32 %v1861, %v2003
      %v2005 = vpop.f32.mrb[0].mxu0
      %2006 = vmatprep.mubr.bf16.mxu0 0
      %2007 = vmatmul.mubr.bf16.gmra.mrb[0].mxu0 %v1817
      %v2008 = vpop.f32.mrb[0].mxu0
      %v2009 = vadd.f32 %v1861, %v2008
      %v2010 = vpop.f32.mrb[0].mxu0
      %v2011 = vpop.f32.mrb[0].mxu0
      %v2012 = vadd.f32 %v1861, %v2011
      %v2013 = vpop.f32.mrb[0].mxu0
      %2014 = vmatprep.mubr.bf16.mxu0 0
      %2015 = vmatmul.mubr.bf16.gmra.mrb[0].mxu0 %v1818
      %v2016 = vpop.f32.mrb[0].mxu0
      %v2017 = vadd.f32 %v1861, %v2016
      %v2018 = vpop.f32.mrb[0].mxu0
      %v2019 = vpop.f32.mrb[0].mxu0
      %v2020 = vadd.f32 %v1861, %v2019
      %v2021 = vpop.f32.mrb[0].mxu0
      %2022 = vmatprep.mubr.bf16.mxu0 0
      %2023 = vmatmul.mubr.bf16.gmra.mrb[0].mxu0 %v1819
      %v2024 = vpop.f32.mrb[0].mxu0
      %v2025 = vadd.f32 %v1861, %v2024
      %v2026 = vpop.f32.mrb[0].mxu0
      %v2027 = vpop.f32.mrb[0].mxu0
      %v2028 = vadd.f32 %v1861, %v2027
      %v2029 = vpop.f32.mrb[0].mxu0
      %2030 = vmatprep.mubr.bf16.mxu0 0
      %2031 = vmatmul.mubr.bf16.gmra.mrb[0].mxu0 %v1820
      %v2032 = vpop.f32.mrb[0].mxu0
      %v2033 = vadd.f32 %v1861, %v2032
      %v2034 = vpop.f32.mrb[0].mxu0
      %v2035 = vpop.f32.mrb[0].mxu0
      %v2036 = vadd.f32 %v1861, %v2035
      %v2037 = vpop.f32.mrb[0].mxu0
      %2038 = vmatprep.mubr.bf16.mxu0 0
      %2039 = vmatmul.mubr.bf16.gmra.mrb[0].mxu0 %v1821
      %v2040 = vpop.f32.mrb[0].mxu0
      %v2041 = vadd.f32 %v1861, %v2040
      %v2042 = vpop.f32.mrb[0].mxu0
      %v2043 = vpop.f32.mrb[0].mxu0
      %v2044 = vadd.f32 %v1861, %v2043
      %v2045 = vpop.f32.mrb[0].mxu0
      %2046 = vmatprep.mubr.bf16.mxu0 0
      %2047 = vmatmul.mubr.bf16.gmra.mrb[0].mxu0 %v1822
      %v2048 = vpop.f32.mrb[0].mxu0
      %v2049 = vadd.f32 %v1861, %v2048
      %v2050 = vpop.f32.mrb[0].mxu0
      %v2051 = vpop.f32.mrb[0].mxu0
      %v2052 = vadd.f32 %v1861, %v2051
      %v2053 = vpop.f32.mrb[0].mxu0
      %2054 = vmatprep.mubr.bf16.mxu0 0
      %2055 = vmatmul.mubr.bf16.gmra.mrb[0].mxu0 %v1823
      %v2056 = vpop.f32.mrb[0].mxu0
      %v2057 = vadd.f32 %v1861, %v2056
      %v2058 = vpop.f32.mrb[0].mxu0
      %v2059 = vpop.f32.mrb[0].mxu0
      %v2060 = vadd.f32 %v1861, %v2059
      %v2061 = vpop.f32.mrb[0].mxu0
      %2062 = vmatprep.mubr.bf16.mxu0 0
      %2063 = vmatmul.mubr.bf16.gmra.mrb[0].mxu0 %v1824
      %v2064 = vpop.f32.mrb[0].mxu0
      %v2065 = vadd.f32 %v1861, %v2064
      %v2066 = vpop.f32.mrb[0].mxu0
      %v2067 = vpop.f32.mrb[0].mxu0
      %v2068 = vadd.f32 %v1861, %v2067
      %v2069 = vpop.f32.mrb[0].mxu0
      %2070 = vmatprep.mubr.bf16.mxu0 0
      %2071 = vmatmul.mubr.bf16.gmra.mrb[0].mxu0 %v1825
      %v2072 = vpop.f32.mrb[0].mxu0
      %v2073 = vadd.f32 %v1861, %v2072
      %v2074 = vpop.f32.mrb[0].mxu0
      %v2075 = vpop.f32.mrb[0].mxu0
      %v2076 = vadd.f32 %v1861, %v2075
      %v2077 = vpop.f32.mrb[0].mxu0
      %2078 = vmatprep.mubr.bf16.mxu0 0
      %2079 = vmatmul.mubr.bf16.gmra.mrb[0].mxu0 %v1826
      %v2080 = vpop.f32.mrb[0].mxu0
      %v2081 = vadd.f32 %v1861, %v2080
      %v2082 = vpop.f32.mrb[0].mxu0
      %v2083 = vpop.f32.mrb[0].mxu0
      %v2084 = vadd.f32 %v1861, %v2083
      %v2085 = vpop.f32.mrb[0].mxu0
      %2086 = vmatprep.mubr.bf16.mxu0 0
      %2087 = vmatmul.mubr.bf16.gmra.mrb[0].mxu0 %v1827
      %v2088 = vpop.f32.mrb[0].mxu0
      %v2089 = vadd.f32 %v1861, %v2088
      %v2090 = vpop.f32.mrb[0].mxu0
      %v2091 = vpop.f32.mrb[0].mxu0
      %v2092 = vadd.f32 %v1861, %v2091
      %v2093 = vpop.f32.mrb[0].mxu0
      %2094 = vmatprep.mubr.bf16.mxu0 0
      %2095 = vmatmul.mubr.bf16.gmra.mrb[0].mxu0 %v1828
      %v2096 = vpop.f32.mrb[0].mxu0
      %v2097 = vadd.f32 %v1861, %v2096
      %v2098 = vpop.f32.mrb[0].mxu0
      %v2099 = vpop.f32.mrb[0].mxu0
      %v2100 = vadd.f32 %v1861, %v2099
      %v2101 = vpop.f32.mrb[0].mxu0
      %2102 = vmatprep.mubr.bf16.mxu0 0
      %2103 = vmatmul.mubr.bf16.gmra.mrb[0].mxu0 %v1829
      %v2104 = vpop.f32.mrb[0].mxu0
      %v2105 = vadd.f32 %v1861, %v2104
      %v2106 = vpop.f32.mrb[0].mxu0
      %v2107 = vpop.f32.mrb[0].mxu0
      %v2108 = vadd.f32 %v1861, %v2107
      %v2109 = vpop.f32.mrb[0].mxu0
      %2110 = vmatprep.mubr.bf16.mxu0 0
      %2111 = vmatmul.mubr.bf16.gmra.mrb[0].mxu0 %v1830
      %v2112 = vpop.f32.mrb[0].mxu0
      %v2113 = vadd.f32 %v1861, %v2112
      %v2114 = vpop.f32.mrb[0].mxu0
      %v2115 = vpop.f32.mrb[0].mxu0
      %v2116 = vadd.f32 %v1861, %v2115
      %v2117 = vpop.f32.mrb[0].mxu0
      %2118 = vmatprep.mubr.bf16.mxu0 0
      %2119 = vmatmul.mubr.bf16.gmra.mrb[0].mxu0 %v1831
      %v2120 = vpop.f32.mrb[0].mxu0
      %v2121 = vadd.f32 %v1861, %v2120
      %v2122 = vpop.f32.mrb[0].mxu0
      %v2123 = vpop.f32.mrb[0].mxu0
      %v2124 = vadd.f32 %v1861, %v2123
      %v2125 = vpop.f32.mrb[0].mxu0
      %2126 = vmatprep.mubr.bf16.mxu0 0
      %2127 = vmatmul.mubr.bf16.gmra.mrb[0].mxu0 %v1832
      %v2128 = vpop.f32.mrb[0].mxu0
      %v2129 = vadd.f32 %v1861, %v2128
      %v2130 = vpop.f32.mrb[0].mxu0
      %v2131 = vpop.f32.mrb[0].mxu0
      %v2132 = vadd.f32 %v1861, %v2131
      %v2133 = vpop.f32.mrb[0].mxu0
      %2134 = vmatprep.mubr.bf16.mxu0 0
      %2135 = vmatmul.mubr.bf16.gmra.mrb[0].mxu0 %v1833
      %v2136 = vpop.f32.mrb[0].mxu0
      %v2137 = vadd.f32 %v1861, %v2136
      %v2138 = vpop.f32.mrb[0].mxu0
      %v2139 = vpop.f32.mrb[0].mxu0
      %v2140 = vadd.f32 %v1861, %v2139
      %v2141 = vpop.f32.mrb[0].mxu0
      %2142 = vmatprep.mubr.bf16.mxu0 0
      %2143 = vmatmul.mubr.bf16.gmra.mrb[0].mxu0 %v1834
      %v2144 = vpop.f32.mrb[0].mxu0
      %v2145 = vadd.f32 %v1861, %v2144
      %v2146 = vpop.f32.mrb[0].mxu0
      %v2147 = vpop.f32.mrb[0].mxu0
      %v2148 = vadd.f32 %v1861, %v2147
      %v2149 = vpop.f32.mrb[0].mxu0
      %2150 = vmatprep.mubr.bf16.mxu0 0
      %2151 = vmatmul.mubr.bf16.gmra.mrb[0].mxu0 %v1835
      %v2152 = vpop.f32.mrb[0].mxu0
      %v2153 = vadd.f32 %v1861, %v2152
      %v2154 = vpop.f32.mrb[0].mxu0
      %v2155 = vpop.f32.mrb[0].mxu0
      %v2156 = vadd.f32 %v1861, %v2155
      %v2157 = vpop.f32.mrb[0].mxu0
      %2158 = vmatprep.mubr.bf16.mxu0 0
      %2159 = vmatmul.mubr.bf16.gmra.mrb[0].mxu0 %v1836
      %v2160 = vpop.f32.mrb[0].mxu0
      %v2161 = vadd.f32 %v1861, %v2160
      %v2162 = vpop.f32.mrb[0].mxu0
      %v2163 = vpop.f32.mrb[0].mxu0
      %v2164 = vadd.f32 %v1861, %v2163
      %v2165 = vpop.f32.mrb[0].mxu0
      %2166 = vmatprep.mubr.bf16.mxu0 0
      %2167 = vmatmul.mubr.bf16.gmra.mrb[0].mxu0 %v1837
      %v2168 = vpop.f32.mrb[0].mxu0
      %v2169 = vadd.f32 %v1861, %v2168
      %v2170 = vpop.f32.mrb[0].mxu0
      %v2171 = vpop.f32.mrb[0].mxu0
      %v2172 = vadd.f32 %v1861, %v2171
      %v2173 = vpop.f32.mrb[0].mxu0
      %2174 = vmatprep.mubr.bf16.mxu0 0
      %2175 = vmatmul.mubr.bf16.gmra.mrb[0].mxu0 %v1838
      %v2176 = vpop.f32.mrb[0].mxu0
      %v2177 = vadd.f32 %v1861, %v2176
      %v2178 = vpop.f32.mrb[0].mxu0
      %v2179 = vpop.f32.mrb[0].mxu0
      %v2180 = vadd.f32 %v1861, %v2179
      %v2181 = vpop.f32.mrb[0].mxu0
      %2182 = vmatprep.mubr.bf16.mxu0 0
      %2183 = vmatmul.mubr.bf16.gmra.mrb[0].mxu0 %v1839
      %v2184 = vpop.f32.mrb[0].mxu0
      %v2185 = vadd.f32 %v1861, %v2184
      %v2186 = vpop.f32.mrb[0].mxu0
      %v2187 = vpop.f32.mrb[0].mxu0
      %v2188 = vadd.f32 %v1861, %v2187
      %v2189 = vpop.f32.mrb[0].mxu0
      %2190 = vmatprep.mubr.bf16.mxu0 0
      %2191 = vmatmul.mubr.bf16.gmra.mrb[0].mxu0 %v1840
      %v2192 = vpop.f32.mrb[0].mxu0
      %v2193 = vadd.f32 %v1861, %v2192
      %v2194 = vpop.f32.mrb[0].mxu0
      %v2195 = vpop.f32.mrb[0].mxu0
      %v2196 = vadd.f32 %v1861, %v2195
      %v2197 = vpop.f32.mrb[0].mxu0
      %2198 = vdwg.mxu0
      %v2199 = vmax.f32 %v1945, 0.0
      %v2200 = vmax.f32 %v1948, 0.0
      %v2201 = vmax.f32 %v1953, 0.0
      %v2202 = vmax.f32 %v1956, 0.0
      %v2203 = vmax.f32 %v1961, 0.0
      %v2204 = vmax.f32 %v1964, 0.0
      %v2205 = vmax.f32 %v1969, 0.0
      %v2206 = vmax.f32 %v1972, 0.0
      %v2207 = vmax.f32 %v1977, 0.0
      %v2208 = vmax.f32 %v1980, 0.0
      %v2209 = vmax.f32 %v1985, 0.0
      %v2210 = vmax.f32 %v1988, 0.0
      %v2211 = vmax.f32 %v1993, 0.0
      %v2212 = vmax.f32 %v1996, 0.0
      %v2213 = vmax.f32 %v2001, 0.0
      %v2214 = vmax.f32 %v2004, 0.0
      %v2215 = vmax.f32 %v2009, 0.0
      %v2216 = vmax.f32 %v2012, 0.0
      %v2217 = vmax.f32 %v2017, 0.0
      %v2218 = vmax.f32 %v2020, 0.0
      %v2219 = vmax.f32 %v2025, 0.0
      %v2220 = vmax.f32 %v2028, 0.0
      %v2221 = vmax.f32 %v2033, 0.0
      %v2222 = vmax.f32 %v2036, 0.0
      %v2223 = vmax.f32 %v2041, 0.0
      %v2224 = vmax.f32 %v2044, 0.0
      %v2225 = vmax.f32 %v2049, 0.0
      %v2226 = vmax.f32 %v2052, 0.0
      %v2227 = vmax.f32 %v2057, 0.0
      %v2228 = vmax.f32 %v2060, 0.0
      %v2229 = vmax.f32 %v2065, 0.0
      %v2230 = vmax.f32 %v2068, 0.0
      %v2231 = vmax.f32 %v2073, 0.0
      %v2232 = vmax.f32 %v2076, 0.0
      %v2233 = vmax.f32 %v2081, 0.0
      %v2234 = vmax.f32 %v2084, 0.0
      %v2235 = vmax.f32 %v2089, 0.0
      %v2236 = vmax.f32 %v2092, 0.0
      %v2237 = vmax.f32 %v2097, 0.0
      %v2238 = vmax.f32 %v2100, 0.0
      %v2239 = vmax.f32 %v2105, 0.0
      %v2240 = vmax.f32 %v2108, 0.0
      %v2241 = vmax.f32 %v2113, 0.0
      %v2242 = vmax.f32 %v2116, 0.0
      %v2243 = vmax.f32 %v2121, 0.0
      %v2244 = vmax.f32 %v2124, 0.0
      %v2245 = vmax.f32 %v2129, 0.0
      %v2246 = vmax.f32 %v2132, 0.0
      %v2247 = vmax.f32 %v2137, 0.0
      %v2248 = vmax.f32 %v2140, 0.0
      %v2249 = vmax.f32 %v2145, 0.0
      %v2250 = vmax.f32 %v2148, 0.0
      %v2251 = vmax.f32 %v2153, 0.0
      %v2252 = vmax.f32 %v2156, 0.0
      %v2253 = vmax.f32 %v2161, 0.0
      %v2254 = vmax.f32 %v2164, 0.0
      %v2255 = vmax.f32 %v2169, 0.0
      %v2256 = vmax.f32 %v2172, 0.0
      %v2257 = vmax.f32 %v2177, 0.0
      %v2258 = vmax.f32 %v2180, 0.0
      %v2259 = vmax.f32 %v2185, 0.0
      %v2260 = vmax.f32 %v2188, 0.0
      %v2261 = vmax.f32 %v2193, 0.0
      %v2262 = vmax.f32 %v2196, 0.0
      %v2263 = vadd.f32 %v2199, %v976
      %v2264 = vadd.f32 %v2200, %v980
      %v2265 = vadd.f32 %v2201, %v986
      %v2266 = vadd.f32 %v2202, %v990
      %v2267 = vadd.f32 %v2203, %v996
      %v2268 = vadd.f32 %v2204, %v1000
      %v2269 = vadd.f32 %v2205, %v1006
      %v2270 = vadd.f32 %v2206, %v1010
      %v2271 = vadd.f32 %v2207, %v1016
      %v2272 = vadd.f32 %v2208, %v1020
      %v2273 = vadd.f32 %v2209, %v1026
      %v2274 = vadd.f32 %v2210, %v1030
      %v2275 = vadd.f32 %v2211, %v1036
      %v2276 = vadd.f32 %v2212, %v1040
      %v2277 = vadd.f32 %v2213, %v1046
      %v2278 = vadd.f32 %v2214, %v1050
      %v2279 = vadd.f32 %v2215, %v1056
      %v2280 = vadd.f32 %v2216, %v1060
      %v2281 = vadd.f32 %v2217, %v1066
      %v2282 = vadd.f32 %v2218, %v1070
      %v2283 = vadd.f32 %v2219, %v1076
      %v2284 = vadd.f32 %v2220, %v1080
      %v2285 = vadd.f32 %v2221, %v1086
      %v2286 = vadd.f32 %v2222, %v1090
      %v2287 = vadd.f32 %v2223, %v1096
      %v2288 = vadd.f32 %v2224, %v1100
      %v2289 = vadd.f32 %v2225, %v1106
      %v2290 = vadd.f32 %v2226, %v1110
      %v2291 = vadd.f32 %v2227, %v1116
      %v2292 = vadd.f32 %v2228, %v1120
      %v2293 = vadd.f32 %v2229, %v1126
      %v2294 = vadd.f32 %v2230, %v1130
      %v2295 = vadd.f32 %v2231, %v1136
      %v2296 = vadd.f32 %v2232, %v1140
      %v2297 = vadd.f32 %v2233, %v1146
      %v2298 = vadd.f32 %v2234, %v1150
      %v2299 = vadd.f32 %v2235, %v1156
      %v2300 = vadd.f32 %v2236, %v1160
      %v2301 = vadd.f32 %v2237, %v1166
      %v2302 = vadd.f32 %v2238, %v1170
      %v2303 = vadd.f32 %v2239, %v1176
      %v2304 = vadd.f32 %v2240, %v1180
      %v2305 = vadd.f32 %v2241, %v1186
      %v2306 = vadd.f32 %v2242, %v1190
      %v2307 = vadd.f32 %v2243, %v1196
      %v2308 = vadd.f32 %v2244, %v1200
      %v2309 = vadd.f32 %v2245, %v1206
      %v2310 = vadd.f32 %v2246, %v1210
      %v2311 = vadd.f32 %v2247, %v1216
      %v2312 = vadd.f32 %v2248, %v1220
      %v2313 = vadd.f32 %v2249, %v1226
      %v2314 = vadd.f32 %v2250, %v1230
      %v2315 = vadd.f32 %v2251, %v1236
      %v2316 = vadd.f32 %v2252, %v1240
      %v2317 = vadd.f32 %v2253, %v1246
      %v2318 = vadd.f32 %v2254, %v1250
      %v2319 = vadd.f32 %v2255, %v1256
      %v2320 = vadd.f32 %v2256, %v1260
      %v2321 = vadd.f32 %v2257, %v1266
      %v2322 = vadd.f32 %v2258, %v1270
      %v2323 = vadd.f32 %v2259, %v1276
      %v2324 = vadd.f32 %v2260, %v1280
      %v2325 = vadd.f32 %v2261, %v1286
      %v2326 = vadd.f32 %v2262, %v1290
      %v2327 = vpack.c.bf16 %v2264, %v2263
      %v2328 = vpack.c.bf16 %v2266, %v2265
      %v2329 = vpack.c.bf16 %v2268, %v2267
      %v2330 = vpack.c.bf16 %v2270, %v2269
      %v2331 = vpack.c.bf16 %v2272, %v2271
      %v2332 = vpack.c.bf16 %v2274, %v2273
      %v2333 = vpack.c.bf16 %v2276, %v2275
      %v2334 = vpack.c.bf16 %v2278, %v2277
      %v2335 = vpack.c.bf16 %v2280, %v2279
      %v2336 = vpack.c.bf16 %v2282, %v2281
      %v2337 = vpack.c.bf16 %v2284, %v2283
      %v2338 = vpack.c.bf16 %v2286, %v2285
      %v2339 = vpack.c.bf16 %v2288, %v2287
      %v2340 = vpack.c.bf16 %v2290, %v2289
      %v2341 = vpack.c.bf16 %v2292, %v2291
      %v2342 = vpack.c.bf16 %v2294, %v2293
      %v2343 = vpack.c.bf16 %v2296, %v2295
      %v2344 = vpack.c.bf16 %v2298, %v2297
      %v2345 = vpack.c.bf16 %v2300, %v2299
      %v2346 = vpack.c.bf16 %v2302, %v2301
      %v2347 = vpack.c.bf16 %v2304, %v2303
      %v2348 = vpack.c.bf16 %v2306, %v2305
      %v2349 = vpack.c.bf16 %v2308, %v2307
      %v2350 = vpack.c.bf16 %v2310, %v2309
      %v2351 = vpack.c.bf16 %v2312, %v2311
      %v2352 = vpack.c.bf16 %v2314, %v2313
      %v2353 = vpack.c.bf16 %v2316, %v2315
      %v2354 = vpack.c.bf16 %v2318, %v2317
      %v2355 = vpack.c.bf16 %v2320, %v2319
      %v2356 = vpack.c.bf16 %v2322, %v2321
      %v2357 = vpack.c.bf16 %v2324, %v2323
      %v2358 = vpack.c.bf16 %v2326, %v2325
      %s2359 = scalar_lea.vmem %s4, 128
      %v2360 = vld [vmem:[%s2359] sm:$0xf]
      %v2361 = vld [vmem:[%s2359 + $0x4] sm:$0xf]
      %v2362 = vld [vmem:[%s2359 + $0x8] sm:$0xf]
      %v2363 = vld [vmem:[%s2359 + $0xc] sm:$0xf]
      %v2364 = vld [vmem:[%s2359 + $0x10] sm:$0xf]
      %v2365 = vld [vmem:[%s2359 + $0x14] sm:$0xf]
      %v2366 = vld [vmem:[%s2359 + $0x18] sm:$0xf]
      %v2367 = vld [vmem:[%s2359 + $0x1c] sm:$0xf]
      %v2368 = vld [vmem:[%s2359 + $0x20] sm:$0xf]
      %v2369 = vld [vmem:[%s2359 + $0x24] sm:$0xf]
      %v2370 = vld [vmem:[%s2359 + $0x28] sm:$0xf]
      %v2371 = vld [vmem:[%s2359 + $0x2c] sm:$0xf]
      %v2372 = vld [vmem:[%s2359 + $0x30] sm:$0xf]
      %v2373 = vld [vmem:[%s2359 + $0x34] sm:$0xf]
      %v2374 = vld [vmem:[%s2359 + $0x38] sm:$0xf]
      %v2375 = vld [vmem:[%s2359 + $0x3c] sm:$0xf]
      %v2376 = vlaneseq
      %v2377 = vshrl.u32 %v2376, 7
      %v2378 = vsub.s32 2, %v2377
      %v2379 = vrot.slane %v609, %v2378
      %v2396 = vunpack.c.l.b16 %v2360
      %v2397 = vunpack.c.l.b16 %v2361
      %v2398 = vunpack.c.l.b16 %v2362
      %v2399 = vunpack.c.l.b16 %v2363
      %v2400 = vunpack.c.l.b16 %v2364
      %v2401 = vunpack.c.l.b16 %v2365
      %v2402 = vunpack.c.l.b16 %v2366
      %v2403 = vunpack.c.l.b16 %v2367
      %v2404 = vunpack.c.l.b16 %v2368
      %v2405 = vunpack.c.l.b16 %v2369
      %v2406 = vunpack.c.l.b16 %v2370
      %v2407 = vunpack.c.l.b16 %v2371
      %v2408 = vunpack.c.l.b16 %v2372
      %v2409 = vunpack.c.l.b16 %v2373
      %v2410 = vunpack.c.l.b16 %v2374
      %v2411 = vunpack.c.l.b16 %v2375
      %v2412 = vpack.c.b16 %v2397, %v2396
      %v2413 = vpack.c.b16 %v2399, %v2398
      %v2414 = vpack.c.b16 %v2401, %v2400
      %v2415 = vpack.c.b16 %v2403, %v2402
      %v2416 = vpack.c.b16 %v2405, %v2404
      %v2417 = vpack.c.b16 %v2407, %v2406
      %v2418 = vpack.c.b16 %v2409, %v2408
      %v2419 = vpack.c.b16 %v2411, %v2410
      %2428 = vmatprep.subr.bf16.mxu0 0
      %2429 = vmatpush1.bf16.msra.mxu0 %v2412
      %2430 = vmatprep.subr.bf16.mxu0 0
      %2431 = vmatpush1.bf16.msra.mxu0 %v2413
      %2432 = vmatprep.subr.bf16.mxu0 0
      %2433 = vmatpush1.bf16.msra.mxu0 %v2414
      %2434 = vmatprep.subr.bf16.mxu0 0
      %2435 = vmatpush1.bf16.msra.mxu0 %v2415
      %2436 = vmatprep.subr.bf16.mxu0 0
      %2437 = vmatpush1.bf16.msra.mxu0 %v2416
      %2438 = vmatprep.subr.bf16.mxu0 0
      %2439 = vmatpush1.bf16.msra.mxu0 %v2417
      %2440 = vmatprep.subr.bf16.mxu0 0
      %2441 = vmatpush1.bf16.msra.mxu0 %v2418
      %2442 = vmatprep.subr.bf16.mxu0 0
      %2443 = vmatpush1.bf16.msra.mxu0 %v2419
      %2444 = vmatprep.subr.bf16.mxu0 0
      %2445 = vmatpush1.bf16.msra.mxu0 0
      %2446 = vmatprep.subr.bf16.mxu0 0
      %2447 = vmatpush1.bf16.msra.mxu0 0
      %2448 = vmatprep.subr.bf16.mxu0 0
      %2449 = vmatpush1.bf16.msra.mxu0 0
      %2450 = vmatprep.subr.bf16.mxu0 0
      %2451 = vmatpush1.bf16.msra.mxu0 0
      %2452 = vmatprep.subr.bf16.mxu0 0
      %2453 = vmatpush1.bf16.msra.mxu0 0
      %2454 = vmatprep.subr.bf16.mxu0 0
      %2455 = vmatpush1.bf16.msra.mxu0 0
      %2456 = vmatprep.subr.bf16.mxu0 0
      %2457 = vmatpush1.bf16.msra.mxu0 0
      %2458 = vmatprep.subr.bf16.mxu0 0
      %2459 = vmatpush1.bf16.msra.mxu0 0
      %2460 = vmatprep.mubr.bf16.mxu0 0
      %2461 = vmatmul.mubr.bf16.gmra.mrb[0].mxu0 %v2327
      %v2462 = vpop.f32.mrb[0].mxu0
      %v2463 = vadd.f32 %v2379, %v2462
      %v2464 = vpop.f32.mrb[0].mxu0
      %v2465 = vpop.f32.mrb[0].mxu0
      %v2466 = vadd.f32 %v2379, %v2465
      %v2467 = vpop.f32.mrb[0].mxu0
      %2468 = vmatprep.mubr.bf16.mxu0 0
      %2469 = vmatmul.mubr.bf16.gmra.mrb[0].mxu0 %v2328
      %v2470 = vpop.f32.mrb[0].mxu0
      %v2471 = vadd.f32 %v2379, %v2470
      %v2472 = vpop.f32.mrb[0].mxu0
      %v2473 = vpop.f32.mrb[0].mxu0
      %v2474 = vadd.f32 %v2379, %v2473
      %v2475 = vpop.f32.mrb[0].mxu0
      %2476 = vmatprep.mubr.bf16.mxu0 0
      %2477 = vmatmul.mubr.bf16.gmra.mrb[0].mxu0 %v2329
      %v2478 = vpop.f32.mrb[0].mxu0
      %v2479 = vadd.f32 %v2379, %v2478
      %v2480 = vpop.f32.mrb[0].mxu0
      %v2481 = vpop.f32.mrb[0].mxu0
      %v2482 = vadd.f32 %v2379, %v2481
      %v2483 = vpop.f32.mrb[0].mxu0
      %2484 = vmatprep.mubr.bf16.mxu0 0
      %2485 = vmatmul.mubr.bf16.gmra.mrb[0].mxu0 %v2330
      %v2486 = vpop.f32.mrb[0].mxu0
      %v2487 = vadd.f32 %v2379, %v2486
      %v2488 = vpop.f32.mrb[0].mxu0
      %v2489 = vpop.f32.mrb[0].mxu0
      %v2490 = vadd.f32 %v2379, %v2489
      %v2491 = vpop.f32.mrb[0].mxu0
      %2492 = vmatprep.mubr.bf16.mxu0 0
      %2493 = vmatmul.mubr.bf16.gmra.mrb[0].mxu0 %v2331
      %v2494 = vpop.f32.mrb[0].mxu0
      %v2495 = vadd.f32 %v2379, %v2494
      %v2496 = vpop.f32.mrb[0].mxu0
      %v2497 = vpop.f32.mrb[0].mxu0
      %v2498 = vadd.f32 %v2379, %v2497
      %v2499 = vpop.f32.mrb[0].mxu0
      %2500 = vmatprep.mubr.bf16.mxu0 0
      %2501 = vmatmul.mubr.bf16.gmra.mrb[0].mxu0 %v2332
      %v2502 = vpop.f32.mrb[0].mxu0
      %v2503 = vadd.f32 %v2379, %v2502
      %v2504 = vpop.f32.mrb[0].mxu0
      %v2505 = vpop.f32.mrb[0].mxu0
      %v2506 = vadd.f32 %v2379, %v2505
      %v2507 = vpop.f32.mrb[0].mxu0
      %2508 = vmatprep.mubr.bf16.mxu0 0
      %2509 = vmatmul.mubr.bf16.gmra.mrb[0].mxu0 %v2333
      %v2510 = vpop.f32.mrb[0].mxu0
      %v2511 = vadd.f32 %v2379, %v2510
      %v2512 = vpop.f32.mrb[0].mxu0
      %v2513 = vpop.f32.mrb[0].mxu0
      %v2514 = vadd.f32 %v2379, %v2513
      %v2515 = vpop.f32.mrb[0].mxu0
      %2516 = vmatprep.mubr.bf16.mxu0 0
      %2517 = vmatmul.mubr.bf16.gmra.mrb[0].mxu0 %v2334
      %v2518 = vpop.f32.mrb[0].mxu0
      %v2519 = vadd.f32 %v2379, %v2518
      %v2520 = vpop.f32.mrb[0].mxu0
      %v2521 = vpop.f32.mrb[0].mxu0
      %v2522 = vadd.f32 %v2379, %v2521
      %v2523 = vpop.f32.mrb[0].mxu0
      %2524 = vmatprep.mubr.bf16.mxu0 0
      %2525 = vmatmul.mubr.bf16.gmra.mrb[0].mxu0 %v2335
      %v2526 = vpop.f32.mrb[0].mxu0
      %v2527 = vadd.f32 %v2379, %v2526
      %v2528 = vpop.f32.mrb[0].mxu0
      %v2529 = vpop.f32.mrb[0].mxu0
      %v2530 = vadd.f32 %v2379, %v2529
      %v2531 = vpop.f32.mrb[0].mxu0
      %2532 = vmatprep.mubr.bf16.mxu0 0
      %2533 = vmatmul.mubr.bf16.gmra.mrb[0].mxu0 %v2336
      %v2534 = vpop.f32.mrb[0].mxu0
      %v2535 = vadd.f32 %v2379, %v2534
      %v2536 = vpop.f32.mrb[0].mxu0
      %v2537 = vpop.f32.mrb[0].mxu0
      %v2538 = vadd.f32 %v2379, %v2537
      %v2539 = vpop.f32.mrb[0].mxu0
      %2540 = vmatprep.mubr.bf16.mxu0 0
      %2541 = vmatmul.mubr.bf16.gmra.mrb[0].mxu0 %v2337
      %v2542 = vpop.f32.mrb[0].mxu0
      %v2543 = vadd.f32 %v2379, %v2542
      %v2544 = vpop.f32.mrb[0].mxu0
      %v2545 = vpop.f32.mrb[0].mxu0
      %v2546 = vadd.f32 %v2379, %v2545
      %v2547 = vpop.f32.mrb[0].mxu0
      %2548 = vmatprep.mubr.bf16.mxu0 0
      %2549 = vmatmul.mubr.bf16.gmra.mrb[0].mxu0 %v2338
      %v2550 = vpop.f32.mrb[0].mxu0
      %v2551 = vadd.f32 %v2379, %v2550
      %v2552 = vpop.f32.mrb[0].mxu0
      %v2553 = vpop.f32.mrb[0].mxu0
      %v2554 = vadd.f32 %v2379, %v2553
      %v2555 = vpop.f32.mrb[0].mxu0
      %2556 = vmatprep.mubr.bf16.mxu0 0
      %2557 = vmatmul.mubr.bf16.gmra.mrb[0].mxu0 %v2339
      %v2558 = vpop.f32.mrb[0].mxu0
      %v2559 = vadd.f32 %v2379, %v2558
      %v2560 = vpop.f32.mrb[0].mxu0
      %v2561 = vpop.f32.mrb[0].mxu0
      %v2562 = vadd.f32 %v2379, %v2561
      %v2563 = vpop.f32.mrb[0].mxu0
      %2564 = vmatprep.mubr.bf16.mxu0 0
      %2565 = vmatmul.mubr.bf16.gmra.mrb[0].mxu0 %v2340
      %v2566 = vpop.f32.mrb[0].mxu0
      %v2567 = vadd.f32 %v2379, %v2566
      %v2568 = vpop.f32.mrb[0].mxu0
      %v2569 = vpop.f32.mrb[0].mxu0
      %v2570 = vadd.f32 %v2379, %v2569
      %v2571 = vpop.f32.mrb[0].mxu0
      %2572 = vmatprep.mubr.bf16.mxu0 0
      %2573 = vmatmul.mubr.bf16.gmra.mrb[0].mxu0 %v2341
      %v2574 = vpop.f32.mrb[0].mxu0
      %v2575 = vadd.f32 %v2379, %v2574
      %v2576 = vpop.f32.mrb[0].mxu0
      %v2577 = vpop.f32.mrb[0].mxu0
      %v2578 = vadd.f32 %v2379, %v2577
      %v2579 = vpop.f32.mrb[0].mxu0
      %2580 = vmatprep.mubr.bf16.mxu0 0
      %2581 = vmatmul.mubr.bf16.gmra.mrb[0].mxu0 %v2342
      %v2582 = vpop.f32.mrb[0].mxu0
      %v2583 = vadd.f32 %v2379, %v2582
      %v2584 = vpop.f32.mrb[0].mxu0
      %v2585 = vpop.f32.mrb[0].mxu0
      %v2586 = vadd.f32 %v2379, %v2585
      %v2587 = vpop.f32.mrb[0].mxu0
      %2588 = vmatprep.mubr.bf16.mxu0 0
      %2589 = vmatmul.mubr.bf16.gmra.mrb[0].mxu0 %v2343
      %v2590 = vpop.f32.mrb[0].mxu0
      %v2591 = vadd.f32 %v2379, %v2590
      %v2592 = vpop.f32.mrb[0].mxu0
      %v2593 = vpop.f32.mrb[0].mxu0
      %v2594 = vadd.f32 %v2379, %v2593
      %v2595 = vpop.f32.mrb[0].mxu0
      %2596 = vmatprep.mubr.bf16.mxu0 0
      %2597 = vmatmul.mubr.bf16.gmra.mrb[0].mxu0 %v2344
      %v2598 = vpop.f32.mrb[0].mxu0
      %v2599 = vadd.f32 %v2379, %v2598
      %v2600 = vpop.f32.mrb[0].mxu0
      %v2601 = vpop.f32.mrb[0].mxu0
      %v2602 = vadd.f32 %v2379, %v2601
      %v2603 = vpop.f32.mrb[0].mxu0
      %2604 = vmatprep.mubr.bf16.mxu0 0
      %2605 = vmatmul.mubr.bf16.gmra.mrb[0].mxu0 %v2345
      %v2606 = vpop.f32.mrb[0].mxu0
      %v2607 = vadd.f32 %v2379, %v2606
      %v2608 = vpop.f32.mrb[0].mxu0
      %v2609 = vpop.f32.mrb[0].mxu0
      %v2610 = vadd.f32 %v2379, %v2609
      %v2611 = vpop.f32.mrb[0].mxu0
      %2612 = vmatprep.mubr.bf16.mxu0 0
      %2613 = vmatmul.mubr.bf16.gmra.mrb[0].mxu0 %v2346
      %v2614 = vpop.f32.mrb[0].mxu0
      %v2615 = vadd.f32 %v2379, %v2614
      %v2616 = vpop.f32.mrb[0].mxu0
      %v2617 = vpop.f32.mrb[0].mxu0
      %v2618 = vadd.f32 %v2379, %v2617
      %v2619 = vpop.f32.mrb[0].mxu0
      %2620 = vmatprep.mubr.bf16.mxu0 0
      %2621 = vmatmul.mubr.bf16.gmra.mrb[0].mxu0 %v2347
      %v2622 = vpop.f32.mrb[0].mxu0
      %v2623 = vadd.f32 %v2379, %v2622
      %v2624 = vpop.f32.mrb[0].mxu0
      %v2625 = vpop.f32.mrb[0].mxu0
      %v2626 = vadd.f32 %v2379, %v2625
      %v2627 = vpop.f32.mrb[0].mxu0
      %2628 = vmatprep.mubr.bf16.mxu0 0
      %2629 = vmatmul.mubr.bf16.gmra.mrb[0].mxu0 %v2348
      %v2630 = vpop.f32.mrb[0].mxu0
      %v2631 = vadd.f32 %v2379, %v2630
      %v2632 = vpop.f32.mrb[0].mxu0
      %v2633 = vpop.f32.mrb[0].mxu0
      %v2634 = vadd.f32 %v2379, %v2633
      %v2635 = vpop.f32.mrb[0].mxu0
      %2636 = vmatprep.mubr.bf16.mxu0 0
      %2637 = vmatmul.mubr.bf16.gmra.mrb[0].mxu0 %v2349
      %v2638 = vpop.f32.mrb[0].mxu0
      %v2639 = vadd.f32 %v2379, %v2638
      %v2640 = vpop.f32.mrb[0].mxu0
      %v2641 = vpop.f32.mrb[0].mxu0
      %v2642 = vadd.f32 %v2379, %v2641
      %v2643 = vpop.f32.mrb[0].mxu0
      %2644 = vmatprep.mubr.bf16.mxu0 0
      %2645 = vmatmul.mubr.bf16.gmra.mrb[0].mxu0 %v2350
      %v2646 = vpop.f32.mrb[0].mxu0
      %v2647 = vadd.f32 %v2379, %v2646
      %v2648 = vpop.f32.mrb[0].mxu0
      %v2649 = vpop.f32.mrb[0].mxu0
      %v2650 = vadd.f32 %v2379, %v2649
      %v2651 = vpop.f32.mrb[0].mxu0
      %2652 = vmatprep.mubr.bf16.mxu0 0
      %2653 = vmatmul.mubr.bf16.gmra.mrb[0].mxu0 %v2351
      %v2654 = vpop.f32.mrb[0].mxu0
      %v2655 = vadd.f32 %v2379, %v2654
      %v2656 = vpop.f32.mrb[0].mxu0
      %v2657 = vpop.f32.mrb[0].mxu0
      %v2658 = vadd.f32 %v2379, %v2657
      %v2659 = vpop.f32.mrb[0].mxu0
      %2660 = vmatprep.mubr.bf16.mxu0 0
      %2661 = vmatmul.mubr.bf16.gmra.mrb[0].mxu0 %v2352
      %v2662 = vpop.f32.mrb[0].mxu0
      %v2663 = vadd.f32 %v2379, %v2662
      %v2664 = vpop.f32.mrb[0].mxu0
      %v2665 = vpop.f32.mrb[0].mxu0
      %v2666 = vadd.f32 %v2379, %v2665
      %v2667 = vpop.f32.mrb[0].mxu0
      %2668 = vmatprep.mubr.bf16.mxu0 0
      %2669 = vmatmul.mubr.bf16.gmra.mrb[0].mxu0 %v2353
      %v2670 = vpop.f32.mrb[0].mxu0
      %v2671 = vadd.f32 %v2379, %v2670
      %v2672 = vpop.f32.mrb[0].mxu0
      %v2673 = vpop.f32.mrb[0].mxu0
      %v2674 = vadd.f32 %v2379, %v2673
      %v2675 = vpop.f32.mrb[0].mxu0
      %2676 = vmatprep.mubr.bf16.mxu0 0
      %2677 = vmatmul.mubr.bf16.gmra.mrb[0].mxu0 %v2354
      %v2678 = vpop.f32.mrb[0].mxu0
      %v2679 = vadd.f32 %v2379, %v2678
      %v2680 = vpop.f32.mrb[0].mxu0
      %v2681 = vpop.f32.mrb[0].mxu0
      %v2682 = vadd.f32 %v2379, %v2681
      %v2683 = vpop.f32.mrb[0].mxu0
      %2684 = vmatprep.mubr.bf16.mxu0 0
      %2685 = vmatmul.mubr.bf16.gmra.mrb[0].mxu0 %v2355
      %v2686 = vpop.f32.mrb[0].mxu0
      %v2687 = vadd.f32 %v2379, %v2686
      %v2688 = vpop.f32.mrb[0].mxu0
      %v2689 = vpop.f32.mrb[0].mxu0
      %v2690 = vadd.f32 %v2379, %v2689
      %v2691 = vpop.f32.mrb[0].mxu0
      %2692 = vmatprep.mubr.bf16.mxu0 0
      %2693 = vmatmul.mubr.bf16.gmra.mrb[0].mxu0 %v2356
      %v2694 = vpop.f32.mrb[0].mxu0
      %v2695 = vadd.f32 %v2379, %v2694
      %v2696 = vpop.f32.mrb[0].mxu0
      %v2697 = vpop.f32.mrb[0].mxu0
      %v2698 = vadd.f32 %v2379, %v2697
      %v2699 = vpop.f32.mrb[0].mxu0
      %2700 = vmatprep.mubr.bf16.mxu0 0
      %2701 = vmatmul.mubr.bf16.gmra.mrb[0].mxu0 %v2357
      %v2702 = vpop.f32.mrb[0].mxu0
      %v2703 = vadd.f32 %v2379, %v2702
      %v2704 = vpop.f32.mrb[0].mxu0
      %v2705 = vpop.f32.mrb[0].mxu0
      %v2706 = vadd.f32 %v2379, %v2705
      %v2707 = vpop.f32.mrb[0].mxu0
      %2708 = vmatprep.mubr.bf16.mxu0 0
      %2709 = vmatmul.mubr.bf16.gmra.mrb[0].mxu0 %v2358
      %v2710 = vpop.f32.mrb[0].mxu0
      %v2711 = vadd.f32 %v2379, %v2710
      %v2712 = vpop.f32.mrb[0].mxu0
      %v2713 = vpop.f32.mrb[0].mxu0
      %v2714 = vadd.f32 %v2379, %v2713
      %v2715 = vpop.f32.mrb[0].mxu0
      %2716 = vdwg.mxu0
      %v2717 = vmax.f32 %v2463, 0.0
      %v2718 = vmax.f32 %v2466, 0.0
      %v2719 = vmax.f32 %v2471, 0.0
      %v2720 = vmax.f32 %v2474, 0.0
      %v2721 = vmax.f32 %v2479, 0.0
      %v2722 = vmax.f32 %v2482, 0.0
      %v2723 = vmax.f32 %v2487, 0.0
      %v2724 = vmax.f32 %v2490, 0.0
      %v2725 = vmax.f32 %v2495, 0.0
      %v2726 = vmax.f32 %v2498, 0.0
      %v2727 = vmax.f32 %v2503, 0.0
      %v2728 = vmax.f32 %v2506, 0.0
      %v2729 = vmax.f32 %v2511, 0.0
      %v2730 = vmax.f32 %v2514, 0.0
      %v2731 = vmax.f32 %v2519, 0.0
      %v2732 = vmax.f32 %v2522, 0.0
      %v2733 = vmax.f32 %v2527, 0.0
      %v2734 = vmax.f32 %v2530, 0.0
      %v2735 = vmax.f32 %v2535, 0.0
      %v2736 = vmax.f32 %v2538, 0.0
      %v2737 = vmax.f32 %v2543, 0.0
      %v2738 = vmax.f32 %v2546, 0.0
      %v2739 = vmax.f32 %v2551, 0.0
      %v2740 = vmax.f32 %v2554, 0.0
      %v2741 = vmax.f32 %v2559, 0.0
      %v2742 = vmax.f32 %v2562, 0.0
      %v2743 = vmax.f32 %v2567, 0.0
      %v2744 = vmax.f32 %v2570, 0.0
      %v2745 = vmax.f32 %v2575, 0.0
      %v2746 = vmax.f32 %v2578, 0.0
      %v2747 = vmax.f32 %v2583, 0.0
      %v2748 = vmax.f32 %v2586, 0.0
      %v2749 = vmax.f32 %v2591, 0.0
      %v2750 = vmax.f32 %v2594, 0.0
      %v2751 = vmax.f32 %v2599, 0.0
      %v2752 = vmax.f32 %v2602, 0.0
      %v2753 = vmax.f32 %v2607, 0.0
      %v2754 = vmax.f32 %v2610, 0.0
      %v2755 = vmax.f32 %v2615, 0.0
      %v2756 = vmax.f32 %v2618, 0.0
      %v2757 = vmax.f32 %v2623, 0.0
      %v2758 = vmax.f32 %v2626, 0.0
      %v2759 = vmax.f32 %v2631, 0.0
      %v2760 = vmax.f32 %v2634, 0.0
      %v2761 = vmax.f32 %v2639, 0.0
      %v2762 = vmax.f32 %v2642, 0.0
      %v2763 = vmax.f32 %v2647, 0.0
      %v2764 = vmax.f32 %v2650, 0.0
      %v2765 = vmax.f32 %v2655, 0.0
      %v2766 = vmax.f32 %v2658, 0.0
      %v2767 = vmax.f32 %v2663, 0.0
      %v2768 = vmax.f32 %v2666, 0.0
      %v2769 = vmax.f32 %v2671, 0.0
      %v2770 = vmax.f32 %v2674, 0.0
      %v2771 = vmax.f32 %v2679, 0.0
      %v2772 = vmax.f32 %v2682, 0.0
      %v2773 = vmax.f32 %v2687, 0.0
      %v2774 = vmax.f32 %v2690, 0.0
      %v2775 = vmax.f32 %v2695, 0.0
      %v2776 = vmax.f32 %v2698, 0.0
      %v2777 = vmax.f32 %v2703, 0.0
      %v2778 = vmax.f32 %v2706, 0.0
      %v2779 = vmax.f32 %v2711, 0.0
      %v2780 = vmax.f32 %v2714, 0.0
      %v2781 = vpack.c.bf16 %v2718, %v2717
      %v2782 = vpack.c.bf16 %v2720, %v2719
      %v2783 = vpack.c.bf16 %v2722, %v2721
      %v2784 = vpack.c.bf16 %v2724, %v2723
      %v2785 = vpack.c.bf16 %v2726, %v2725
      %v2786 = vpack.c.bf16 %v2728, %v2727
      %v2787 = vpack.c.bf16 %v2730, %v2729
      %v2788 = vpack.c.bf16 %v2732, %v2731
      %v2789 = vpack.c.bf16 %v2734, %v2733
      %v2790 = vpack.c.bf16 %v2736, %v2735
      %v2791 = vpack.c.bf16 %v2738, %v2737
      %v2792 = vpack.c.bf16 %v2740, %v2739
      %v2793 = vpack.c.bf16 %v2742, %v2741
      %v2794 = vpack.c.bf16 %v2744, %v2743
      %v2795 = vpack.c.bf16 %v2746, %v2745
      %v2796 = vpack.c.bf16 %v2748, %v2747
      %v2797 = vpack.c.bf16 %v2750, %v2749
      %v2798 = vpack.c.bf16 %v2752, %v2751
      %v2799 = vpack.c.bf16 %v2754, %v2753
      %v2800 = vpack.c.bf16 %v2756, %v2755
      %v2801 = vpack.c.bf16 %v2758, %v2757
      %v2802 = vpack.c.bf16 %v2760, %v2759
      %v2803 = vpack.c.bf16 %v2762, %v2761
      %v2804 = vpack.c.bf16 %v2764, %v2763
      %v2805 = vpack.c.bf16 %v2766, %v2765
      %v2806 = vpack.c.bf16 %v2768, %v2767
      %v2807 = vpack.c.bf16 %v2770, %v2769
      %v2808 = vpack.c.bf16 %v2772, %v2771
      %v2809 = vpack.c.bf16 %v2774, %v2773
      %v2810 = vpack.c.bf16 %v2776, %v2775
      %v2811 = vpack.c.bf16 %v2778, %v2777
      %v2812 = vpack.c.bf16 %v2780, %v2779
      %v2813 = vld [vmem:[%s6] sm:$0xff]
      %v2814 = vld [vmem:[%s6 + $0x8] sm:$0xff]
      %v2815 = vld [vmem:[%s6 + $0x10] sm:$0xff]
      %v2816 = vld [vmem:[%s6 + $0x18] sm:$0xff]
      %v2817 = vld [vmem:[%s6 + $0x20] sm:$0xff]
      %v2818 = vld [vmem:[%s6 + $0x28] sm:$0xff]
      %v2819 = vld [vmem:[%s6 + $0x30] sm:$0xff]
      %v2820 = vld [vmem:[%s6 + $0x38] sm:$0xff]
      %v2821 = vld [vmem:[%s6 + $0x40] sm:$0xff]
      %v2822 = vld [vmem:[%s6 + $0x48] sm:$0xff]
      %v2823 = vld [vmem:[%s6 + $0x50] sm:$0xff]
      %v2824 = vld [vmem:[%s6 + $0x58] sm:$0xff]
      %v2825 = vld [vmem:[%s6 + $0x60] sm:$0xff]
      %v2826 = vld [vmem:[%s6 + $0x68] sm:$0xff]
      %v2827 = vld [vmem:[%s6 + $0x70] sm:$0xff]
      %v2828 = vld [vmem:[%s6 + $0x78] sm:$0xff]
      %v2829 = vlaneseq
      %v2830 = vshrl.u32 %v2829, 7
      %v2831 = vsub.s32 1, %v2830
      %v2832 = vrot.slane %v608, %v2831
      %v2833 = vlaneseq
      %v2834 = vshrl.u32 %v2833, 7
      %v2835 = vsub.s32 3, %v2834
      %v2836 = vrot.slane %v608, %v2835
      %v2839 = vlaneseq
      %v2840 = vshrl.u32 %v2839, 7
      %v2841 = vsub.s32 1, %v2840
      %v2842 = vrot.slane %v2832, %v2841
      %v2843 = vlaneseq
      %v2844 = vshrl.u32 %v2843, 7
      %v2845 = vsub.s32 1, %v2844
      %v2846 = vrot.slane %v2836, %v2845
      %v2863 = vunpack.c.l.b16 %v2813
      %v2864 = vunpack.c.h.b16 %v2813
      %v2865 = vunpack.c.l.b16 %v2814
      %v2866 = vunpack.c.h.b16 %v2814
      %v2867 = vunpack.c.l.b16 %v2815
      %v2868 = vunpack.c.h.b16 %v2815
      %v2869 = vunpack.c.l.b16 %v2816
      %v2870 = vunpack.c.h.b16 %v2816
      %v2871 = vunpack.c.l.b16 %v2817
      %v2872 = vunpack.c.h.b16 %v2817
      %v2873 = vunpack.c.l.b16 %v2818
      %v2874 = vunpack.c.h.b16 %v2818
      %v2875 = vunpack.c.l.b16 %v2819
      %v2876 = vunpack.c.h.b16 %v2819
      %v2877 = vunpack.c.l.b16 %v2820
      %v2878 = vunpack.c.h.b16 %v2820
      %v2879 = vunpack.c.l.b16 %v2821
      %v2880 = vunpack.c.h.b16 %v2821
      %v2881 = vunpack.c.l.b16 %v2822
      %v2882 = vunpack.c.h.b16 %v2822
      %v2883 = vunpack.c.l.b16 %v2823
      %v2884 = vunpack.c.h.b16 %v2823
      %v2885 = vunpack.c.l.b16 %v2824
      %v2886 = vunpack.c.h.b16 %v2824
      %v2887 = vunpack.c.l.b16 %v2825
      %v2888 = vunpack.c.h.b16 %v2825
      %v2889 = vunpack.c.l.b16 %v2826
      %v2890 = vunpack.c.h.b16 %v2826
      %v2891 = vunpack.c.l.b16 %v2827
      %v2892 = vunpack.c.h.b16 %v2827
      %v2893 = vunpack.c.l.b16 %v2828
      %v2894 = vunpack.c.h.b16 %v2828
      %v2895 = vpack.c.b16 %v2865, %v2863
      %v2896 = vpack.c.b16 %v2866, %v2864
      %v2897 = vpack.c.b16 %v2869, %v2867
      %v2898 = vpack.c.b16 %v2870, %v2868
      %v2899 = vpack.c.b16 %v2873, %v2871
      %v2900 = vpack.c.b16 %v2874, %v2872
      %v2901 = vpack.c.b16 %v2877, %v2875
      %v2902 = vpack.c.b16 %v2878, %v2876
      %v2903 = vpack.c.b16 %v2881, %v2879
      %v2904 = vpack.c.b16 %v2882, %v2880
      %v2905 = vpack.c.b16 %v2885, %v2883
      %v2906 = vpack.c.b16 %v2886, %v2884
      %v2907 = vpack.c.b16 %v2889, %v2887
      %v2908 = vpack.c.b16 %v2890, %v2888
      %v2909 = vpack.c.b16 %v2893, %v2891
      %v2910 = vpack.c.b16 %v2894, %v2892
      %2927 = vmatprep.subr.bf16.mxu0 %v2896
      %2928 = vmatpush1.bf16.msra.mxu0 %v2895
      %2929 = vmatprep.subr.bf16.mxu0 %v2898
      %2930 = vmatpush1.bf16.msra.mxu0 %v2897
      %2931 = vmatprep.subr.bf16.mxu0 %v2900
      %2932 = vmatpush1.bf16.msra.mxu0 %v2899
      %2933 = vmatprep.subr.bf16.mxu0 %v2902
      %2934 = vmatpush1.bf16.msra.mxu0 %v2901
      %2935 = vmatprep.subr.bf16.mxu0 %v2904
      %2936 = vmatpush1.bf16.msra.mxu0 %v2903
      %2937 = vmatprep.subr.bf16.mxu0 %v2906
      %2938 = vmatpush1.bf16.msra.mxu0 %v2905
      %2939 = vmatprep.subr.bf16.mxu0 %v2908
      %2940 = vmatpush1.bf16.msra.mxu0 %v2907
      %2941 = vmatprep.subr.bf16.mxu0 %v2910
      %2942 = vmatpush1.bf16.msra.mxu0 %v2909
      %2943 = vmatprep.subr.bf16.mxu0 0
      %2944 = vmatpush1.bf16.msra.mxu0 0
      %2945 = vmatprep.subr.bf16.mxu0 0
      %2946 = vmatpush1.bf16.msra.mxu0 0
      %2947 = vmatprep.subr.bf16.mxu0 0
      %2948 = vmatpush1.bf16.msra.mxu0 0
      %2949 = vmatprep.subr.bf16.mxu0 0
      %2950 = vmatpush1.bf16.msra.mxu0 0
      %2951 = vmatprep.subr.bf16.mxu0 0
      %2952 = vmatpush1.bf16.msra.mxu0 0
      %2953 = vmatprep.subr.bf16.mxu0 0
      %2954 = vmatpush1.bf16.msra.mxu0 0
      %2955 = vmatprep.subr.bf16.mxu0 0
      %2956 = vmatpush1.bf16.msra.mxu0 0
      %2957 = vmatprep.subr.bf16.mxu0 0
      %2958 = vmatpush1.bf16.msra.mxu0 0
      %2959 = vmatprep.mubr.bf16.mxu0 0
      %2960 = vmatmul.mubr.bf16.gmra.mrb[0].mxu0 %v2781
      %v2961 = vpop.f32.mrb[0].mxu0
      %v2962 = vadd.f32 %v2842, %v2961
      %v2963 = vpop.f32.mrb[0].mxu0
      %v2964 = vadd.f32 %v2846, %v2963
      %v2965 = vpop.f32.mrb[0].mxu0
      %v2966 = vadd.f32 %v2842, %v2965
      %v2967 = vpop.f32.mrb[0].mxu0
      %v2968 = vadd.f32 %v2846, %v2967
      %2969 = vmatprep.mubr.bf16.mxu0 0
      %2970 = vmatmul.mubr.bf16.gmra.mrb[0].mxu0 %v2782
      %v2971 = vpop.f32.mrb[0].mxu0
      %v2972 = vadd.f32 %v2842, %v2971
      %v2973 = vpop.f32.mrb[0].mxu0
      %v2974 = vadd.f32 %v2846, %v2973
      %v2975 = vpop.f32.mrb[0].mxu0
      %v2976 = vadd.f32 %v2842, %v2975
      %v2977 = vpop.f32.mrb[0].mxu0
      %v2978 = vadd.f32 %v2846, %v2977
      %2979 = vmatprep.mubr.bf16.mxu0 0
      %2980 = vmatmul.mubr.bf16.gmra.mrb[0].mxu0 %v2783
      %v2981 = vpop.f32.mrb[0].mxu0
      %v2982 = vadd.f32 %v2842, %v2981
      %v2983 = vpop.f32.mrb[0].mxu0
      %v2984 = vadd.f32 %v2846, %v2983
      %v2985 = vpop.f32.mrb[0].mxu0
      %v2986 = vadd.f32 %v2842, %v2985
      %v2987 = vpop.f32.mrb[0].mxu0
      %v2988 = vadd.f32 %v2846, %v2987
      %2989 = vmatprep.mubr.bf16.mxu0 0
      %2990 = vmatmul.mubr.bf16.gmra.mrb[0].mxu0 %v2784
      %v2991 = vpop.f32.mrb[0].mxu0
      %v2992 = vadd.f32 %v2842, %v2991
      %v2993 = vpop.f32.mrb[0].mxu0
      %v2994 = vadd.f32 %v2846, %v2993
      %v2995 = vpop.f32.mrb[0].mxu0
      %v2996 = vadd.f32 %v2842, %v2995
      %v2997 = vpop.f32.mrb[0].mxu0
      %v2998 = vadd.f32 %v2846, %v2997
      %2999 = vmatprep.mubr.bf16.mxu0 0
      %3000 = vmatmul.mubr.bf16.gmra.mrb[0].mxu0 %v2785
      %v3001 = vpop.f32.mrb[0].mxu0
      %v3002 = vadd.f32 %v2842, %v3001
      %v3003 = vpop.f32.mrb[0].mxu0
      %v3004 = vadd.f32 %v2846, %v3003
      %v3005 = vpop.f32.mrb[0].mxu0
      %v3006 = vadd.f32 %v2842, %v3005
      %v3007 = vpop.f32.mrb[0].mxu0
      %v3008 = vadd.f32 %v2846, %v3007
      %3009 = vmatprep.mubr.bf16.mxu0 0
      %3010 = vmatmul.mubr.bf16.gmra.mrb[0].mxu0 %v2786
      %v3011 = vpop.f32.mrb[0].mxu0
      %v3012 = vadd.f32 %v2842, %v3011
      %v3013 = vpop.f32.mrb[0].mxu0
      %v3014 = vadd.f32 %v2846, %v3013
      %v3015 = vpop.f32.mrb[0].mxu0
      %v3016 = vadd.f32 %v2842, %v3015
      %v3017 = vpop.f32.mrb[0].mxu0
      %v3018 = vadd.f32 %v2846, %v3017
      %3019 = vmatprep.mubr.bf16.mxu0 0
      %3020 = vmatmul.mubr.bf16.gmra.mrb[0].mxu0 %v2787
      %v3021 = vpop.f32.mrb[0].mxu0
      %v3022 = vadd.f32 %v2842, %v3021
      %v3023 = vpop.f32.mrb[0].mxu0
      %v3024 = vadd.f32 %v2846, %v3023
      %v3025 = vpop.f32.mrb[0].mxu0
      %v3026 = vadd.f32 %v2842, %v3025
      %v3027 = vpop.f32.mrb[0].mxu0
      %v3028 = vadd.f32 %v2846, %v3027
      %3029 = vmatprep.mubr.bf16.mxu0 0
      %3030 = vmatmul.mubr.bf16.gmra.mrb[0].mxu0 %v2788
      %v3031 = vpop.f32.mrb[0].mxu0
      %v3032 = vadd.f32 %v2842, %v3031
      %v3033 = vpop.f32.mrb[0].mxu0
      %v3034 = vadd.f32 %v2846, %v3033
      %v3035 = vpop.f32.mrb[0].mxu0
      %v3036 = vadd.f32 %v2842, %v3035
      %v3037 = vpop.f32.mrb[0].mxu0
      %v3038 = vadd.f32 %v2846, %v3037
      %3039 = vmatprep.mubr.bf16.mxu0 0
      %3040 = vmatmul.mubr.bf16.gmra.mrb[0].mxu0 %v2789
      %v3041 = vpop.f32.mrb[0].mxu0
      %v3042 = vadd.f32 %v2842, %v3041
      %v3043 = vpop.f32.mrb[0].mxu0
      %v3044 = vadd.f32 %v2846, %v3043
      %v3045 = vpop.f32.mrb[0].mxu0
      %v3046 = vadd.f32 %v2842, %v3045
      %v3047 = vpop.f32.mrb[0].mxu0
      %v3048 = vadd.f32 %v2846, %v3047
      %3049 = vmatprep.mubr.bf16.mxu0 0
      %3050 = vmatmul.mubr.bf16.gmra.mrb[0].mxu0 %v2790
      %v3051 = vpop.f32.mrb[0].mxu0
      %v3052 = vadd.f32 %v2842, %v3051
      %v3053 = vpop.f32.mrb[0].mxu0
      %v3054 = vadd.f32 %v2846, %v3053
      %v3055 = vpop.f32.mrb[0].mxu0
      %v3056 = vadd.f32 %v2842, %v3055
      %v3057 = vpop.f32.mrb[0].mxu0
      %v3058 = vadd.f32 %v2846, %v3057
      %3059 = vmatprep.mubr.bf16.mxu0 0
      %3060 = vmatmul.mubr.bf16.gmra.mrb[0].mxu0 %v2791
      %v3061 = vpop.f32.mrb[0].mxu0
      %v3062 = vadd.f32 %v2842, %v3061
      %v3063 = vpop.f32.mrb[0].mxu0
      %v3064 = vadd.f32 %v2846, %v3063
      %v3065 = vpop.f32.mrb[0].mxu0
      %v3066 = vadd.f32 %v2842, %v3065
      %v3067 = vpop.f32.mrb[0].mxu0
      %v3068 = vadd.f32 %v2846, %v3067
      %3069 = vmatprep.mubr.bf16.mxu0 0
      %3070 = vmatmul.mubr.bf16.gmra.mrb[0].mxu0 %v2792
      %v3071 = vpop.f32.mrb[0].mxu0
      %v3072 = vadd.f32 %v2842, %v3071
      %v3073 = vpop.f32.mrb[0].mxu0
      %v3074 = vadd.f32 %v2846, %v3073
      %v3075 = vpop.f32.mrb[0].mxu0
      %v3076 = vadd.f32 %v2842, %v3075
      %v3077 = vpop.f32.mrb[0].mxu0
      %v3078 = vadd.f32 %v2846, %v3077
      %3079 = vmatprep.mubr.bf16.mxu0 0
      %3080 = vmatmul.mubr.bf16.gmra.mrb[0].mxu0 %v2793
      %v3081 = vpop.f32.mrb[0].mxu0
      %v3082 = vadd.f32 %v2842, %v3081
      %v3083 = vpop.f32.mrb[0].mxu0
      %v3084 = vadd.f32 %v2846, %v3083
      %v3085 = vpop.f32.mrb[0].mxu0
      %v3086 = vadd.f32 %v2842, %v3085
      %v3087 = vpop.f32.mrb[0].mxu0
      %v3088 = vadd.f32 %v2846, %v3087
      %3089 = vmatprep.mubr.bf16.mxu0 0
      %3090 = vmatmul.mubr.bf16.gmra.mrb[0].mxu0 %v2794
      %v3091 = vpop.f32.mrb[0].mxu0
      %v3092 = vadd.f32 %v2842, %v3091
      %v3093 = vpop.f32.mrb[0].mxu0
      %v3094 = vadd.f32 %v2846, %v3093
      %v3095 = vpop.f32.mrb[0].mxu0
      %v3096 = vadd.f32 %v2842, %v3095
      %v3097 = vpop.f32.mrb[0].mxu0
      %v3098 = vadd.f32 %v2846, %v3097
      %3099 = vmatprep.mubr.bf16.mxu0 0
      %3100 = vmatmul.mubr.bf16.gmra.mrb[0].mxu0 %v2795
      %v3101 = vpop.f32.mrb[0].mxu0
      %v3102 = vadd.f32 %v2842, %v3101
      %v3103 = vpop.f32.mrb[0].mxu0
      %v3104 = vadd.f32 %v2846, %v3103
      %v3105 = vpop.f32.mrb[0].mxu0
      %v3106 = vadd.f32 %v2842, %v3105
      %v3107 = vpop.f32.mrb[0].mxu0
      %v3108 = vadd.f32 %v2846, %v3107
      %3109 = vmatprep.mubr.bf16.mxu0 0
      %3110 = vmatmul.mubr.bf16.gmra.mrb[0].mxu0 %v2796
      %v3111 = vpop.f32.mrb[0].mxu0
      %v3112 = vadd.f32 %v2842, %v3111
      %v3113 = vpop.f32.mrb[0].mxu0
      %v3114 = vadd.f32 %v2846, %v3113
      %v3115 = vpop.f32.mrb[0].mxu0
      %v3116 = vadd.f32 %v2842, %v3115
      %v3117 = vpop.f32.mrb[0].mxu0
      %v3118 = vadd.f32 %v2846, %v3117
      %3119 = vmatprep.mubr.bf16.mxu0 0
      %3120 = vmatmul.mubr.bf16.gmra.mrb[0].mxu0 %v2797
      %v3121 = vpop.f32.mrb[0].mxu0
      %v3122 = vadd.f32 %v2842, %v3121
      %v3123 = vpop.f32.mrb[0].mxu0
      %v3124 = vadd.f32 %v2846, %v3123
      %v3125 = vpop.f32.mrb[0].mxu0
      %v3126 = vadd.f32 %v2842, %v3125
      %v3127 = vpop.f32.mrb[0].mxu0
      %v3128 = vadd.f32 %v2846, %v3127
      %3129 = vmatprep.mubr.bf16.mxu0 0
      %3130 = vmatmul.mubr.bf16.gmra.mrb[0].mxu0 %v2798
      %v3131 = vpop.f32.mrb[0].mxu0
      %v3132 = vadd.f32 %v2842, %v3131
      %v3133 = vpop.f32.mrb[0].mxu0
      %v3134 = vadd.f32 %v2846, %v3133
      %v3135 = vpop.f32.mrb[0].mxu0
      %v3136 = vadd.f32 %v2842, %v3135
      %v3137 = vpop.f32.mrb[0].mxu0
      %v3138 = vadd.f32 %v2846, %v3137
      %3139 = vmatprep.mubr.bf16.mxu0 0
      %3140 = vmatmul.mubr.bf16.gmra.mrb[0].mxu0 %v2799
      %v3141 = vpop.f32.mrb[0].mxu0
      %v3142 = vadd.f32 %v2842, %v3141
      %v3143 = vpop.f32.mrb[0].mxu0
      %v3144 = vadd.f32 %v2846, %v3143
      %v3145 = vpop.f32.mrb[0].mxu0
      %v3146 = vadd.f32 %v2842, %v3145
      %v3147 = vpop.f32.mrb[0].mxu0
      %v3148 = vadd.f32 %v2846, %v3147
      %3149 = vmatprep.mubr.bf16.mxu0 0
      %3150 = vmatmul.mubr.bf16.gmra.mrb[0].mxu0 %v2800
      %v3151 = vpop.f32.mrb[0].mxu0
      %v3152 = vadd.f32 %v2842, %v3151
      %v3153 = vpop.f32.mrb[0].mxu0
      %v3154 = vadd.f32 %v2846, %v3153
      %v3155 = vpop.f32.mrb[0].mxu0
      %v3156 = vadd.f32 %v2842, %v3155
      %v3157 = vpop.f32.mrb[0].mxu0
      %v3158 = vadd.f32 %v2846, %v3157
      %3159 = vmatprep.mubr.bf16.mxu0 0
      %3160 = vmatmul.mubr.bf16.gmra.mrb[0].mxu0 %v2801
      %v3161 = vpop.f32.mrb[0].mxu0
      %v3162 = vadd.f32 %v2842, %v3161
      %v3163 = vpop.f32.mrb[0].mxu0
      %v3164 = vadd.f32 %v2846, %v3163
      %v3165 = vpop.f32.mrb[0].mxu0
      %v3166 = vadd.f32 %v2842, %v3165
      %v3167 = vpop.f32.mrb[0].mxu0
      %v3168 = vadd.f32 %v2846, %v3167
      %3169 = vmatprep.mubr.bf16.mxu0 0
      %3170 = vmatmul.mubr.bf16.gmra.mrb[0].mxu0 %v2802
      %v3171 = vpop.f32.mrb[0].mxu0
      %v3172 = vadd.f32 %v2842, %v3171
      %v3173 = vpop.f32.mrb[0].mxu0
      %v3174 = vadd.f32 %v2846, %v3173
      %v3175 = vpop.f32.mrb[0].mxu0
      %v3176 = vadd.f32 %v2842, %v3175
      %v3177 = vpop.f32.mrb[0].mxu0
      %v3178 = vadd.f32 %v2846, %v3177
      %3179 = vmatprep.mubr.bf16.mxu0 0
      %3180 = vmatmul.mubr.bf16.gmra.mrb[0].mxu0 %v2803
      %v3181 = vpop.f32.mrb[0].mxu0
      %v3182 = vadd.f32 %v2842, %v3181
      %v3183 = vpop.f32.mrb[0].mxu0
      %v3184 = vadd.f32 %v2846, %v3183
      %v3185 = vpop.f32.mrb[0].mxu0
      %v3186 = vadd.f32 %v2842, %v3185
      %v3187 = vpop.f32.mrb[0].mxu0
      %v3188 = vadd.f32 %v2846, %v3187
      %3189 = vmatprep.mubr.bf16.mxu0 0
      %3190 = vmatmul.mubr.bf16.gmra.mrb[0].mxu0 %v2804
      %v3191 = vpop.f32.mrb[0].mxu0
      %v3192 = vadd.f32 %v2842, %v3191
      %v3193 = vpop.f32.mrb[0].mxu0
      %v3194 = vadd.f32 %v2846, %v3193
      %v3195 = vpop.f32.mrb[0].mxu0
      %v3196 = vadd.f32 %v2842, %v3195
      %v3197 = vpop.f32.mrb[0].mxu0
      %v3198 = vadd.f32 %v2846, %v3197
      %3199 = vmatprep.mubr.bf16.mxu0 0
      %3200 = vmatmul.mubr.bf16.gmra.mrb[0].mxu0 %v2805
      %v3201 = vpop.f32.mrb[0].mxu0
      %v3202 = vadd.f32 %v2842, %v3201
      %v3203 = vpop.f32.mrb[0].mxu0
      %v3204 = vadd.f32 %v2846, %v3203
      %v3205 = vpop.f32.mrb[0].mxu0
      %v3206 = vadd.f32 %v2842, %v3205
      %v3207 = vpop.f32.mrb[0].mxu0
      %v3208 = vadd.f32 %v2846, %v3207
      %3209 = vmatprep.mubr.bf16.mxu0 0
      %3210 = vmatmul.mubr.bf16.gmra.mrb[0].mxu0 %v2806
      %v3211 = vpop.f32.mrb[0].mxu0
      %v3212 = vadd.f32 %v2842, %v3211
      %v3213 = vpop.f32.mrb[0].mxu0
      %v3214 = vadd.f32 %v2846, %v3213
      %v3215 = vpop.f32.mrb[0].mxu0
      %v3216 = vadd.f32 %v2842, %v3215
      %v3217 = vpop.f32.mrb[0].mxu0
      %v3218 = vadd.f32 %v2846, %v3217
      %3219 = vmatprep.mubr.bf16.mxu0 0
      %3220 = vmatmul.mubr.bf16.gmra.mrb[0].mxu0 %v2807
      %v3221 = vpop.f32.mrb[0].mxu0
      %v3222 = vadd.f32 %v2842, %v3221
      %v3223 = vpop.f32.mrb[0].mxu0
      %v3224 = vadd.f32 %v2846, %v3223
      %v3225 = vpop.f32.mrb[0].mxu0
      %v3226 = vadd.f32 %v2842, %v3225
      %v3227 = vpop.f32.mrb[0].mxu0
      %v3228 = vadd.f32 %v2846, %v3227
      %3229 = vmatprep.mubr.bf16.mxu0 0
      %3230 = vmatmul.mubr.bf16.gmra.mrb[0].mxu0 %v2808
      %v3231 = vpop.f32.mrb[0].mxu0
      %v3232 = vadd.f32 %v2842, %v3231
      %v3233 = vpop.f32.mrb[0].mxu0
      %v3234 = vadd.f32 %v2846, %v3233
      %v3235 = vpop.f32.mrb[0].mxu0
      %v3236 = vadd.f32 %v2842, %v3235
      %v3237 = vpop.f32.mrb[0].mxu0
      %v3238 = vadd.f32 %v2846, %v3237
      %3239 = vmatprep.mubr.bf16.mxu0 0
      %3240 = vmatmul.mubr.bf16.gmra.mrb[0].mxu0 %v2809
      %v3241 = vpop.f32.mrb[0].mxu0
      %v3242 = vadd.f32 %v2842, %v3241
      %v3243 = vpop.f32.mrb[0].mxu0
      %v3244 = vadd.f32 %v2846, %v3243
      %v3245 = vpop.f32.mrb[0].mxu0
      %v3246 = vadd.f32 %v2842, %v3245
      %v3247 = vpop.f32.mrb[0].mxu0
      %v3248 = vadd.f32 %v2846, %v3247
      %3249 = vmatprep.mubr.bf16.mxu0 0
      %3250 = vmatmul.mubr.bf16.gmra.mrb[0].mxu0 %v2810
      %v3251 = vpop.f32.mrb[0].mxu0
      %v3252 = vadd.f32 %v2842, %v3251
      %v3253 = vpop.f32.mrb[0].mxu0
      %v3254 = vadd.f32 %v2846, %v3253
      %v3255 = vpop.f32.mrb[0].mxu0
      %v3256 = vadd.f32 %v2842, %v3255
      %v3257 = vpop.f32.mrb[0].mxu0
      %v3258 = vadd.f32 %v2846, %v3257
      %3259 = vmatprep.mubr.bf16.mxu0 0
      %3260 = vmatmul.mubr.bf16.gmra.mrb[0].mxu0 %v2811
      %v3261 = vpop.f32.mrb[0].mxu0
      %v3262 = vadd.f32 %v2842, %v3261
      %v3263 = vpop.f32.mrb[0].mxu0
      %v3264 = vadd.f32 %v2846, %v3263
      %v3265 = vpop.f32.mrb[0].mxu0
      %v3266 = vadd.f32 %v2842, %v3265
      %v3267 = vpop.f32.mrb[0].mxu0
      %v3268 = vadd.f32 %v2846, %v3267
      %3269 = vmatprep.mubr.bf16.mxu0 0
      %3270 = vmatmul.mubr.bf16.gmra.mrb[0].mxu0 %v2812
      %v3271 = vpop.f32.mrb[0].mxu0
      %v3272 = vadd.f32 %v2842, %v3271
      %v3273 = vpop.f32.mrb[0].mxu0
      %v3274 = vadd.f32 %v2846, %v3273
      %v3275 = vpop.f32.mrb[0].mxu0
      %v3276 = vadd.f32 %v2842, %v3275
      %v3277 = vpop.f32.mrb[0].mxu0
      %v3278 = vadd.f32 %v2846, %v3277
      %3279 = vdwg.mxu0
      %vm3280 = vcmask 7168
      %3281 = vst.msk [vmem:[%s477] sm:$0xff] %vm3280, %v2964
      %3282 = vst.msk [vmem:[%s477 + $0x8] sm:$0xff] %vm3280, %v2968
      %3283 = vst.msk [vmem:[%s477 + $0x10] sm:$0xff] %vm3280, %v2974
      %3284 = vst.msk [vmem:[%s477 + $0x18] sm:$0xff] %vm3280, %v2978
      %3285 = vst.msk [vmem:[%s477 + $0x20] sm:$0xff] %vm3280, %v2984
      %3286 = vst.msk [vmem:[%s477 + $0x28] sm:$0xff] %vm3280, %v2988
      %3287 = vst.msk [vmem:[%s477 + $0x30] sm:$0xff] %vm3280, %v2994
      %3288 = vst.msk [vmem:[%s477 + $0x38] sm:$0xff] %vm3280, %v2998
      %3289 = vst.msk [vmem:[%s477 + $0x40] sm:$0xff] %vm3280, %v3004
      %3290 = vst.msk [vmem:[%s477 + $0x48] sm:$0xff] %vm3280, %v3008
      %3291 = vst.msk [vmem:[%s477 + $0x50] sm:$0xff] %vm3280, %v3014
      %3292 = vst.msk [vmem:[%s477 + $0x58] sm:$0xff] %vm3280, %v3018
      %3293 = vst.msk [vmem:[%s477 + $0x60] sm:$0xff] %vm3280, %v3024
      %3294 = vst.msk [vmem:[%s477 + $0x68] sm:$0xff] %vm3280, %v3028
      %3295 = vst.msk [vmem:[%s477 + $0x70] sm:$0xff] %vm3280, %v3034
      %3296 = vst.msk [vmem:[%s477 + $0x78] sm:$0xff] %vm3280, %v3038
      %3297 = vst.msk [vmem:[%s477 + $0x80] sm:$0xff] %vm3280, %v3044
      %3298 = vst.msk [vmem:[%s477 + $0x88] sm:$0xff] %vm3280, %v3048
      %3299 = vst.msk [vmem:[%s477 + $0x90] sm:$0xff] %vm3280, %v3054
      %3300 = vst.msk [vmem:[%s477 + $0x98] sm:$0xff] %vm3280, %v3058
      %3301 = vst.msk [vmem:[%s477 + $0xa0] sm:$0xff] %vm3280, %v3064
      %3302 = vst.msk [vmem:[%s477 + $0xa8] sm:$0xff] %vm3280, %v3068
      %3303 = vst.msk [vmem:[%s477 + $0xb0] sm:$0xff] %vm3280, %v3074
      %3304 = vst.msk [vmem:[%s477 + $0xb8] sm:$0xff] %vm3280, %v3078
      %3305 = vst.msk [vmem:[%s477 + $0xc0] sm:$0xff] %vm3280, %v3084
      %3306 = vst.msk [vmem:[%s477 + $0xc8] sm:$0xff] %vm3280, %v3088
      %3307 = vst.msk [vmem:[%s477 + $0xd0] sm:$0xff] %vm3280, %v3094
      %3308 = vst.msk [vmem:[%s477 + $0xd8] sm:$0xff] %vm3280, %v3098
      %3309 = vst.msk [vmem:[%s477 + $0xe0] sm:$0xff] %vm3280, %v3104
      %3310 = vst.msk [vmem:[%s477 + $0xe8] sm:$0xff] %vm3280, %v3108
      %3311 = vst.msk [vmem:[%s477 + $0xf0] sm:$0xff] %vm3280, %v3114
      %3312 = vst.msk [vmem:[%s477 + $0xf8] sm:$0xff] %vm3280, %v3118
      %3313 = vst.msk [vmem:[%s477 + $0x100] sm:$0xff] %vm3280, %v3124
      %3314 = vst.msk [vmem:[%s477 + $0x108] sm:$0xff] %vm3280, %v3128
      %3315 = vst.msk [vmem:[%s477 + $0x110] sm:$0xff] %vm3280, %v3134
      %3316 = vst.msk [vmem:[%s477 + $0x118] sm:$0xff] %vm3280, %v3138
      %3317 = vst.msk [vmem:[%s477 + $0x120] sm:$0xff] %vm3280, %v3144
      %3318 = vst.msk [vmem:[%s477 + $0x128] sm:$0xff] %vm3280, %v3148
      %3319 = vst.msk [vmem:[%s477 + $0x130] sm:$0xff] %vm3280, %v3154
      %3320 = vst.msk [vmem:[%s477 + $0x138] sm:$0xff] %vm3280, %v3158
      %3321 = vst.msk [vmem:[%s477 + $0x140] sm:$0xff] %vm3280, %v3164
      %3322 = vst.msk [vmem:[%s477 + $0x148] sm:$0xff] %vm3280, %v3168
      %3323 = vst.msk [vmem:[%s477 + $0x150] sm:$0xff] %vm3280, %v3174
      %3324 = vst.msk [vmem:[%s477 + $0x158] sm:$0xff] %vm3280, %v3178
      %3325 = vst.msk [vmem:[%s477 + $0x160] sm:$0xff] %vm3280, %v3184
      %3326 = vst.msk [vmem:[%s477 + $0x168] sm:$0xff] %vm3280, %v3188
      %3327 = vst.msk [vmem:[%s477 + $0x170] sm:$0xff] %vm3280, %v3194
      %3328 = vst.msk [vmem:[%s477 + $0x178] sm:$0xff] %vm3280, %v3198
      %3329 = vst.msk [vmem:[%s477 + $0x180] sm:$0xff] %vm3280, %v3204
      %3330 = vst.msk [vmem:[%s477 + $0x188] sm:$0xff] %vm3280, %v3208
      %3331 = vst.msk [vmem:[%s477 + $0x190] sm:$0xff] %vm3280, %v3214
      %3332 = vst.msk [vmem:[%s477 + $0x198] sm:$0xff] %vm3280, %v3218
      %3333 = vst.msk [vmem:[%s477 + $0x1a0] sm:$0xff] %vm3280, %v3224
      %3334 = vst.msk [vmem:[%s477 + $0x1a8] sm:$0xff] %vm3280, %v3228
      %3335 = vst.msk [vmem:[%s477 + $0x1b0] sm:$0xff] %vm3280, %v3234
      %3336 = vst.msk [vmem:[%s477 + $0x1b8] sm:$0xff] %vm3280, %v3238
      %3337 = vst.msk [vmem:[%s477 + $0x1c0] sm:$0xff] %vm3280, %v3244
      %3338 = vst.msk [vmem:[%s477 + $0x1c8] sm:$0xff] %vm3280, %v3248
      %3339 = vst.msk [vmem:[%s477 + $0x1d0] sm:$0xff] %vm3280, %v3254
      %3340 = vst.msk [vmem:[%s477 + $0x1d8] sm:$0xff] %vm3280, %v3258
      %3341 = vst.msk [vmem:[%s477 + $0x1e0] sm:$0xff] %vm3280, %v3264
      %3342 = vst.msk [vmem:[%s477 + $0x1e8] sm:$0xff] %vm3280, %v3268
      %3343 = vst.msk [vmem:[%s477 + $0x1f0] sm:$0xff] %vm3280, %v3274
      %3344 = vst.msk [vmem:[%s477 + $0x1f8] sm:$0xff] %vm3280, %v3278
      %v3345 = vld [vmem:[%s7] sm:$0xf]
      %v3346 = vld [vmem:[%s7 + $0x4] sm:$0xf]
      %v3347 = vld [vmem:[%s7 + $0x8] sm:$0xf]
      %v3412 = vunpack.c.l.b16 %v544
      %v3413 = vunpack.c.l.b16 %v545
      %v3414 = vunpack.c.l.b16 %v546
      %v3415 = vunpack.c.l.b16 %v547
      %v3416 = vunpack.c.l.b16 %v548
      %v3417 = vunpack.c.l.b16 %v549
      %v3418 = vunpack.c.l.b16 %v550
      %v3419 = vunpack.c.l.b16 %v551
      %v3420 = vunpack.c.l.b16 %v552
      %v3421 = vunpack.c.l.b16 %v553
      %v3422 = vunpack.c.l.b16 %v554
      %v3423 = vunpack.c.l.b16 %v555
      %v3424 = vunpack.c.l.b16 %v556
      %v3425 = vunpack.c.l.b16 %v557
      %v3426 = vunpack.c.l.b16 %v558
      %v3427 = vunpack.c.l.b16 %v559
      %v3428 = vunpack.c.l.b16 %v560
      %v3429 = vunpack.c.l.b16 %v561
      %v3430 = vunpack.c.l.b16 %v562
      %v3431 = vunpack.c.l.b16 %v563
      %v3432 = vunpack.c.l.b16 %v564
      %v3433 = vunpack.c.l.b16 %v565
      %v3434 = vunpack.c.l.b16 %v566
      %v3435 = vunpack.c.l.b16 %v567
      %v3436 = vunpack.c.l.b16 %v568
      %v3437 = vunpack.c.l.b16 %v569
      %v3438 = vunpack.c.l.b16 %v570
      %v3439 = vunpack.c.l.b16 %v571
      %v3440 = vunpack.c.l.b16 %v572
      %v3441 = vunpack.c.l.b16 %v573
      %v3442 = vunpack.c.l.b16 %v574
      %v3443 = vunpack.c.l.b16 %v575
      %v3444 = vunpack.c.l.b16 %v576
      %v3445 = vunpack.c.l.b16 %v577
      %v3446 = vunpack.c.l.b16 %v578
      %v3447 = vunpack.c.l.b16 %v579
      %v3448 = vunpack.c.l.b16 %v580
      %v3449 = vunpack.c.l.b16 %v581
      %v3450 = vunpack.c.l.b16 %v582
      %v3451 = vunpack.c.l.b16 %v583
      %v3452 = vunpack.c.l.b16 %v584
      %v3453 = vunpack.c.l.b16 %v585
      %v3454 = vunpack.c.l.b16 %v586
      %v3455 = vunpack.c.l.b16 %v587
      %v3456 = vunpack.c.l.b16 %v588
      %v3457 = vunpack.c.l.b16 %v589
      %v3458 = vunpack.c.l.b16 %v590
      %v3459 = vunpack.c.l.b16 %v591
      %v3460 = vunpack.c.l.b16 %v592
      %v3461 = vunpack.c.l.b16 %v593
      %v3462 = vunpack.c.l.b16 %v594
      %v3463 = vunpack.c.l.b16 %v595
      %v3464 = vunpack.c.l.b16 %v596
      %v3465 = vunpack.c.l.b16 %v597
      %v3466 = vunpack.c.l.b16 %v598
      %v3467 = vunpack.c.l.b16 %v599
      %v3468 = vunpack.c.l.b16 %v600
      %v3469 = vunpack.c.l.b16 %v601
      %v3470 = vunpack.c.l.b16 %v602
      %v3471 = vunpack.c.l.b16 %v603
      %v3472 = vunpack.c.l.b16 %v604
      %v3473 = vunpack.c.l.b16 %v605
      %v3474 = vunpack.c.l.b16 %v606
      %v3475 = vunpack.c.l.b16 %v607
      %v3476 = vpack.c.b16 %v3413, %v3412
      %v3477 = vpack.c.b16 %v3415, %v3414
      %v3478 = vpack.c.b16 %v3417, %v3416
      %v3479 = vpack.c.b16 %v3419, %v3418
      %v3480 = vpack.c.b16 %v3421, %v3420
      %v3481 = vpack.c.b16 %v3423, %v3422
      %v3482 = vpack.c.b16 %v3425, %v3424
      %v3483 = vpack.c.b16 %v3427, %v3426
      %v3484 = vpack.c.b16 %v3429, %v3428
      %v3485 = vpack.c.b16 %v3431, %v3430
      %v3486 = vpack.c.b16 %v3433, %v3432
      %v3487 = vpack.c.b16 %v3435, %v3434
      %v3488 = vpack.c.b16 %v3437, %v3436
      %v3489 = vpack.c.b16 %v3439, %v3438
      %v3490 = vpack.c.b16 %v3441, %v3440
      %v3491 = vpack.c.b16 %v3443, %v3442
      %v3492 = vpack.c.b16 %v3445, %v3444
      %v3493 = vpack.c.b16 %v3447, %v3446
      %v3494 = vpack.c.b16 %v3449, %v3448
      %v3495 = vpack.c.b16 %v3451, %v3450
      %v3496 = vpack.c.b16 %v3453, %v3452
      %v3497 = vpack.c.b16 %v3455, %v3454
      %v3498 = vpack.c.b16 %v3457, %v3456
      %v3499 = vpack.c.b16 %v3459, %v3458
      %v3500 = vpack.c.b16 %v3461, %v3460
      %v3501 = vpack.c.b16 %v3463, %v3462
      %v3502 = vpack.c.b16 %v3465, %v3464
      %v3503 = vpack.c.b16 %v3467, %v3466
      %v3504 = vpack.c.b16 %v3469, %v3468
      %v3505 = vpack.c.b16 %v3471, %v3470
      %v3506 = vpack.c.b16 %v3473, %v3472
      %v3507 = vpack.c.b16 %v3475, %v3474
      %v3511 = vunpack.c.l.b16 %v3345
      %v3512 = vunpack.c.l.b16 %v3346
      %v3513 = vunpack.c.l.b16 %v3347
      %v3514 = vpack.c.b16 %v3512, %v3511
      %v3515 = vpack.c.b16 %v3513, %v3513
      %vm3517 = vcmask 195584
      %v3519 = vsel %vm3517, %v3476, 0
      %v3522 = vsel %vm3517, %v3477, 0
      %v3525 = vsel %vm3517, %v3478, 0
      %v3528 = vsel %vm3517, %v3479, 0
      %v3531 = vsel %vm3517, %v3480, 0
      %v3534 = vsel %vm3517, %v3481, 0
      %v3537 = vsel %vm3517, %v3482, 0
      %v3540 = vsel %vm3517, %v3483, 0
      %v3543 = vsel %vm3517, %v3484, 0
      %v3546 = vsel %vm3517, %v3485, 0
      %v3549 = vsel %vm3517, %v3486, 0
      %v3552 = vsel %vm3517, %v3487, 0
      %v3555 = vsel %vm3517, %v3488, 0
      %v3558 = vsel %vm3517, %v3489, 0
      %v3561 = vsel %vm3517, %v3490, 0
      %v3564 = vsel %vm3517, %v3491, 0
      %v3567 = vsel %vm3517, %v3492, 0
      %v3570 = vsel %vm3517, %v3493, 0
      %v3573 = vsel %vm3517, %v3494, 0
      %v3576 = vsel %vm3517, %v3495, 0
      %v3579 = vsel %vm3517, %v3496, 0
      %v3582 = vsel %vm3517, %v3497, 0
      %v3585 = vsel %vm3517, %v3498, 0
      %v3588 = vsel %vm3517, %v3499, 0
      %v3591 = vsel %vm3517, %v3500, 0
      %v3594 = vsel %vm3517, %v3501, 0
      %v3597 = vsel %vm3517, %v3502, 0
      %v3600 = vsel %vm3517, %v3503, 0
      %v3603 = vsel %vm3517, %v3504, 0
      %v3606 = vsel %vm3517, %v3505, 0
      %v3609 = vsel %vm3517, %v3506, 0
      %v3612 = vsel %vm3517, %v3507, 0
      %vm3614 = vcmask 1043456
      %v3616 = vsel %vm3614, %v3515, 0
      %3618 = vmatprep.subr.bf16.mxu0 0
      %3619 = vmatpush1.bf16.msra.mxu0 %v3514
      %3620 = vmatprep.subr.bf16.mxu0 0
      %3621 = vmatpush1.bf16.msra.mxu0 %v3616
      %3622 = vmatprep.subr.bf16.mxu0 0
      %3623 = vmatpush1.bf16.msra.mxu0 0
      %3624 = vmatprep.subr.bf16.mxu0 0
      %3625 = vmatpush1.bf16.msra.mxu0 0
      %3626 = vmatprep.subr.bf16.mxu0 0
      %3627 = vmatpush1.bf16.msra.mxu0 0
      %3628 = vmatprep.subr.bf16.mxu0 0
      %3629 = vmatpush1.bf16.msra.mxu0 0
      %3630 = vmatprep.subr.bf16.mxu0 0
      %3631 = vmatpush1.bf16.msra.mxu0 0
      %3632 = vmatprep.subr.bf16.mxu0 0
      %3633 = vmatpush1.bf16.msra.mxu0 0
      %3634 = vmatprep.subr.bf16.mxu0 0
      %3635 = vmatpush1.bf16.msra.mxu0 0
      %3636 = vmatprep.subr.bf16.mxu0 0
      %3637 = vmatpush1.bf16.msra.mxu0 0
      %3638 = vmatprep.subr.bf16.mxu0 0
      %3639 = vmatpush1.bf16.msra.mxu0 0
      %3640 = vmatprep.subr.bf16.mxu0 0
      %3641 = vmatpush1.bf16.msra.mxu0 0
      %3642 = vmatprep.subr.bf16.mxu0 0
      %3643 = vmatpush1.bf16.msra.mxu0 0
      %3644 = vmatprep.subr.bf16.mxu0 0
      %3645 = vmatpush1.bf16.msra.mxu0 0
      %3646 = vmatprep.subr.bf16.mxu0 0
      %3647 = vmatpush1.bf16.msra.mxu0 0
      %3648 = vmatprep.subr.bf16.mxu0 0
      %3649 = vmatpush1.bf16.msra.mxu0 0
      %3650 = vmatprep.mubr.bf16.mxu0 0
      %3651 = vmatmul.mubr.bf16.gmra.mrb[0].mxu0 %v3519
      %v3652 = vpop.f32.mrb[0].mxu0
      %v3653 = vadd.f32 0.0, %v3652
      %v3654 = vpop.f32.mrb[0].mxu0
      %v3655 = vpop.f32.mrb[0].mxu0
      %v3656 = vadd.f32 0.0, %v3655
      %v3657 = vpop.f32.mrb[0].mxu0
      %3658 = vmatprep.mubr.bf16.mxu0 0
      %3659 = vmatmul.mubr.bf16.gmra.mrb[0].mxu0 %v3522
      %v3660 = vpop.f32.mrb[0].mxu0
      %v3661 = vadd.f32 0.0, %v3660
      %v3662 = vpop.f32.mrb[0].mxu0
      %v3663 = vpop.f32.mrb[0].mxu0
      %v3664 = vadd.f32 0.0, %v3663
      %v3665 = vpop.f32.mrb[0].mxu0
      %3666 = vmatprep.mubr.bf16.mxu0 0
      %3667 = vmatmul.mubr.bf16.gmra.mrb[0].mxu0 %v3525
      %v3668 = vpop.f32.mrb[0].mxu0
      %v3669 = vadd.f32 0.0, %v3668
      %v3670 = vpop.f32.mrb[0].mxu0
      %v3671 = vpop.f32.mrb[0].mxu0
      %v3672 = vadd.f32 0.0, %v3671
      %v3673 = vpop.f32.mrb[0].mxu0
      %3674 = vmatprep.mubr.bf16.mxu0 0
      %3675 = vmatmul.mubr.bf16.gmra.mrb[0].mxu0 %v3528
      %v3676 = vpop.f32.mrb[0].mxu0
      %v3677 = vadd.f32 0.0, %v3676
      %v3678 = vpop.f32.mrb[0].mxu0
      %v3679 = vpop.f32.mrb[0].mxu0
      %v3680 = vadd.f32 0.0, %v3679
      %v3681 = vpop.f32.mrb[0].mxu0
      %3682 = vmatprep.mubr.bf16.mxu0 0
      %3683 = vmatmul.mubr.bf16.gmra.mrb[0].mxu0 %v3531
      %v3684 = vpop.f32.mrb[0].mxu0
      %v3685 = vadd.f32 0.0, %v3684
      %v3686 = vpop.f32.mrb[0].mxu0
      %v3687 = vpop.f32.mrb[0].mxu0
      %v3688 = vadd.f32 0.0, %v3687
      %v3689 = vpop.f32.mrb[0].mxu0
      %3690 = vmatprep.mubr.bf16.mxu0 0
      %3691 = vmatmul.mubr.bf16.gmra.mrb[0].mxu0 %v3534
      %v3692 = vpop.f32.mrb[0].mxu0
      %v3693 = vadd.f32 0.0, %v3692
      %v3694 = vpop.f32.mrb[0].mxu0
      %v3695 = vpop.f32.mrb[0].mxu0
      %v3696 = vadd.f32 0.0, %v3695
      %v3697 = vpop.f32.mrb[0].mxu0
      %3698 = vmatprep.mubr.bf16.mxu0 0
      %3699 = vmatmul.mubr.bf16.gmra.mrb[0].mxu0 %v3537
      %v3700 = vpop.f32.mrb[0].mxu0
      %v3701 = vadd.f32 0.0, %v3700
      %v3702 = vpop.f32.mrb[0].mxu0
      %v3703 = vpop.f32.mrb[0].mxu0
      %v3704 = vadd.f32 0.0, %v3703
      %v3705 = vpop.f32.mrb[0].mxu0
      %3706 = vmatprep.mubr.bf16.mxu0 0
      %3707 = vmatmul.mubr.bf16.gmra.mrb[0].mxu0 %v3540
      %v3708 = vpop.f32.mrb[0].mxu0
      %v3709 = vadd.f32 0.0, %v3708
      %v3710 = vpop.f32.mrb[0].mxu0
      %v3711 = vpop.f32.mrb[0].mxu0
      %v3712 = vadd.f32 0.0, %v3711
      %v3713 = vpop.f32.mrb[0].mxu0
      %3714 = vmatprep.mubr.bf16.mxu0 0
      %3715 = vmatmul.mubr.bf16.gmra.mrb[0].mxu0 %v3543
      %v3716 = vpop.f32.mrb[0].mxu0
      %v3717 = vadd.f32 0.0, %v3716
      %v3718 = vpop.f32.mrb[0].mxu0
      %v3719 = vpop.f32.mrb[0].mxu0
      %v3720 = vadd.f32 0.0, %v3719
      %v3721 = vpop.f32.mrb[0].mxu0
      %3722 = vmatprep.mubr.bf16.mxu0 0
      %3723 = vmatmul.mubr.bf16.gmra.mrb[0].mxu0 %v3546
      %v3724 = vpop.f32.mrb[0].mxu0
      %v3725 = vadd.f32 0.0, %v3724
      %v3726 = vpop.f32.mrb[0].mxu0
      %v3727 = vpop.f32.mrb[0].mxu0
      %v3728 = vadd.f32 0.0, %v3727
      %v3729 = vpop.f32.mrb[0].mxu0
      %3730 = vmatprep.mubr.bf16.mxu0 0
      %3731 = vmatmul.mubr.bf16.gmra.mrb[0].mxu0 %v3549
      %v3732 = vpop.f32.mrb[0].mxu0
      %v3733 = vadd.f32 0.0, %v3732
      %v3734 = vpop.f32.mrb[0].mxu0
      %v3735 = vpop.f32.mrb[0].mxu0
      %v3736 = vadd.f32 0.0, %v3735
      %v3737 = vpop.f32.mrb[0].mxu0
      %3738 = vmatprep.mubr.bf16.mxu0 0
      %3739 = vmatmul.mubr.bf16.gmra.mrb[0].mxu0 %v3552
      %v3740 = vpop.f32.mrb[0].mxu0
      %v3741 = vadd.f32 0.0, %v3740
      %v3742 = vpop.f32.mrb[0].mxu0
      %v3743 = vpop.f32.mrb[0].mxu0
      %v3744 = vadd.f32 0.0, %v3743
      %v3745 = vpop.f32.mrb[0].mxu0
      %3746 = vmatprep.mubr.bf16.mxu0 0
      %3747 = vmatmul.mubr.bf16.gmra.mrb[0].mxu0 %v3555
      %v3748 = vpop.f32.mrb[0].mxu0
      %v3749 = vadd.f32 0.0, %v3748
      %v3750 = vpop.f32.mrb[0].mxu0
      %v3751 = vpop.f32.mrb[0].mxu0
      %v3752 = vadd.f32 0.0, %v3751
      %v3753 = vpop.f32.mrb[0].mxu0
      %3754 = vmatprep.mubr.bf16.mxu0 0
      %3755 = vmatmul.mubr.bf16.gmra.mrb[0].mxu0 %v3558
      %v3756 = vpop.f32.mrb[0].mxu0
      %v3757 = vadd.f32 0.0, %v3756
      %v3758 = vpop.f32.mrb[0].mxu0
      %v3759 = vpop.f32.mrb[0].mxu0
      %v3760 = vadd.f32 0.0, %v3759
      %v3761 = vpop.f32.mrb[0].mxu0
      %3762 = vmatprep.mubr.bf16.mxu0 0
      %3763 = vmatmul.mubr.bf16.gmra.mrb[0].mxu0 %v3561
      %v3764 = vpop.f32.mrb[0].mxu0
      %v3765 = vadd.f32 0.0, %v3764
      %v3766 = vpop.f32.mrb[0].mxu0
      %v3767 = vpop.f32.mrb[0].mxu0
      %v3768 = vadd.f32 0.0, %v3767
      %v3769 = vpop.f32.mrb[0].mxu0
      %3770 = vmatprep.mubr.bf16.mxu0 0
      %3771 = vmatmul.mubr.bf16.gmra.mrb[0].mxu0 %v3564
      %v3772 = vpop.f32.mrb[0].mxu0
      %v3773 = vadd.f32 0.0, %v3772
      %v3774 = vpop.f32.mrb[0].mxu0
      %v3775 = vpop.f32.mrb[0].mxu0
      %v3776 = vadd.f32 0.0, %v3775
      %v3777 = vpop.f32.mrb[0].mxu0
      %3778 = vmatprep.mubr.bf16.mxu0 0
      %3779 = vmatmul.mubr.bf16.gmra.mrb[0].mxu0 %v3567
      %v3780 = vpop.f32.mrb[0].mxu0
      %v3781 = vadd.f32 0.0, %v3780
      %v3782 = vpop.f32.mrb[0].mxu0
      %v3783 = vpop.f32.mrb[0].mxu0
      %v3784 = vadd.f32 0.0, %v3783
      %v3785 = vpop.f32.mrb[0].mxu0
      %3786 = vmatprep.mubr.bf16.mxu0 0
      %3787 = vmatmul.mubr.bf16.gmra.mrb[0].mxu0 %v3570
      %v3788 = vpop.f32.mrb[0].mxu0
      %v3789 = vadd.f32 0.0, %v3788
      %v3790 = vpop.f32.mrb[0].mxu0
      %v3791 = vpop.f32.mrb[0].mxu0
      %v3792 = vadd.f32 0.0, %v3791
      %v3793 = vpop.f32.mrb[0].mxu0
      %3794 = vmatprep.mubr.bf16.mxu0 0
      %3795 = vmatmul.mubr.bf16.gmra.mrb[0].mxu0 %v3573
      %v3796 = vpop.f32.mrb[0].mxu0
      %v3797 = vadd.f32 0.0, %v3796
      %v3798 = vpop.f32.mrb[0].mxu0
      %v3799 = vpop.f32.mrb[0].mxu0
      %v3800 = vadd.f32 0.0, %v3799
      %v3801 = vpop.f32.mrb[0].mxu0
      %3802 = vmatprep.mubr.bf16.mxu0 0
      %3803 = vmatmul.mubr.bf16.gmra.mrb[0].mxu0 %v3576
      %v3804 = vpop.f32.mrb[0].mxu0
      %v3805 = vadd.f32 0.0, %v3804
      %v3806 = vpop.f32.mrb[0].mxu0
      %v3807 = vpop.f32.mrb[0].mxu0
      %v3808 = vadd.f32 0.0, %v3807
      %v3809 = vpop.f32.mrb[0].mxu0
      %3810 = vmatprep.mubr.bf16.mxu0 0
      %3811 = vmatmul.mubr.bf16.gmra.mrb[0].mxu0 %v3579
      %v3812 = vpop.f32.mrb[0].mxu0
      %v3813 = vadd.f32 0.0, %v3812
      %v3814 = vpop.f32.mrb[0].mxu0
      %v3815 = vpop.f32.mrb[0].mxu0
      %v3816 = vadd.f32 0.0, %v3815
      %v3817 = vpop.f32.mrb[0].mxu0
      %3818 = vmatprep.mubr.bf16.mxu0 0
      %3819 = vmatmul.mubr.bf16.gmra.mrb[0].mxu0 %v3582
      %v3820 = vpop.f32.mrb[0].mxu0
      %v3821 = vadd.f32 0.0, %v3820
      %v3822 = vpop.f32.mrb[0].mxu0
      %v3823 = vpop.f32.mrb[0].mxu0
      %v3824 = vadd.f32 0.0, %v3823
      %v3825 = vpop.f32.mrb[0].mxu0
      %3826 = vmatprep.mubr.bf16.mxu0 0
      %3827 = vmatmul.mubr.bf16.gmra.mrb[0].mxu0 %v3585
      %v3828 = vpop.f32.mrb[0].mxu0
      %v3829 = vadd.f32 0.0, %v3828
      %v3830 = vpop.f32.mrb[0].mxu0
      %v3831 = vpop.f32.mrb[0].mxu0
      %v3832 = vadd.f32 0.0, %v3831
      %v3833 = vpop.f32.mrb[0].mxu0
      %3834 = vmatprep.mubr.bf16.mxu0 0
      %3835 = vmatmul.mubr.bf16.gmra.mrb[0].mxu0 %v3588
      %v3836 = vpop.f32.mrb[0].mxu0
      %v3837 = vadd.f32 0.0, %v3836
      %v3838 = vpop.f32.mrb[0].mxu0
      %v3839 = vpop.f32.mrb[0].mxu0
      %v3840 = vadd.f32 0.0, %v3839
      %v3841 = vpop.f32.mrb[0].mxu0
      %3842 = vmatprep.mubr.bf16.mxu0 0
      %3843 = vmatmul.mubr.bf16.gmra.mrb[0].mxu0 %v3591
      %v3844 = vpop.f32.mrb[0].mxu0
      %v3845 = vadd.f32 0.0, %v3844
      %v3846 = vpop.f32.mrb[0].mxu0
      %v3847 = vpop.f32.mrb[0].mxu0
      %v3848 = vadd.f32 0.0, %v3847
      %v3849 = vpop.f32.mrb[0].mxu0
      %3850 = vmatprep.mubr.bf16.mxu0 0
      %3851 = vmatmul.mubr.bf16.gmra.mrb[0].mxu0 %v3594
      %v3852 = vpop.f32.mrb[0].mxu0
      %v3853 = vadd.f32 0.0, %v3852
      %v3854 = vpop.f32.mrb[0].mxu0
      %v3855 = vpop.f32.mrb[0].mxu0
      %v3856 = vadd.f32 0.0, %v3855
      %v3857 = vpop.f32.mrb[0].mxu0
      %3858 = vmatprep.mubr.bf16.mxu0 0
      %3859 = vmatmul.mubr.bf16.gmra.mrb[0].mxu0 %v3597
      %v3860 = vpop.f32.mrb[0].mxu0
      %v3861 = vadd.f32 0.0, %v3860
      %v3862 = vpop.f32.mrb[0].mxu0
      %v3863 = vpop.f32.mrb[0].mxu0
      %v3864 = vadd.f32 0.0, %v3863
      %v3865 = vpop.f32.mrb[0].mxu0
      %3866 = vmatprep.mubr.bf16.mxu0 0
      %3867 = vmatmul.mubr.bf16.gmra.mrb[0].mxu0 %v3600
      %v3868 = vpop.f32.mrb[0].mxu0
      %v3869 = vadd.f32 0.0, %v3868
      %v3870 = vpop.f32.mrb[0].mxu0
      %v3871 = vpop.f32.mrb[0].mxu0
      %v3872 = vadd.f32 0.0, %v3871
      %v3873 = vpop.f32.mrb[0].mxu0
      %3874 = vmatprep.mubr.bf16.mxu0 0
      %3875 = vmatmul.mubr.bf16.gmra.mrb[0].mxu0 %v3603
      %v3876 = vpop.f32.mrb[0].mxu0
      %v3877 = vadd.f32 0.0, %v3876
      %v3878 = vpop.f32.mrb[0].mxu0
      %v3879 = vpop.f32.mrb[0].mxu0
      %v3880 = vadd.f32 0.0, %v3879
      %v3881 = vpop.f32.mrb[0].mxu0
      %3882 = vmatprep.mubr.bf16.mxu0 0
      %3883 = vmatmul.mubr.bf16.gmra.mrb[0].mxu0 %v3606
      %v3884 = vpop.f32.mrb[0].mxu0
      %v3885 = vadd.f32 0.0, %v3884
      %v3886 = vpop.f32.mrb[0].mxu0
      %v3887 = vpop.f32.mrb[0].mxu0
      %v3888 = vadd.f32 0.0, %v3887
      %v3889 = vpop.f32.mrb[0].mxu0
      %3890 = vmatprep.mubr.bf16.mxu0 0
      %3891 = vmatmul.mubr.bf16.gmra.mrb[0].mxu0 %v3609
      %v3892 = vpop.f32.mrb[0].mxu0
      %v3893 = vadd.f32 0.0, %v3892
      %v3894 = vpop.f32.mrb[0].mxu0
      %v3895 = vpop.f32.mrb[0].mxu0
      %v3896 = vadd.f32 0.0, %v3895
      %v3897 = vpop.f32.mrb[0].mxu0
      %3898 = vmatprep.mubr.bf16.mxu0 0
      %3899 = vmatmul.mubr.bf16.gmra.mrb[0].mxu0 %v3612
      %v3900 = vpop.f32.mrb[0].mxu0
      %v3901 = vadd.f32 0.0, %v3900
      %v3902 = vpop.f32.mrb[0].mxu0
      %v3903 = vpop.f32.mrb[0].mxu0
      %v3904 = vadd.f32 0.0, %v3903
      %v3905 = vpop.f32.mrb[0].mxu0
      %3906 = vdwg.mxu0
      %v3907 = vadd.f32 %v2962, %v3653
      %v3908 = vadd.f32 %v2966, %v3656
      %v3909 = vadd.f32 %v2972, %v3661
      %v3910 = vadd.f32 %v2976, %v3664
      %v3911 = vadd.f32 %v2982, %v3669
      %v3912 = vadd.f32 %v2986, %v3672
      %v3913 = vadd.f32 %v2992, %v3677
      %v3914 = vadd.f32 %v2996, %v3680
      %v3915 = vadd.f32 %v3002, %v3685
      %v3916 = vadd.f32 %v3006, %v3688
      %v3917 = vadd.f32 %v3012, %v3693
      %v3918 = vadd.f32 %v3016, %v3696
      %v3919 = vadd.f32 %v3022, %v3701
      %v3920 = vadd.f32 %v3026, %v3704
      %v3921 = vadd.f32 %v3032, %v3709
      %v3922 = vadd.f32 %v3036, %v3712
      %v3923 = vadd.f32 %v3042, %v3717
      %v3924 = vadd.f32 %v3046, %v3720
      %v3925 = vadd.f32 %v3052, %v3725
      %v3926 = vadd.f32 %v3056, %v3728
      %v3927 = vadd.f32 %v3062, %v3733
      %v3928 = vadd.f32 %v3066, %v3736
      %v3929 = vadd.f32 %v3072, %v3741
      %v3930 = vadd.f32 %v3076, %v3744
      %v3931 = vadd.f32 %v3082, %v3749
      %v3932 = vadd.f32 %v3086, %v3752
      %v3933 = vadd.f32 %v3092, %v3757
      %v3934 = vadd.f32 %v3096, %v3760
      %v3935 = vadd.f32 %v3102, %v3765
      %v3936 = vadd.f32 %v3106, %v3768
      %v3937 = vadd.f32 %v3112, %v3773
      %v3938 = vadd.f32 %v3116, %v3776
      %v3939 = vadd.f32 %v3122, %v3781
      %v3940 = vadd.f32 %v3126, %v3784
      %v3941 = vadd.f32 %v3132, %v3789
      %v3942 = vadd.f32 %v3136, %v3792
      %v3943 = vadd.f32 %v3142, %v3797
      %v3944 = vadd.f32 %v3146, %v3800
      %v3945 = vadd.f32 %v3152, %v3805
      %v3946 = vadd.f32 %v3156, %v3808
      %v3947 = vadd.f32 %v3162, %v3813
      %v3948 = vadd.f32 %v3166, %v3816
      %v3949 = vadd.f32 %v3172, %v3821
      %v3950 = vadd.f32 %v3176, %v3824
      %v3951 = vadd.f32 %v3182, %v3829
      %v3952 = vadd.f32 %v3186, %v3832
      %v3953 = vadd.f32 %v3192, %v3837
      %v3954 = vadd.f32 %v3196, %v3840
      %v3955 = vadd.f32 %v3202, %v3845
      %v3956 = vadd.f32 %v3206, %v3848
      %v3957 = vadd.f32 %v3212, %v3853
      %v3958 = vadd.f32 %v3216, %v3856
      %v3959 = vadd.f32 %v3222, %v3861
      %v3960 = vadd.f32 %v3226, %v3864
      %v3961 = vadd.f32 %v3232, %v3869
      %v3962 = vadd.f32 %v3236, %v3872
      %v3963 = vadd.f32 %v3242, %v3877
      %v3964 = vadd.f32 %v3246, %v3880
      %v3965 = vadd.f32 %v3252, %v3885
      %v3966 = vadd.f32 %v3256, %v3888
      %v3967 = vadd.f32 %v3262, %v3893
      %v3968 = vadd.f32 %v3266, %v3896
      %v3969 = vadd.f32 %v3272, %v3901
      %v3970 = vadd.f32 %v3276, %v3904
      %v3971 = vmax.f32 %v3907, 0.0
      %v3972 = vmax.f32 %v3908, 0.0
      %v3973 = vmax.f32 %v3909, 0.0
      %v3974 = vmax.f32 %v3910, 0.0
      %v3975 = vmax.f32 %v3911, 0.0
      %v3976 = vmax.f32 %v3912, 0.0
      %v3977 = vmax.f32 %v3913, 0.0
      %v3978 = vmax.f32 %v3914, 0.0
      %v3979 = vmax.f32 %v3915, 0.0
      %v3980 = vmax.f32 %v3916, 0.0
      %v3981 = vmax.f32 %v3917, 0.0
      %v3982 = vmax.f32 %v3918, 0.0
      %v3983 = vmax.f32 %v3919, 0.0
      %v3984 = vmax.f32 %v3920, 0.0
      %v3985 = vmax.f32 %v3921, 0.0
      %v3986 = vmax.f32 %v3922, 0.0
      %v3987 = vmax.f32 %v3923, 0.0
      %v3988 = vmax.f32 %v3924, 0.0
      %v3989 = vmax.f32 %v3925, 0.0
      %v3990 = vmax.f32 %v3926, 0.0
      %v3991 = vmax.f32 %v3927, 0.0
      %v3992 = vmax.f32 %v3928, 0.0
      %v3993 = vmax.f32 %v3929, 0.0
      %v3994 = vmax.f32 %v3930, 0.0
      %v3995 = vmax.f32 %v3931, 0.0
      %v3996 = vmax.f32 %v3932, 0.0
      %v3997 = vmax.f32 %v3933, 0.0
      %v3998 = vmax.f32 %v3934, 0.0
      %v3999 = vmax.f32 %v3935, 0.0
      %v4000 = vmax.f32 %v3936, 0.0
      %v4001 = vmax.f32 %v3937, 0.0
      %v4002 = vmax.f32 %v3938, 0.0
      %v4003 = vmax.f32 %v3939, 0.0
      %v4004 = vmax.f32 %v3940, 0.0
      %v4005 = vmax.f32 %v3941, 0.0
      %v4006 = vmax.f32 %v3942, 0.0
      %v4007 = vmax.f32 %v3943, 0.0
      %v4008 = vmax.f32 %v3944, 0.0
      %v4009 = vmax.f32 %v3945, 0.0
      %v4010 = vmax.f32 %v3946, 0.0
      %v4011 = vmax.f32 %v3947, 0.0
      %v4012 = vmax.f32 %v3948, 0.0
      %v4013 = vmax.f32 %v3949, 0.0
      %v4014 = vmax.f32 %v3950, 0.0
      %v4015 = vmax.f32 %v3951, 0.0
      %v4016 = vmax.f32 %v3952, 0.0
      %v4017 = vmax.f32 %v3953, 0.0
      %v4018 = vmax.f32 %v3954, 0.0
      %v4019 = vmax.f32 %v3955, 0.0
      %v4020 = vmax.f32 %v3956, 0.0
      %v4021 = vmax.f32 %v3957, 0.0
      %v4022 = vmax.f32 %v3958, 0.0
      %v4023 = vmax.f32 %v3959, 0.0
      %v4024 = vmax.f32 %v3960, 0.0
      %v4025 = vmax.f32 %v3961, 0.0
      %v4026 = vmax.f32 %v3962, 0.0
      %v4027 = vmax.f32 %v3963, 0.0
      %v4028 = vmax.f32 %v3964, 0.0
      %v4029 = vmax.f32 %v3965, 0.0
      %v4030 = vmax.f32 %v3966, 0.0
      %v4031 = vmax.f32 %v3967, 0.0
      %v4032 = vmax.f32 %v3968, 0.0
      %v4033 = vmax.f32 %v3969, 0.0
      %v4034 = vmax.f32 %v3970, 0.0
      %v4035 = vpack.c.bf16 %v3972, %v3971
      %v4036 = vpack.c.bf16 %v3974, %v3973
      %v4037 = vpack.c.bf16 %v3976, %v3975
      %v4038 = vpack.c.bf16 %v3978, %v3977
      %v4039 = vpack.c.bf16 %v3980, %v3979
      %v4040 = vpack.c.bf16 %v3982, %v3981
      %v4041 = vpack.c.bf16 %v3984, %v3983
      %v4042 = vpack.c.bf16 %v3986, %v3985
      %v4043 = vpack.c.bf16 %v3988, %v3987
      %v4044 = vpack.c.bf16 %v3990, %v3989
      %v4045 = vpack.c.bf16 %v3992, %v3991
      %v4046 = vpack.c.bf16 %v3994, %v3993
      %v4047 = vpack.c.bf16 %v3996, %v3995
      %v4048 = vpack.c.bf16 %v3998, %v3997
      %v4049 = vpack.c.bf16 %v4000, %v3999
      %v4050 = vpack.c.bf16 %v4002, %v4001
      %v4051 = vpack.c.bf16 %v4004, %v4003
      %v4052 = vpack.c.bf16 %v4006, %v4005
      %v4053 = vpack.c.bf16 %v4008, %v4007
      %v4054 = vpack.c.bf16 %v4010, %v4009
      %v4055 = vpack.c.bf16 %v4012, %v4011
      %v4056 = vpack.c.bf16 %v4014, %v4013
      %v4057 = vpack.c.bf16 %v4016, %v4015
      %v4058 = vpack.c.bf16 %v4018, %v4017
      %v4059 = vpack.c.bf16 %v4020, %v4019
      %v4060 = vpack.c.bf16 %v4022, %v4021
      %v4061 = vpack.c.bf16 %v4024, %v4023
      %v4062 = vpack.c.bf16 %v4026, %v4025
      %v4063 = vpack.c.bf16 %v4028, %v4027
      %v4064 = vpack.c.bf16 %v4030, %v4029
      %v4065 = vpack.c.bf16 %v4032, %v4031
      %v4066 = vpack.c.bf16 %v4034, %v4033
      %v4067 = vld [vmem:[%s8] sm:$0xf]
      %v4068 = vld [vmem:[%s8 + $0x4] sm:$0xf]
      %v4069 = vld [vmem:[%s8 + $0x8] sm:$0xf]
      %v4070 = vld [vmem:[%s8 + $0xc] sm:$0xf]
      %v4071 = vld [vmem:[%s8 + $0x10] sm:$0xf]
      %v4072 = vld [vmem:[%s8 + $0x14] sm:$0xf]
      %v4073 = vld [vmem:[%s8 + $0x18] sm:$0xf]
      %v4074 = vld [vmem:[%s8 + $0x1c] sm:$0xf]
      %v4075 = vld [vmem:[%s8 + $0x20] sm:$0xf]
      %v4076 = vld [vmem:[%s8 + $0x24] sm:$0xf]
      %v4077 = vld [vmem:[%s8 + $0x28] sm:$0xf]
      %v4078 = vld [vmem:[%s8 + $0x2c] sm:$0xf]
      %v4079 = vld [vmem:[%s8 + $0x30] sm:$0xf]
      %v4080 = vld [vmem:[%s8 + $0x34] sm:$0xf]
      %v4081 = vld [vmem:[%s8 + $0x38] sm:$0xf]
      %v4082 = vld [vmem:[%s8 + $0x3c] sm:$0xf]
      %v4083 = vlaneseq
      %v4084 = vshrl.u32 %v4083, 7
      %v4085 = vsub.s32 3, %v4084
      %v4086 = vrot.slane %v609, %v4085
      %v4103 = vunpack.c.l.b16 %v4067
      %v4104 = vunpack.c.l.b16 %v4068
      %v4105 = vunpack.c.l.b16 %v4069
      %v4106 = vunpack.c.l.b16 %v4070
      %v4107 = vunpack.c.l.b16 %v4071
      %v4108 = vunpack.c.l.b16 %v4072
      %v4109 = vunpack.c.l.b16 %v4073
      %v4110 = vunpack.c.l.b16 %v4074
      %v4111 = vunpack.c.l.b16 %v4075
      %v4112 = vunpack.c.l.b16 %v4076
      %v4113 = vunpack.c.l.b16 %v4077
      %v4114 = vunpack.c.l.b16 %v4078
      %v4115 = vunpack.c.l.b16 %v4079
      %v4116 = vunpack.c.l.b16 %v4080
      %v4117 = vunpack.c.l.b16 %v4081
      %v4118 = vunpack.c.l.b16 %v4082
      %v4119 = vpack.c.b16 %v4104, %v4103
      %v4120 = vpack.c.b16 %v4106, %v4105
      %v4121 = vpack.c.b16 %v4108, %v4107
      %v4122 = vpack.c.b16 %v4110, %v4109
      %v4123 = vpack.c.b16 %v4112, %v4111
      %v4124 = vpack.c.b16 %v4114, %v4113
      %v4125 = vpack.c.b16 %v4116, %v4115
      %v4126 = vpack.c.b16 %v4118, %v4117
      %4135 = vmatprep.subr.bf16.mxu0 0
      %4136 = vmatpush1.bf16.msra.mxu0 %v4119
      %4137 = vmatprep.subr.bf16.mxu0 0
      %4138 = vmatpush1.bf16.msra.mxu0 %v4120
      %4139 = vmatprep.subr.bf16.mxu0 0
      %4140 = vmatpush1.bf16.msra.mxu0 %v4121
      %4141 = vmatprep.subr.bf16.mxu0 0
      %4142 = vmatpush1.bf16.msra.mxu0 %v4122
      %4143 = vmatprep.subr.bf16.mxu0 0
      %4144 = vmatpush1.bf16.msra.mxu0 %v4123
      %4145 = vmatprep.subr.bf16.mxu0 0
      %4146 = vmatpush1.bf16.msra.mxu0 %v4124
      %4147 = vmatprep.subr.bf16.mxu0 0
      %4148 = vmatpush1.bf16.msra.mxu0 %v4125
      %4149 = vmatprep.subr.bf16.mxu0 0
      %4150 = vmatpush1.bf16.msra.mxu0 %v4126
      %4151 = vmatprep.subr.bf16.mxu0 0
      %4152 = vmatpush1.bf16.msra.mxu0 0
      %4153 = vmatprep.subr.bf16.mxu0 0
      %4154 = vmatpush1.bf16.msra.mxu0 0
      %4155 = vmatprep.subr.bf16.mxu0 0
      %4156 = vmatpush1.bf16.msra.mxu0 0
      %4157 = vmatprep.subr.bf16.mxu0 0
      %4158 = vmatpush1.bf16.msra.mxu0 0
      %4159 = vmatprep.subr.bf16.mxu0 0
      %4160 = vmatpush1.bf16.msra.mxu0 0
      %4161 = vmatprep.subr.bf16.mxu0 0
      %4162 = vmatpush1.bf16.msra.mxu0 0
      %4163 = vmatprep.subr.bf16.mxu0 0
      %4164 = vmatpush1.bf16.msra.mxu0 0
      %4165 = vmatprep.subr.bf16.mxu0 0
      %4166 = vmatpush1.bf16.msra.mxu0 0
      %4167 = vmatprep.mubr.bf16.mxu0 0
      %4168 = vmatmul.mubr.bf16.gmra.mrb[0].mxu0 %v4035
      %v4169 = vpop.f32.mrb[0].mxu0
      %v4170 = vadd.f32 %v4086, %v4169
      %v4171 = vpop.f32.mrb[0].mxu0
      %v4172 = vpop.f32.mrb[0].mxu0
      %v4173 = vadd.f32 %v4086, %v4172
      %v4174 = vpop.f32.mrb[0].mxu0
      %4175 = vmatprep.mubr.bf16.mxu0 0
      %4176 = vmatmul.mubr.bf16.gmra.mrb[0].mxu0 %v4036
      %v4177 = vpop.f32.mrb[0].mxu0
      %v4178 = vadd.f32 %v4086, %v4177
      %v4179 = vpop.f32.mrb[0].mxu0
      %v4180 = vpop.f32.mrb[0].mxu0
      %v4181 = vadd.f32 %v4086, %v4180
      %v4182 = vpop.f32.mrb[0].mxu0
      %4183 = vmatprep.mubr.bf16.mxu0 0
      %4184 = vmatmul.mubr.bf16.gmra.mrb[0].mxu0 %v4037
      %v4185 = vpop.f32.mrb[0].mxu0
      %v4186 = vadd.f32 %v4086, %v4185
      %v4187 = vpop.f32.mrb[0].mxu0
      %v4188 = vpop.f32.mrb[0].mxu0
      %v4189 = vadd.f32 %v4086, %v4188
      %v4190 = vpop.f32.mrb[0].mxu0
      %4191 = vmatprep.mubr.bf16.mxu0 0
      %4192 = vmatmul.mubr.bf16.gmra.mrb[0].mxu0 %v4038
      %v4193 = vpop.f32.mrb[0].mxu0
      %v4194 = vadd.f32 %v4086, %v4193
      %v4195 = vpop.f32.mrb[0].mxu0
      %v4196 = vpop.f32.mrb[0].mxu0
      %v4197 = vadd.f32 %v4086, %v4196
      %v4198 = vpop.f32.mrb[0].mxu0
      %4199 = vmatprep.mubr.bf16.mxu0 0
      %4200 = vmatmul.mubr.bf16.gmra.mrb[0].mxu0 %v4039
      %v4201 = vpop.f32.mrb[0].mxu0
      %v4202 = vadd.f32 %v4086, %v4201
      %v4203 = vpop.f32.mrb[0].mxu0
      %v4204 = vpop.f32.mrb[0].mxu0
      %v4205 = vadd.f32 %v4086, %v4204
      %v4206 = vpop.f32.mrb[0].mxu0
      %4207 = vmatprep.mubr.bf16.mxu0 0
      %4208 = vmatmul.mubr.bf16.gmra.mrb[0].mxu0 %v4040
      %v4209 = vpop.f32.mrb[0].mxu0
      %v4210 = vadd.f32 %v4086, %v4209
      %v4211 = vpop.f32.mrb[0].mxu0
      %v4212 = vpop.f32.mrb[0].mxu0
      %v4213 = vadd.f32 %v4086, %v4212
      %v4214 = vpop.f32.mrb[0].mxu0
      %4215 = vmatprep.mubr.bf16.mxu0 0
      %4216 = vmatmul.mubr.bf16.gmra.mrb[0].mxu0 %v4041
      %v4217 = vpop.f32.mrb[0].mxu0
      %v4218 = vadd.f32 %v4086, %v4217
      %v4219 = vpop.f32.mrb[0].mxu0
      %v4220 = vpop.f32.mrb[0].mxu0
      %v4221 = vadd.f32 %v4086, %v4220
      %v4222 = vpop.f32.mrb[0].mxu0
      %4223 = vmatprep.mubr.bf16.mxu0 0
      %4224 = vmatmul.mubr.bf16.gmra.mrb[0].mxu0 %v4042
      %v4225 = vpop.f32.mrb[0].mxu0
      %v4226 = vadd.f32 %v4086, %v4225
      %v4227 = vpop.f32.mrb[0].mxu0
      %v4228 = vpop.f32.mrb[0].mxu0
      %v4229 = vadd.f32 %v4086, %v4228
      %v4230 = vpop.f32.mrb[0].mxu0
      %4231 = vmatprep.mubr.bf16.mxu0 0
      %4232 = vmatmul.mubr.bf16.gmra.mrb[0].mxu0 %v4043
      %v4233 = vpop.f32.mrb[0].mxu0
      %v4234 = vadd.f32 %v4086, %v4233
      %v4235 = vpop.f32.mrb[0].mxu0
      %v4236 = vpop.f32.mrb[0].mxu0
      %v4237 = vadd.f32 %v4086, %v4236
      %v4238 = vpop.f32.mrb[0].mxu0
      %4239 = vmatprep.mubr.bf16.mxu0 0
      %4240 = vmatmul.mubr.bf16.gmra.mrb[0].mxu0 %v4044
      %v4241 = vpop.f32.mrb[0].mxu0
      %v4242 = vadd.f32 %v4086, %v4241
      %v4243 = vpop.f32.mrb[0].mxu0
      %v4244 = vpop.f32.mrb[0].mxu0
      %v4245 = vadd.f32 %v4086, %v4244
      %v4246 = vpop.f32.mrb[0].mxu0
      %4247 = vmatprep.mubr.bf16.mxu0 0
      %4248 = vmatmul.mubr.bf16.gmra.mrb[0].mxu0 %v4045
      %v4249 = vpop.f32.mrb[0].mxu0
      %v4250 = vadd.f32 %v4086, %v4249
      %v4251 = vpop.f32.mrb[0].mxu0
      %v4252 = vpop.f32.mrb[0].mxu0
      %v4253 = vadd.f32 %v4086, %v4252
      %v4254 = vpop.f32.mrb[0].mxu0
      %4255 = vmatprep.mubr.bf16.mxu0 0
      %4256 = vmatmul.mubr.bf16.gmra.mrb[0].mxu0 %v4046
      %v4257 = vpop.f32.mrb[0].mxu0
      %v4258 = vadd.f32 %v4086, %v4257
      %v4259 = vpop.f32.mrb[0].mxu0
      %v4260 = vpop.f32.mrb[0].mxu0
      %v4261 = vadd.f32 %v4086, %v4260
      %v4262 = vpop.f32.mrb[0].mxu0
      %4263 = vmatprep.mubr.bf16.mxu0 0
      %4264 = vmatmul.mubr.bf16.gmra.mrb[0].mxu0 %v4047
      %v4265 = vpop.f32.mrb[0].mxu0
      %v4266 = vadd.f32 %v4086, %v4265
      %v4267 = vpop.f32.mrb[0].mxu0
      %v4268 = vpop.f32.mrb[0].mxu0
      %v4269 = vadd.f32 %v4086, %v4268
      %v4270 = vpop.f32.mrb[0].mxu0
      %4271 = vmatprep.mubr.bf16.mxu0 0
      %4272 = vmatmul.mubr.bf16.gmra.mrb[0].mxu0 %v4048
      %v4273 = vpop.f32.mrb[0].mxu0
      %v4274 = vadd.f32 %v4086, %v4273
      %v4275 = vpop.f32.mrb[0].mxu0
      %v4276 = vpop.f32.mrb[0].mxu0
      %v4277 = vadd.f32 %v4086, %v4276
      %v4278 = vpop.f32.mrb[0].mxu0
      %4279 = vmatprep.mubr.bf16.mxu0 0
      %4280 = vmatmul.mubr.bf16.gmra.mrb[0].mxu0 %v4049
      %v4281 = vpop.f32.mrb[0].mxu0
      %v4282 = vadd.f32 %v4086, %v4281
      %v4283 = vpop.f32.mrb[0].mxu0
      %v4284 = vpop.f32.mrb[0].mxu0
      %v4285 = vadd.f32 %v4086, %v4284
      %v4286 = vpop.f32.mrb[0].mxu0
      %4287 = vmatprep.mubr.bf16.mxu0 0
      %4288 = vmatmul.mubr.bf16.gmra.mrb[0].mxu0 %v4050
      %v4289 = vpop.f32.mrb[0].mxu0
      %v4290 = vadd.f32 %v4086, %v4289
      %v4291 = vpop.f32.mrb[0].mxu0
      %v4292 = vpop.f32.mrb[0].mxu0
      %v4293 = vadd.f32 %v4086, %v4292
      %v4294 = vpop.f32.mrb[0].mxu0
      %4295 = vmatprep.mubr.bf16.mxu0 0
      %4296 = vmatmul.mubr.bf16.gmra.mrb[0].mxu0 %v4051
      %v4297 = vpop.f32.mrb[0].mxu0
      %v4298 = vadd.f32 %v4086, %v4297
      %v4299 = vpop.f32.mrb[0].mxu0
      %v4300 = vpop.f32.mrb[0].mxu0
      %v4301 = vadd.f32 %v4086, %v4300
      %v4302 = vpop.f32.mrb[0].mxu0
      %4303 = vmatprep.mubr.bf16.mxu0 0
      %4304 = vmatmul.mubr.bf16.gmra.mrb[0].mxu0 %v4052
      %v4305 = vpop.f32.mrb[0].mxu0
      %v4306 = vadd.f32 %v4086, %v4305
      %v4307 = vpop.f32.mrb[0].mxu0
      %v4308 = vpop.f32.mrb[0].mxu0
      %v4309 = vadd.f32 %v4086, %v4308
      %v4310 = vpop.f32.mrb[0].mxu0
      %4311 = vmatprep.mubr.bf16.mxu0 0
      %4312 = vmatmul.mubr.bf16.gmra.mrb[0].mxu0 %v4053
      %v4313 = vpop.f32.mrb[0].mxu0
      %v4314 = vadd.f32 %v4086, %v4313
      %v4315 = vpop.f32.mrb[0].mxu0
      %v4316 = vpop.f32.mrb[0].mxu0
      %v4317 = vadd.f32 %v4086, %v4316
      %v4318 = vpop.f32.mrb[0].mxu0
      %4319 = vmatprep.mubr.bf16.mxu0 0
      %4320 = vmatmul.mubr.bf16.gmra.mrb[0].mxu0 %v4054
      %v4321 = vpop.f32.mrb[0].mxu0
      %v4322 = vadd.f32 %v4086, %v4321
      %v4323 = vpop.f32.mrb[0].mxu0
      %v4324 = vpop.f32.mrb[0].mxu0
      %v4325 = vadd.f32 %v4086, %v4324
      %v4326 = vpop.f32.mrb[0].mxu0
      %4327 = vmatprep.mubr.bf16.mxu0 0
      %4328 = vmatmul.mubr.bf16.gmra.mrb[0].mxu0 %v4055
      %v4329 = vpop.f32.mrb[0].mxu0
      %v4330 = vadd.f32 %v4086, %v4329
      %v4331 = vpop.f32.mrb[0].mxu0
      %v4332 = vpop.f32.mrb[0].mxu0
      %v4333 = vadd.f32 %v4086, %v4332
      %v4334 = vpop.f32.mrb[0].mxu0
      %4335 = vmatprep.mubr.bf16.mxu0 0
      %4336 = vmatmul.mubr.bf16.gmra.mrb[0].mxu0 %v4056
      %v4337 = vpop.f32.mrb[0].mxu0
      %v4338 = vadd.f32 %v4086, %v4337
      %v4339 = vpop.f32.mrb[0].mxu0
      %v4340 = vpop.f32.mrb[0].mxu0
      %v4341 = vadd.f32 %v4086, %v4340
      %v4342 = vpop.f32.mrb[0].mxu0
      %4343 = vmatprep.mubr.bf16.mxu0 0
      %4344 = vmatmul.mubr.bf16.gmra.mrb[0].mxu0 %v4057
      %v4345 = vpop.f32.mrb[0].mxu0
      %v4346 = vadd.f32 %v4086, %v4345
      %v4347 = vpop.f32.mrb[0].mxu0
      %v4348 = vpop.f32.mrb[0].mxu0
      %v4349 = vadd.f32 %v4086, %v4348
      %v4350 = vpop.f32.mrb[0].mxu0
      %4351 = vmatprep.mubr.bf16.mxu0 0
      %4352 = vmatmul.mubr.bf16.gmra.mrb[0].mxu0 %v4058
      %v4353 = vpop.f32.mrb[0].mxu0
      %v4354 = vadd.f32 %v4086, %v4353
      %v4355 = vpop.f32.mrb[0].mxu0
      %v4356 = vpop.f32.mrb[0].mxu0
      %v4357 = vadd.f32 %v4086, %v4356
      %v4358 = vpop.f32.mrb[0].mxu0
      %4359 = vmatprep.mubr.bf16.mxu0 0
      %4360 = vmatmul.mubr.bf16.gmra.mrb[0].mxu0 %v4059
      %v4361 = vpop.f32.mrb[0].mxu0
      %v4362 = vadd.f32 %v4086, %v4361
      %v4363 = vpop.f32.mrb[0].mxu0
      %v4364 = vpop.f32.mrb[0].mxu0
      %v4365 = vadd.f32 %v4086, %v4364
      %v4366 = vpop.f32.mrb[0].mxu0
      %4367 = vmatprep.mubr.bf16.mxu0 0
      %4368 = vmatmul.mubr.bf16.gmra.mrb[0].mxu0 %v4060
      %v4369 = vpop.f32.mrb[0].mxu0
      %v4370 = vadd.f32 %v4086, %v4369
      %v4371 = vpop.f32.mrb[0].mxu0
      %v4372 = vpop.f32.mrb[0].mxu0
      %v4373 = vadd.f32 %v4086, %v4372
      %v4374 = vpop.f32.mrb[0].mxu0
      %4375 = vmatprep.mubr.bf16.mxu0 0
      %4376 = vmatmul.mubr.bf16.gmra.mrb[0].mxu0 %v4061
      %v4377 = vpop.f32.mrb[0].mxu0
      %v4378 = vadd.f32 %v4086, %v4377
      %v4379 = vpop.f32.mrb[0].mxu0
      %v4380 = vpop.f32.mrb[0].mxu0
      %v4381 = vadd.f32 %v4086, %v4380
      %v4382 = vpop.f32.mrb[0].mxu0
      %4383 = vmatprep.mubr.bf16.mxu0 0
      %4384 = vmatmul.mubr.bf16.gmra.mrb[0].mxu0 %v4062
      %v4385 = vpop.f32.mrb[0].mxu0
      %v4386 = vadd.f32 %v4086, %v4385
      %v4387 = vpop.f32.mrb[0].mxu0
      %v4388 = vpop.f32.mrb[0].mxu0
      %v4389 = vadd.f32 %v4086, %v4388
      %v4390 = vpop.f32.mrb[0].mxu0
      %4391 = vmatprep.mubr.bf16.mxu0 0
      %4392 = vmatmul.mubr.bf16.gmra.mrb[0].mxu0 %v4063
      %v4393 = vpop.f32.mrb[0].mxu0
      %v4394 = vadd.f32 %v4086, %v4393
      %v4395 = vpop.f32.mrb[0].mxu0
      %v4396 = vpop.f32.mrb[0].mxu0
      %v4397 = vadd.f32 %v4086, %v4396
      %v4398 = vpop.f32.mrb[0].mxu0
      %4399 = vmatprep.mubr.bf16.mxu0 0
      %4400 = vmatmul.mubr.bf16.gmra.mrb[0].mxu0 %v4064
      %v4401 = vpop.f32.mrb[0].mxu0
      %v4402 = vadd.f32 %v4086, %v4401
      %v4403 = vpop.f32.mrb[0].mxu0
      %v4404 = vpop.f32.mrb[0].mxu0
      %v4405 = vadd.f32 %v4086, %v4404
      %v4406 = vpop.f32.mrb[0].mxu0
      %4407 = vmatprep.mubr.bf16.mxu0 0
      %4408 = vmatmul.mubr.bf16.gmra.mrb[0].mxu0 %v4065
      %v4409 = vpop.f32.mrb[0].mxu0
      %v4410 = vadd.f32 %v4086, %v4409
      %v4411 = vpop.f32.mrb[0].mxu0
      %v4412 = vpop.f32.mrb[0].mxu0
      %v4413 = vadd.f32 %v4086, %v4412
      %v4414 = vpop.f32.mrb[0].mxu0
      %4415 = vmatprep.mubr.bf16.mxu0 0
      %4416 = vmatmul.mubr.bf16.gmra.mrb[0].mxu0 %v4066
      %v4417 = vpop.f32.mrb[0].mxu0
      %v4418 = vadd.f32 %v4086, %v4417
      %v4419 = vpop.f32.mrb[0].mxu0
      %v4420 = vpop.f32.mrb[0].mxu0
      %v4421 = vadd.f32 %v4086, %v4420
      %v4422 = vpop.f32.mrb[0].mxu0
      %4423 = vdwg.mxu0
      %v4424 = vtanh.pop %v4170
      %v4425 = vtanh.pop %v4173
      %v4426 = vtanh.pop %v4178
      %v4427 = vtanh.pop %v4181
      %v4428 = vtanh.pop %v4186
      %v4429 = vtanh.pop %v4189
      %v4430 = vtanh.pop %v4194
      %v4431 = vtanh.pop %v4197
      %v4432 = vtanh.pop %v4202
      %v4433 = vtanh.pop %v4205
      %v4434 = vtanh.pop %v4210
      %v4435 = vtanh.pop %v4213
      %v4436 = vtanh.pop %v4218
      %v4437 = vtanh.pop %v4221
      %v4438 = vtanh.pop %v4226
      %v4439 = vtanh.pop %v4229
      %v4440 = vtanh.pop %v4234
      %v4441 = vtanh.pop %v4237
      %v4442 = vtanh.pop %v4242
      %v4443 = vtanh.pop %v4245
      %v4444 = vtanh.pop %v4250
      %v4445 = vtanh.pop %v4253
      %v4446 = vtanh.pop %v4258
      %v4447 = vtanh.pop %v4261
      %v4448 = vtanh.pop %v4266
      %v4449 = vtanh.pop %v4269
      %v4450 = vtanh.pop %v4274
      %v4451 = vtanh.pop %v4277
      %v4452 = vtanh.pop %v4282
      %v4453 = vtanh.pop %v4285
      %v4454 = vtanh.pop %v4290
      %v4455 = vtanh.pop %v4293
      %v4456 = vtanh.pop %v4298
      %v4457 = vtanh.pop %v4301
      %v4458 = vtanh.pop %v4306
      %v4459 = vtanh.pop %v4309
      %v4460 = vtanh.pop %v4314
      %v4461 = vtanh.pop %v4317
      %v4462 = vtanh.pop %v4322
      %v4463 = vtanh.pop %v4325
      %v4464 = vtanh.pop %v4330
      %v4465 = vtanh.pop %v4333
      %v4466 = vtanh.pop %v4338
      %v4467 = vtanh.pop %v4341
      %v4468 = vtanh.pop %v4346
      %v4469 = vtanh.pop %v4349
      %v4470 = vtanh.pop %v4354
      %v4471 = vtanh.pop %v4357
      %v4472 = vtanh.pop %v4362
      %v4473 = vtanh.pop %v4365
      %v4474 = vtanh.pop %v4370
      %v4475 = vtanh.pop %v4373
      %v4476 = vtanh.pop %v4378
      %v4477 = vtanh.pop %v4381
      %v4478 = vtanh.pop %v4386
      %v4479 = vtanh.pop %v4389
      %v4480 = vtanh.pop %v4394
      %v4481 = vtanh.pop %v4397
      %v4482 = vtanh.pop %v4402
      %v4483 = vtanh.pop %v4405
      %v4484 = vtanh.pop %v4410
      %v4485 = vtanh.pop %v4413
      %v4486 = vtanh.pop %v4418
      %v4487 = vtanh.pop %v4421
      %vm4488 = vcmask 130048
      %4489 = vst.msk [vmem:[%s467] sm:$0xff] %vm4488, %v4424
      %4490 = vst.msk [vmem:[%s467 + $0x8] sm:$0xff] %vm4488, %v4425
      %4491 = vst.msk [vmem:[%s467 + $0x10] sm:$0xff] %vm4488, %v4426
      %4492 = vst.msk [vmem:[%s467 + $0x18] sm:$0xff] %vm4488, %v4427
      %4493 = vst.msk [vmem:[%s467 + $0x20] sm:$0xff] %vm4488, %v4428
      %4494 = vst.msk [vmem:[%s467 + $0x28] sm:$0xff] %vm4488, %v4429
      %4495 = vst.msk [vmem:[%s467 + $0x30] sm:$0xff] %vm4488, %v4430
      %4496 = vst.msk [vmem:[%s467 + $0x38] sm:$0xff] %vm4488, %v4431
      %4497 = vst.msk [vmem:[%s467 + $0x40] sm:$0xff] %vm4488, %v4432
      %4498 = vst.msk [vmem:[%s467 + $0x48] sm:$0xff] %vm4488, %v4433
      %4499 = vst.msk [vmem:[%s467 + $0x50] sm:$0xff] %vm4488, %v4434
      %4500 = vst.msk [vmem:[%s467 + $0x58] sm:$0xff] %vm4488, %v4435
      %4501 = vst.msk [vmem:[%s467 + $0x60] sm:$0xff] %vm4488, %v4436
      %4502 = vst.msk [vmem:[%s467 + $0x68] sm:$0xff] %vm4488, %v4437
      %4503 = vst.msk [vmem:[%s467 + $0x70] sm:$0xff] %vm4488, %v4438
      %4504 = vst.msk [vmem:[%s467 + $0x78] sm:$0xff] %vm4488, %v4439
      %4505 = vst.msk [vmem:[%s467 + $0x80] sm:$0xff] %vm4488, %v4440
      %4506 = vst.msk [vmem:[%s467 + $0x88] sm:$0xff] %vm4488, %v4441
      %4507 = vst.msk [vmem:[%s467 + $0x90] sm:$0xff] %vm4488, %v4442
      %4508 = vst.msk [vmem:[%s467 + $0x98] sm:$0xff] %vm4488, %v4443
      %4509 = vst.msk [vmem:[%s467 + $0xa0] sm:$0xff] %vm4488, %v4444
      %4510 = vst.msk [vmem:[%s467 + $0xa8] sm:$0xff] %vm4488, %v4445
      %4511 = vst.msk [vmem:[%s467 + $0xb0] sm:$0xff] %vm4488, %v4446
      %4512 = vst.msk [vmem:[%s467 + $0xb8] sm:$0xff] %vm4488, %v4447
      %4513 = vst.msk [vmem:[%s467 + $0xc0] sm:$0xff] %vm4488, %v4448
      %4514 = vst.msk [vmem:[%s467 + $0xc8] sm:$0xff] %vm4488, %v4449
      %4515 = vst.msk [vmem:[%s467 + $0xd0] sm:$0xff] %vm4488, %v4450
      %4516 = vst.msk [vmem:[%s467 + $0xd8] sm:$0xff] %vm4488, %v4451
      %4517 = vst.msk [vmem:[%s467 + $0xe0] sm:$0xff] %vm4488, %v4452
      %4518 = vst.msk [vmem:[%s467 + $0xe8] sm:$0xff] %vm4488, %v4453
      %4519 = vst.msk [vmem:[%s467 + $0xf0] sm:$0xff] %vm4488, %v4454
      %4520 = vst.msk [vmem:[%s467 + $0xf8] sm:$0xff] %vm4488, %v4455
      %4521 = vst.msk [vmem:[%s467 + $0x100] sm:$0xff] %vm4488, %v4456
      %4522 = vst.msk [vmem:[%s467 + $0x108] sm:$0xff] %vm4488, %v4457
      %4523 = vst.msk [vmem:[%s467 + $0x110] sm:$0xff] %vm4488, %v4458
      %4524 = vst.msk [vmem:[%s467 + $0x118] sm:$0xff] %vm4488, %v4459
      %4525 = vst.msk [vmem:[%s467 + $0x120] sm:$0xff] %vm4488, %v4460
      %4526 = vst.msk [vmem:[%s467 + $0x128] sm:$0xff] %vm4488, %v4461
      %4527 = vst.msk [vmem:[%s467 + $0x130] sm:$0xff] %vm4488, %v4462
      %4528 = vst.msk [vmem:[%s467 + $0x138] sm:$0xff] %vm4488, %v4463
      %4529 = vst.msk [vmem:[%s467 + $0x140] sm:$0xff] %vm4488, %v4464
      %4530 = vst.msk [vmem:[%s467 + $0x148] sm:$0xff] %vm4488, %v4465
      %4531 = vst.msk [vmem:[%s467 + $0x150] sm:$0xff] %vm4488, %v4466
      %4532 = vst.msk [vmem:[%s467 + $0x158] sm:$0xff] %vm4488, %v4467
      %4533 = vst.msk [vmem:[%s467 + $0x160] sm:$0xff] %vm4488, %v4468
      %4534 = vst.msk [vmem:[%s467 + $0x168] sm:$0xff] %vm4488, %v4469
      %4535 = vst.msk [vmem:[%s467 + $0x170] sm:$0xff] %vm4488, %v4470
      %4536 = vst.msk [vmem:[%s467 + $0x178] sm:$0xff] %vm4488, %v4471
      %4537 = vst.msk [vmem:[%s467 + $0x180] sm:$0xff] %vm4488, %v4472
      %4538 = vst.msk [vmem:[%s467 + $0x188] sm:$0xff] %vm4488, %v4473
      %4539 = vst.msk [vmem:[%s467 + $0x190] sm:$0xff] %vm4488, %v4474
      %4540 = vst.msk [vmem:[%s467 + $0x198] sm:$0xff] %vm4488, %v4475
      %4541 = vst.msk [vmem:[%s467 + $0x1a0] sm:$0xff] %vm4488, %v4476
      %4542 = vst.msk [vmem:[%s467 + $0x1a8] sm:$0xff] %vm4488, %v4477
      %4543 = vst.msk [vmem:[%s467 + $0x1b0] sm:$0xff] %vm4488, %v4478
      %4544 = vst.msk [vmem:[%s467 + $0x1b8] sm:$0xff] %vm4488, %v4479
      %4545 = vst.msk [vmem:[%s467 + $0x1c0] sm:$0xff] %vm4488, %v4480
      %4546 = vst.msk [vmem:[%s467 + $0x1c8] sm:$0xff] %vm4488, %v4481
      %4547 = vst.msk [vmem:[%s467 + $0x1d0] sm:$0xff] %vm4488, %v4482
      %4548 = vst.msk [vmem:[%s467 + $0x1d8] sm:$0xff] %vm4488, %v4483
      %4549 = vst.msk [vmem:[%s467 + $0x1e0] sm:$0xff] %vm4488, %v4484
      %4550 = vst.msk [vmem:[%s467 + $0x1e8] sm:$0xff] %vm4488, %v4485
      %4551 = vst.msk [vmem:[%s467 + $0x1f0] sm:$0xff] %vm4488, %v4486
      %4552 = vst.msk [vmem:[%s467 + $0x1f8] sm:$0xff] %vm4488, %v4487
      %s4553 = smul.u32 64, %s27
      %p4554 = scmp.lt.s32.totalorder %s26, 1
      %s4555 = scalar_select %p4554, %s26, 1
      %p4556 = scmp.lt.s32.totalorder %s4553, 127
      %s4557 = scalar_select %p4556, %s4553, 127
      %s4558 = smul.addr %s4555, 128
      %s4559 = sadd.s32 %s4557, %s4558
      %s4560 = smul.addr %s4559, 8
      %s4561 = scalar_lea.vmem %s9, %s4560
      %s4562 = smul.u32 64, %s27
      %p4563 = scmp.lt.s32.totalorder %s26, 1
      %s4564 = scalar_select %p4563, %s26, 1
      %p4565 = scmp.lt.s32.totalorder %s4562, 127
      %s4566 = scalar_select %p4565, %s4562, 127
      %s4567 = smul.addr %s4564, 128
      %s4568 = sadd.s32 %s4566, %s4567
      %s4569 = smul.addr %s4568, 8
      %s4570 = scalar_lea.vmem %s10, %s4569
      // Predicated region
      $region57: #{giraffe_decoder_pallas.1} parent=55 // pred_check
        %p4571 = pneg %p262
      $region58: #{giraffe_decoder_pallas.1} parent=55 // pred_check_branch
        %4573 = sbr.rel (%p4571) target = $region60
      $region59: #{giraffe_decoder_pallas.1} parent=55 // pred_region
        %s4574 = smul.u32 64, %s27
      $region60: #{giraffe_decoder_pallas.1} parent=55 // pred_fallthru
        _
      // Predicated region
      $region61: #{giraffe_decoder_pallas.1} parent=55 // pred_check
        %p4575 = pneg %p290
      $region62: #{giraffe_decoder_pallas.1} parent=55 // pred_check_branch
        %4577 = sbr.rel (%p4575) target = $region64
      $region63: #{giraffe_decoder_pallas.1} parent=55 // pred_region
        %s4578 = smul.u32 64, %s27
      $region64: #{giraffe_decoder_pallas.1} parent=55 // pred_fallthru
        _
    $region56: #{giraffe_decoder_pallas.1} parent=5 // pred_fallthru
      _
    %p4579 = scmp.le.s32.totalorder 2, %s17
    // Predicated region
    $region65: #{giraffe_decoder_pallas.1} parent=5 // pred_check
      %p4580 = pneg %p4579
    $region66: #{giraffe_decoder_pallas.1} parent=5 // pred_check_branch
      %4582 = sbr.rel (%p4580) target = $region68
    $region67: #{giraffe_decoder_pallas.1} parent=5 // pred_region
      %s4583 = ssub.s32 %s17, 2
      // Predicated region
      $region69: #{giraffe_decoder_pallas.1} parent=67 // pred_check
        %p4584 = pneg %p268
      $region70: #{giraffe_decoder_pallas.1} parent=67 // pred_check_branch
        %4586 = sbr.rel (%p4584) target = $region72
      $region71: #{giraffe_decoder_pallas.1} parent=67 // pred_region
        %s4587 = smul.u32 64, %s29
        %p4588 = scmp.lt.s32.totalorder %s28, 1
        %s4589 = scalar_select %p4588, %s28, 1
        %p4590 = scmp.lt.s32.totalorder %s4587, 127
        %s4591 = scalar_select %p4590, %s4587, 127
        %s4592 = smul.addr %s4589, 128
        %s4593 = sadd.s32 %s4591, %s4592
        %s4594 = smul.addr %s4593, 8
        %s4595 = scalar_lea.vmem %s9, %s4594
      $region72: #{giraffe_decoder_pallas.1} parent=67 // pred_fallthru
        _
      // Predicated region
      $region73: #{giraffe_decoder_pallas.1} parent=67 // pred_check
        %p4596 = pneg %p296
      $region74: #{giraffe_decoder_pallas.1} parent=67 // pred_check_branch
        %4598 = sbr.rel (%p4596) target = $region76
      $region75: #{giraffe_decoder_pallas.1} parent=67 // pred_region
        %s4599 = smul.u32 64, %s29
        %p4600 = scmp.lt.s32.totalorder %s28, 1
        %s4601 = scalar_select %p4600, %s28, 1
        %p4602 = scmp.lt.s32.totalorder %s4599, 127
        %s4603 = scalar_select %p4602, %s4599, 127
        %s4604 = smul.addr %s4601, 128
        %s4605 = sadd.s32 %s4603, %s4604
        %s4606 = smul.addr %s4605, 8
        %s4607 = scalar_lea.vmem %s10, %s4606
      $region76: #{giraffe_decoder_pallas.1} parent=67 // pred_fallthru
        _
    $region68: #{giraffe_decoder_pallas.1} parent=5 // pred_fallthru
      _
  $region6: #{giraffe_decoder_pallas.1} parent=0 // loop_footer
    %s21 = sadd.s32 1, %s17
  $region7: #{giraffe_decoder_pallas.1} parent=0 // loop_footer_branch
    %16 = sbr.rel target = $region3
  $region8: #{giraffe_decoder_pallas.1} parent=0 // loop_exit
    _

</llo_original>
